<compile_context>
chip_gen: v6e
topology: v6e:2x2x1
jax: 0.10.0
libtpu: 0.0.40
codegen_flags: <defaults>
</compile_context>

<pallas_src>
import functools

import numpy as np
import jax
import jax.numpy as jnp
from jax.experimental import pallas as pl
from jax.experimental.pallas import tpu as pltpu


# ============================================================================
# Fused whole-stream kernel (one grid step == one full stream forward pass)
# ============================================================================
def _fused_stream_kernel(*refs, L, F, N, H, W, C, PAD):
    """refs (inputs, outputs, scratch):
      x_ref                               (1, N*Hp, W*Cin)   f32  (zero pad rows built in)
      per conv layer i:
        g_ref   (1, 4, W*Ci, 4*W*C)  bf16  banded taps+pool weights (4 row slabs)
        sc_ref  (1, 1, 4*W*C)        f32   folded BN scale (tiled over groups & W)
        sh_ref  (1, 1, 4*W*C)        f32   folded BN shift (+conv bias)
      per fc layer j:
        w_ref   (1, fin, fout)       bf16  (j==0 scattered onto the dilated layout,
                                            j==F-1 zero-padded to 128 output lanes)
        b_ref   (1, 1, fout)         f32
      o_ref     (1, N, 128)          f32
      act_scr   (N*Hp, W*C)          f32   dilated pooled maps, zero pad rows
      fc_scr    (N, n_pos*W*C)       f32   gathered valid rows for the FC head
    """
    x_ref = refs[0]
    conv = [(refs[1 + 3 * i], refs[2 + 3 * i], refs[3 + 3 * i]) for i in range(L)]
    off = 1 + 3 * L
    fc = [(refs[off + 2 * j], refs[off + 2 * j + 1]) for j in range(F)]
    o_ref = refs[off + 2 * F]
    act_scr = refs[off + 2 * F + 1]
    fc_scr = refs[off + 2 * F + 2]

    WC = W * C
    Hp = H + 2 * PAD                       # rows per sample block (PAD zero rows each side)
    M = (N - 1) * Hp + H                   # conv output rows computed per layer (batched)
    fstride = 1 << L                       # physical stride of the final pooled grid
    n_pos = W // fstride

    # Pad rows (top/bottom of every sample block) must read as conv zero-padding.
    act_scr[...] = jnp.zeros(act_scr.shape, act_scr.dtype)

    # -------- conv / BN / ReLU / maxpool stack, batched over all samples --------
    for i in range(L):
        s = 1 << i                         # dilation of valid data on the full-res grid
        g_ref, sc_ref, sh_ref = conv[i]
        acc = jnp.zeros((M, 4 * WC), jnp.float32)
        for j in range(4):                 # 4 row-shifted LHS slabs (taps + pool row)
            r0 = PAD + s * (j - 1)
            if i == 0:
                lhs = x_ref[0, r0:r0 + M, :]
            else:
                lhs = act_scr[r0:r0 + M, :]
            acc = acc + jnp.dot(lhs.astype(jnp.bfloat16), g_ref[0, j],
                                preferred_element_type=jnp.float32)
        # folded conv bias + BatchNorm (running stats) then ReLU, f32 epilogue
        z = jnp.maximum(acc * sc_ref[0] + sh_ref[0], 0.0)
        # 2x2 max-pool == max over the four 128-lane-aligned output groups
        m = jnp.maximum(jnp.maximum(z[:, 0:WC], z[:, WC:2 * WC]),
                        jnp.maximum(z[:, 2 * WC:3 * WC], z[:, 3 * WC:4 * WC]))
        # store only each sample's H data rows (pad rows must stay zero);
        # store offsets n*Hp+PAD are multiples of 8 -> unmasked, lane-dense stores
        for n in range(N):
            act_scr[n * Hp + PAD: n * Hp + PAD + H, :] = m[n * Hp: n * Hp + H, :]

    # -------- FC head: gather valid rows once, then F batched dense layers --------
    for n in range(N):
        for p in range(n_pos):
            r = n * Hp + PAD + p * fstride
            fc_scr[n:n + 1, p * WC:(p + 1) * WC] = act_scr[r:r + 1, :]
    h = fc_scr[...]
    for j in range(F):
        w_ref, b_ref = fc[j]
        hf = jnp.dot(h.astype(jnp.bfloat16), w_ref[0],
                     preferred_element_type=jnp.float32) + b_ref[0]
        if j < F - 1:
            h = jnp.maximum(hf, 0.0)       # ReLU (+ Dropout == identity at inference)
        else:
            o_ref[0, :, :] = hf


# ============================================================================
# Deterministic parameter construction (mirrors Dual_Stream.__init__)
# ============================================================================
def init_conv_stream(key, in_channels, num_conv_layers, base, input_size):
    layers = []
    c, fs = in_channels, input_size
    for _ in range(num_conv_layers):
        key, k1, k2, k3, k4, k5, k6 = jax.random.split(key, 7)
        layers.append(dict(
            w=jax.random.normal(k1, (base, c, 3, 3), jnp.float32) * 0.1,
            b=jax.random.normal(k2, (base,), jnp.float32) * 0.05,
            gamma=1.0 + 0.1 * jax.random.normal(k3, (base,), jnp.float32),
            beta=0.1 * jax.random.normal(k4, (base,), jnp.float32),
            mean=0.1 * jax.random.normal(k5, (base,), jnp.float32),
            var=1.0 + 0.1 * jax.random.uniform(k6, (base,), jnp.float32)))
        c = base
        fs //= 2
        if fs < 2:
            break
    return key, layers, c, fs


def init_fc(key, fin, num_fc_layers, num_classes):
    layers = []
    f = fin
    for _ in range(num_fc_layers):
        fo = f // 2
        key, k1, k2 = jax.random.split(key, 3)
        layers.append((jax.random.normal(k1, (f, fo), jnp.float32) * f ** -0.5,
                       0.05 * jax.random.normal(k2, (fo,), jnp.float32)))
        f = fo
    key, k1, k2 = jax.random.split(key, 3)
    layers.append((jax.random.normal(k1, (f, num_classes), jnp.float32) * f ** -0.5,
                   0.05 * jax.random.normal(k2, (num_classes,), jnp.float32)))
    return key, layers


# ============================================================================
# One-time host parameter preparation (banded tap+pool weights, BN folding, ...)
# ============================================================================
def _banded_conv_weight(wconv, s, W, Ci, C):
    """wconv: (3,3,Ci,C) numpy (ky,kx,cin,cout); returns (4, W*Ci, 4*W*C):
    slab j, output group (a,b) column block holds conv_out[row + a*s, col + b*s]
    contributions for tap dy = j - a, with dx and all lane borders folded into the
    band (out-of-range columns simply absent == conv zero padding)."""
    Ki, WC = W * Ci, W * C
    G = np.zeros((4, Ki, 4 * WC), np.float32)
    for j in range(4):
        for a in range(2):
            dy = j - a
            if not 0 <= dy <= 2:
                continue
            for b in range(2):
                col0 = (2 * a + b) * WC
                for dx in range(3):
                    for wo in range(W):
                        wi = wo + s * (b + dx - 1)
                        if 0 <= wi < W:
                            G[j, wi * Ci:(wi + 1) * Ci,
                              col0 + wo * C: col0 + (wo + 1) * C] += wconv[dy, dx]
    return G


def prepare_params(streams_conv, streams_fc, *, input_size, cin_max, base,
                   num_classes, out_pad=128):
    W = input_size
    C = base
    L = len(streams_conv[0])
    F = len(streams_fc[0])
    fstride = 1 << L
    assert W % fstride == 0 and num_classes <= out_pad
    n_pos = W // fstride
    eps = 1e-5

    conv_ops = []
    for i in range(L):
        s = 1 << i
        Ci = cin_max if i == 0 else C
        g_s, sc_s, sh_s = [], [], []
        for layers in streams_conv:
            p = layers[i]
            wt = np.transpose(np.asarray(p["w"]), (2, 3, 1, 0))       # (ky,kx,cin,cout)
            if wt.shape[2] < Ci:                                      # stream stacking pad
                wt = np.concatenate(
                    [wt, np.zeros((3, 3, Ci - wt.shape[2], C), np.float32)], axis=2)
            g_s.append(_banded_conv_weight(wt, s, W, Ci, C))
            scale = np.asarray(p["gamma"]) / np.sqrt(np.asarray(p["var"]) + eps)
            shift = (np.asarray(p["b"]) - np.asarray(p["mean"])) * scale + np.asarray(p["beta"])
            sc_s.append(np.tile(scale, 4 * W)[None, :])
            sh_s.append(np.tile(shift, 4 * W)[None, :])
        conv_ops.append((jnp.asarray(np.stack(g_s), dtype=jnp.bfloat16),
                         jnp.asarray(np.stack(sc_s), dtype=jnp.float32),
                         jnp.asarray(np.stack(sh_s), dtype=jnp.float32)))

    fc_ops = []
    for j in range(F):
        w_s, b_s = [], []
        for fcl in streams_fc:
            w, b = np.asarray(fcl[j][0]), np.asarray(fcl[j][1])
            if j == 0:
                # Scatter the logical (C*n_pos^2, f1) FC1 weight onto the dilated
                # gathered layout: row (ii*W*C + jj*fstride*C + c) <- W1[c*n_pos^2+ii*n_pos+jj]
                f1 = w.shape[1]
                assert w.shape[0] == C * n_pos * n_pos
                wp = np.zeros((n_pos * W * C, f1), np.float32)
                for c in range(C):
                    for ii in range(n_pos):
                        for jj in range(n_pos):
                            wp[ii * W * C + jj * fstride * C + c, :] = \
                                w[c * n_pos * n_pos + ii * n_pos + jj, :]
                w_s.append(wp)
                b_s.append(b[None, :])
            elif j == F - 1:                                           # lane-dense logits
                wp = np.concatenate(
                    [w, np.zeros((w.shape[0], out_pad - num_classes), np.float32)], axis=1)
                bp = np.concatenate([b, np.zeros((out_pad - num_classes,), np.float32)])[None, :]
                w_s.append(wp)
                b_s.append(bp)
            else:
                w_s.append(w)
                b_s.append(b[None, :])
        fc_ops.append((jnp.asarray(np.stack(w_s), dtype=jnp.bfloat16),
                       jnp.asarray(np.stack(b_s), dtype=jnp.float32)))
    return conv_ops, fc_ops


# ============================================================================
# Forward pass wrapper
# ============================================================================
def prepare_inputs(spatial_nchw, temporal_nchw, cin_max, PAD):
    """NCHW -> NHWC, pad channels to the common count, lane-flatten (W, C), and stack
    all samples along rows with PAD zero rows on each side of every sample block."""
    def prep(x):
        x = jnp.transpose(x, (0, 2, 3, 1)).astype(jnp.float32)
        n, h, w, c = x.shape
        if c < cin_max:
            x = jnp.concatenate(
                [x, jnp.zeros((n, h, w, cin_max - c), jnp.float32)], axis=-1)
        x = x.reshape(n, h, w * cin_max)
        x = jnp.pad(x, ((0, 0), (PAD, PAD), (0, 0)))
        return x.reshape(n * (h + 2 * PAD), w * cin_max)
    return jnp.stack([prep(spatial_nchw), prep(temporal_nchw)], axis=0)


def _stream_spec(arr):
    nd = arr.ndim
    return pl.BlockSpec((1,) + tuple(arr.shape[1:]),
                        lambda s, _nd=nd: (s,) + (0,) * (_nd - 1))


def dual_stream_forward(spatial_input, temporal_input, conv_ops, fc_ops, *,
                        input_size, cin_max, base, num_classes):
    H = W = input_size
    N = spatial_input.shape[0]
    assert temporal_input.shape[0] == N
    L = len(conv_ops)
    F = len(fc_ops)
    C = base
    WC = W * C
    PAD = max(1 << L, 8)                  # >= 2*max dilation, 8-sublane aligned stores
    Hp = H + 2 * PAD
    fstride = 1 << L
    n_pos = W // fstride
    out_pad = fc_ops[-1][0].shape[-1]

    x = prepare_inputs(spatial_input, temporal_input, cin_max, PAD)

    inputs = [x]
    for op in conv_ops:
        inputs.extend(op)
    for op in fc_ops:
        inputs.extend(op)
    in_specs = [_stream_spec(a) for a in inputs]

    kernel = functools.partial(_fused_stream_kernel, L=L, F=F, N=N, H=H, W=W,
                               C=C, PAD=PAD)

    out = pl.pallas_call(
        kernel,
        out_shape=jax.ShapeDtypeStruct((2, N, out_pad), jnp.float32),
        grid=(2,),                                   # one grid step per stream
        in_specs=in_specs,
        out_specs=pl.BlockSpec((1, N, out_pad), lambda s: (s, 0, 0)),
        scratch_shapes=[
            pltpu.VMEM((N * Hp, WC), jnp.float32),
            pltpu.VMEM((N, n_pos * WC), jnp.float32),
        ],
        compiler_params=pltpu.CompilerParams(
            dimension_semantics=("parallel",),
            vmem_limit_bytes=32 * 1024 * 1024),
    )(*inputs)

    # Average the two streams' logits and drop the lane padding (tiny, plain jnp).
    return 0.5 * (out[0, :, :num_classes] + out[1, :, :num_classes])


# ============================================================================
# Pure-JAX reference (eval-mode BN, dropout == identity) for a correctness check
# ============================================================================
def reference_forward(spatial, temporal, sp_conv, sp_fc, tp_conv, tp_fc):
    def stream(x, conv_layers, fc_layers):
        for p in conv_layers:
            y = jax.lax.conv_general_dilated(
                x, p["w"], window_strides=(1, 1), padding="SAME",
                dimension_numbers=("NCHW", "OIHW", "NCHW"))
            y = y + p["b"][None, :, None, None]
            scale = p["gamma"] / jnp.sqrt(p["var"] + 1e-5)
            y = (y - p["mean"][None, :, None, None]) * scale[None, :, None, None] \
                + p["beta"][None, :, None, None]
            y = jnp.maximum(y, 0.0)
            n_, c_, h_, w_ = y.shape
            x = y.reshape(n_, c_, h_ // 2, 2, w_ // 2, 2).max(axis=(3, 5))
        feat = x.reshape(x.shape[0], -1)
        for j, (w, b) in enumerate(fc_layers):
            feat = feat @ w + b
            if j < len(fc_layers) - 1:
                feat = jnp.maximum(feat, 0.0)
        return feat
    return 0.5 * (stream(spatial, sp_conv, sp_fc) + stream(temporal, tp_conv, tp_fc))


# ============================================================================
if __name__ == "__main__":
    key = jax.random.PRNGKey(0)

    # Hyper-parameters (consistent with the PyTorch __init__).
    input_channels = 3
    num_conv_layers = 2
    num_fc_layers = 2
    base_channel_sz = 8
    num_classes = 5
    input_size = 16
    temporal_channels = 2 * (10 - 1)          # fixed inside the module == 18
    cin_max = max(input_channels, temporal_channels)
    batch = 2

    key, sp_conv, sp_c, sp_fs = init_conv_stream(
        key, input_channels, num_conv_layers, base_channel_sz, input_size)
    key, sp_fc = init_fc(key, sp_c * sp_fs * sp_fs, num_fc_layers, num_classes)
    key, tp_conv, tp_c, tp_fs = init_conv_stream(
        key, temporal_channels, num_conv_layers, base_channel_sz, input_size)
    key, tp_fc = init_fc(key, tp_c * tp_fs * tp_fs, num_fc_layers, num_classes)

    conv_ops, fc_ops = prepare_params(
        [sp_conv, tp_conv], [sp_fc, tp_fc], input_size=input_size,
        cin_max=cin_max, base=base_channel_sz, num_classes=num_classes)

    key, kx1, kx2 = jax.random.split(key, 3)
    spatial_input = jax.random.normal(
        kx1, (batch, input_channels, input_size, input_size), jnp.float32)
    temporal_input = jax.random.normal(
        kx2, (batch, temporal_channels, input_size, input_size), jnp.float32)

    @jax.jit
    def forward(sp, tp, conv_p, fc_p):
        return dual_stream_forward(sp, tp, conv_p, fc_p,
                                   input_size=input_size, cin_max=cin_max,
                                   base=base_channel_sz, num_classes=num_classes)

    out = forward(spatial_input, temporal_input, conv_ops, fc_ops)
    out = jax.block_until_ready(out)
    assert out.shape == (batch, num_classes)

    # Correctness check vs. a pure-JAX reference (bf16 matmul operands in the kernel
    # introduce ~1e-2 relative error, so the tolerance is set accordingly).
    ref = jax.block_until_ready(
        reference_forward(spatial_input, temporal_input, sp_conv, sp_fc, tp_conv, tp_fc))
    err = float(jnp.max(jnp.abs(out - ref)))
    scale = float(jnp.max(jnp.abs(ref)))
    assert err <= 0.05 * scale + 0.05, f"mismatch vs reference: max|diff|={err}"

    print("KERNEL_OK")
</pallas_src>

<mosaic_0001>
module attributes {stable_mosaic.version = 11 : i64} {
  func.func @_fused_stream_kernel(%arg0: i32, %arg1: memref<1x64x288xf32, #tpu.memory_space<vmem>>, %arg2: memref<1x4x288x512xbf16, #tpu.memory_space<vmem>>, %arg3: memref<1x1x512xf32, #tpu.memory_space<vmem>>, %arg4: memref<1x1x512xf32, #tpu.memory_space<vmem>>, %arg5: memref<1x4x128x512xbf16, #tpu.memory_space<vmem>>, %arg6: memref<1x1x512xf32, #tpu.memory_space<vmem>>, %arg7: memref<1x1x512xf32, #tpu.memory_space<vmem>>, %arg8: memref<1x512x64xbf16, #tpu.memory_space<vmem>>, %arg9: memref<1x1x64xf32, #tpu.memory_space<vmem>>, %arg10: memref<1x64x32xbf16, #tpu.memory_space<vmem>>, %arg11: memref<1x1x32xf32, #tpu.memory_space<vmem>>, %arg12: memref<1x32x128xbf16, #tpu.memory_space<vmem>>, %arg13: memref<1x1x128xf32, #tpu.memory_space<vmem>>, %arg14: memref<1x2x128xf32, #tpu.memory_space<vmem>>, %arg15: memref<64x128xf32, #tpu.memory_space<vmem>>, %arg16: memref<2x512xf32, #tpu.memory_space<vmem>>) attributes {dimension_semantics = [#tpu.dimension_semantics<parallel>], iteration_bounds = array<i64: 2>, scalar_prefetch = 0 : i64, scratch_operands = 2 : i64, tpu.core_type = #tpu.core_type<tc>, window_params = [{transform_indices = @transform_0, window_bounds = array<i64: 1, 64, 288>}, {transform_indices = @transform_1, window_bounds = array<i64: 1, 4, 288, 512>}, {transform_indices = @transform_2, window_bounds = array<i64: 1, 1, 512>}, {transform_indices = @transform_3, window_bounds = array<i64: 1, 1, 512>}, {transform_indices = @transform_4, window_bounds = array<i64: 1, 4, 128, 512>}, {transform_indices = @transform_5, window_bounds = array<i64: 1, 1, 512>}, {transform_indices = @transform_6, window_bounds = array<i64: 1, 1, 512>}, {transform_indices = @transform_7, window_bounds = array<i64: 1, 512, 64>}, {transform_indices = @transform_8, window_bounds = array<i64: 1, 1, 64>}, {transform_indices = @transform_9, window_bounds = array<i64: 1, 64, 32>}, {transform_indices = @transform_10, window_bounds = array<i64: 1, 1, 32>}, {transform_indices = @transform_11, window_bounds = array<i64: 1, 32, 128>}, {transform_indices = @transform_12, window_bounds = array<i64: 1, 1, 128>}, {transform_indices = @transform_13, window_bounds = array<i64: 1, 2, 128>}]} {
    %cst = arith.constant 0.000000e+00 : f32
    %0 = vector.broadcast %cst : f32 to vector<64x128xf32>
    %c0 = arith.constant 0 : index
    %c0_0 = arith.constant 0 : index
    %1 = vector.load %arg15[%c0, %c0_0] : memref<64x128xf32, #tpu.memory_space<vmem>>, vector<64x128xf32>
    tpu.vector_store %arg15[%c0, %c0_0], %0 {strides = array<i32>} : memref<64x128xf32, #tpu.memory_space<vmem>>, vector<64x128xf32>,
    %cst_1 = arith.constant 0.000000e+00 : f32
    %2 = vector.broadcast %cst_1 : f32 to vector<48x512xf32>
    %c0_2 = arith.constant 0 : index
    %c7 = arith.constant 7 : index
    %c0_3 = arith.constant 0 : index
    %3 = vector.load %arg1[%c0_2, %c7, %c0_3] : memref<1x64x288xf32, #tpu.memory_space<vmem>>, vector<1x48x288xf32>
    %4 = vector.shape_cast %3 : vector<1x48x288xf32> to vector<48x288xf32>
    %5 = arith.truncf %4 : vector<48x288xf32> to vector<48x288xbf16>
    %c0_4 = arith.constant 0 : index
    %c0_5 = arith.constant 0 : index
    %c0_6 = arith.constant 0 : index
    %c0_7 = arith.constant 0 : index
    %6 = vector.load %arg2[%c0_4, %c0_5, %c0_6, %c0_7] : memref<1x4x288x512xbf16, #tpu.memory_space<vmem>>, vector<1x1x288x512xbf16>
    %7 = vector.shape_cast %6 : vector<1x1x288x512xbf16> to vector<288x512xbf16>
    %cst_8 = arith.constant dense<0.000000e+00> : vector<48x512xf32>
    %8 = tpu.matmul %5, %7, %cst_8 {dimension_numbers = #tpu.dot_dimension_numbers<[1], [0], [0], [1], [0, 0, 1, 1], [], []>} : vector<48x288xbf16>, vector<288x512xbf16>, vector<48x512xf32> -> vector<48x512xf32>
    %9 = arith.addf %2, %8 : vector<48x512xf32>
    %c0_9 = arith.constant 0 : index
    %c8 = arith.constant 8 : index
    %c0_10 = arith.constant 0 : index
    %10 = vector.load %arg1[%c0_9, %c8, %c0_10] : memref<1x64x288xf32, #tpu.memory_space<vmem>>, vector<1x48x288xf32>
    %11 = vector.shape_cast %10 : vector<1x48x288xf32> to vector<48x288xf32>
    %12 = arith.truncf %11 : vector<48x288xf32> to vector<48x288xbf16>
    %c0_11 = arith.constant 0 : index
    %c1 = arith.constant 1 : index
    %c0_12 = arith.constant 0 : index
    %c0_13 = arith.constant 0 : index
    %13 = vector.load %arg2[%c0_11, %c1, %c0_12, %c0_13] : memref<1x4x288x512xbf16, #tpu.memory_space<vmem>>, vector<1x1x288x512xbf16>
    %14 = vector.shape_cast %13 : vector<1x1x288x512xbf16> to vector<288x512xbf16>
    %cst_14 = arith.constant dense<0.000000e+00> : vector<48x512xf32>
    %15 = tpu.matmul %12, %14, %cst_14 {dimension_numbers = #tpu.dot_dimension_numbers<[1], [0], [0], [1], [0, 0, 1, 1], [], []>} : vector<48x288xbf16>, vector<288x512xbf16>, vector<48x512xf32> -> vector<48x512xf32>
    %16 = arith.addf %9, %15 : vector<48x512xf32>
    %c0_15 = arith.constant 0 : index
    %c9 = arith.constant 9 : index
    %c0_16 = arith.constant 0 : index
    %17 = vector.load %arg1[%c0_15, %c9, %c0_16] : memref<1x64x288xf32, #tpu.memory_space<vmem>>, vector<1x48x288xf32>
    %18 = vector.shape_cast %17 : vector<1x48x288xf32> to vector<48x288xf32>
    %19 = arith.truncf %18 : vector<48x288xf32> to vector<48x288xbf16>
    %c0_17 = arith.constant 0 : index
    %c2 = arith.constant 2 : index
    %c0_18 = arith.constant 0 : index
    %c0_19 = arith.constant 0 : index
    %20 = vector.load %arg2[%c0_17, %c2, %c0_18, %c0_19] : memref<1x4x288x512xbf16, #tpu.memory_space<vmem>>, vector<1x1x288x512xbf16>
    %21 = vector.shape_cast %20 : vector<1x1x288x512xbf16> to vector<288x512xbf16>
    %cst_20 = arith.constant dense<0.000000e+00> : vector<48x512xf32>
    %22 = tpu.matmul %19, %21, %cst_20 {dimension_numbers = #tpu.dot_dimension_numbers<[1], [0], [0], [1], [0, 0, 1, 1], [], []>} : vector<48x288xbf16>, vector<288x512xbf16>, vector<48x512xf32> -> vector<48x512xf32>
    %23 = arith.addf %16, %22 : vector<48x512xf32>
    %c0_21 = arith.constant 0 : index
    %c10 = arith.constant 10 : index
    %c0_22 = arith.constant 0 : index
    %24 = vector.load %arg1[%c0_21, %c10, %c0_22] : memref<1x64x288xf32, #tpu.memory_space<vmem>>, vector<1x48x288xf32>
    %25 = vector.shape_cast %24 : vector<1x48x288xf32> to vector<48x288xf32>
    %26 = arith.truncf %25 : vector<48x288xf32> to vector<48x288xbf16>
    %c0_23 = arith.constant 0 : index
    %c3 = arith.constant 3 : index
    %c0_24 = arith.constant 0 : index
    %c0_25 = arith.constant 0 : index
    %27 = vector.load %arg2[%c0_23, %c3, %c0_24, %c0_25] : memref<1x4x288x512xbf16, #tpu.memory_space<vmem>>, vector<1x1x288x512xbf16>
    %28 = vector.shape_cast %27 : vector<1x1x288x512xbf16> to vector<288x512xbf16>
    %cst_26 = arith.constant dense<0.000000e+00> : vector<48x512xf32>
    %29 = tpu.matmul %26, %28, %cst_26 {dimension_numbers = #tpu.dot_dimension_numbers<[1], [0], [0], [1], [0, 0, 1, 1], [], []>} : vector<48x288xbf16>, vector<288x512xbf16>, vector<48x512xf32> -> vector<48x512xf32>
    %30 = arith.addf %23, %29 : vector<48x512xf32>
    %c0_27 = arith.constant 0 : index
    %c0_28 = arith.constant 0 : index
    %c0_29 = arith.constant 0 : index
    %31 = vector.load %arg3[%c0_27, %c0_28, %c0_29] : memref<1x1x512xf32, #tpu.memory_space<vmem>>, vector<1x1x512xf32>
    %32 = vector.shape_cast %31 : vector<1x1x512xf32> to vector<1x512xf32>
    %33 = vector.broadcast %32 : vector<1x512xf32> to vector<48x512xf32>
    %34 = arith.mulf %30, %33 : vector<48x512xf32>
    %c0_30 = arith.constant 0 : index
    %c0_31 = arith.constant 0 : index
    %c0_32 = arith.constant 0 : index
    %35 = vector.load %arg4[%c0_30, %c0_31, %c0_32] : memref<1x1x512xf32, #tpu.memory_space<vmem>>, vector<1x1x512xf32>
    %36 = vector.shape_cast %35 : vector<1x1x512xf32> to vector<1x512xf32>
    %37 = vector.broadcast %36 : vector<1x512xf32> to vector<48x512xf32>
    %38 = arith.addf %34, %37 : vector<48x512xf32>
    %cst_33 = arith.constant 0.000000e+00 : f32
    %39 = vector.broadcast %cst_33 : f32 to vector<48x512xf32>
    %40 = arith.maximumf %38, %39 : vector<48x512xf32>
    %41 = vector.extract_strided_slice %40 {offsets = [0, 0], sizes = [48, 128], strides = [1, 1]} : vector<48x512xf32> to vector<48x128xf32>
    %42 = vector.extract_strided_slice %40 {offsets = [0, 128], sizes = [48, 128], strides = [1, 1]} : vector<48x512xf32> to vector<48x128xf32>
    %43 = arith.maximumf %41, %42 : vector<48x128xf32>
    %44 = vector.extract_strided_slice %40 {offsets = [0, 256], sizes = [48, 128], strides = [1, 1]} : vector<48x512xf32> to vector<48x128xf32>
    %45 = vector.extract_strided_slice %40 {offsets = [0, 384], sizes = [48, 128], strides = [1, 1]} : vector<48x512xf32> to vector<48x128xf32>
    %46 = arith.maximumf %44, %45 : vector<48x128xf32>
    %47 = arith.maximumf %43, %46 : vector<48x128xf32>
    %48 = vector.extract_strided_slice %47 {offsets = [0, 0], sizes = [16, 128], strides = [1, 1]} : vector<48x128xf32> to vector<16x128xf32>
    %c8_34 = arith.constant 8 : index
    %c0_35 = arith.constant 0 : index
    %49 = vector.load %arg15[%c8_34, %c0_35] : memref<64x128xf32, #tpu.memory_space<vmem>>, vector<16x128xf32>
    tpu.vector_store %arg15[%c8_34, %c0_35], %48 {strides = array<i32>} : memref<64x128xf32, #tpu.memory_space<vmem>>, vector<16x128xf32>,
    %50 = vector.extract_strided_slice %47 {offsets = [32, 0], sizes = [16, 128], strides = [1, 1]} : vector<48x128xf32> to vector<16x128xf32>
    %c40 = arith.constant 40 : index
    %c0_36 = arith.constant 0 : index
    %51 = vector.load %arg15[%c40, %c0_36] : memref<64x128xf32, #tpu.memory_space<vmem>>, vector<16x128xf32>
    tpu.vector_store %arg15[%c40, %c0_36], %50 {strides = array<i32>} : memref<64x128xf32, #tpu.memory_space<vmem>>, vector<16x128xf32>,
    %cst_37 = arith.constant 0.000000e+00 : f32
    %52 = vector.broadcast %cst_37 : f32 to vector<48x512xf32>
    %c6 = arith.constant 6 : index
    %c0_38 = arith.constant 0 : index
    %53 = vector.load %arg15[%c6, %c0_38] : memref<64x128xf32, #tpu.memory_space<vmem>>, vector<48x128xf32>
    %54 = arith.truncf %53 : vector<48x128xf32> to vector<48x128xbf16>
    %c0_39 = arith.constant 0 : index
    %c0_40 = arith.constant 0 : index
    %c0_41 = arith.constant 0 : index
    %c0_42 = arith.constant 0 : index
    %55 = vector.load %arg5[%c0_39, %c0_40, %c0_41, %c0_42] : memref<1x4x128x512xbf16, #tpu.memory_space<vmem>>, vector<1x1x128x512xbf16>
    %56 = vector.shape_cast %55 : vector<1x1x128x512xbf16> to vector<128x512xbf16>
    %cst_43 = arith.constant dense<0.000000e+00> : vector<48x512xf32>
    %57 = tpu.matmul %54, %56, %cst_43 {dimension_numbers = #tpu.dot_dimension_numbers<[1], [0], [0], [1], [0, 0, 1, 1], [], []>} : vector<48x128xbf16>, vector<128x512xbf16>, vector<48x512xf32> -> vector<48x512xf32>
    %58 = arith.addf %52, %57 : vector<48x512xf32>
    %c8_44 = arith.constant 8 : index
    %c0_45 = arith.constant 0 : index
    %59 = vector.load %arg15[%c8_44, %c0_45] : memref<64x128xf32, #tpu.memory_space<vmem>>, vector<48x128xf32>
    %60 = arith.truncf %59 : vector<48x128xf32> to vector<48x128xbf16>
    %c0_46 = arith.constant 0 : index
    %c1_47 = arith.constant 1 : index
    %c0_48 = arith.constant 0 : index
    %c0_49 = arith.constant 0 : index
    %61 = vector.load %arg5[%c0_46, %c1_47, %c0_48, %c0_49] : memref<1x4x128x512xbf16, #tpu.memory_space<vmem>>, vector<1x1x128x512xbf16>
    %62 = vector.shape_cast %61 : vector<1x1x128x512xbf16> to vector<128x512xbf16>
    %cst_50 = arith.constant dense<0.000000e+00> : vector<48x512xf32>
    %63 = tpu.matmul %60, %62, %cst_50 {dimension_numbers = #tpu.dot_dimension_numbers<[1], [0], [0], [1], [0, 0, 1, 1], [], []>} : vector<48x128xbf16>, vector<128x512xbf16>, vector<48x512xf32> -> vector<48x512xf32>
    %64 = arith.addf %58, %63 : vector<48x512xf32>
    %c10_51 = arith.constant 10 : index
    %c0_52 = arith.constant 0 : index
    %65 = vector.load %arg15[%c10_51, %c0_52] : memref<64x128xf32, #tpu.memory_space<vmem>>, vector<48x128xf32>
    %66 = arith.truncf %65 : vector<48x128xf32> to vector<48x128xbf16>
    %c0_53 = arith.constant 0 : index
    %c2_54 = arith.constant 2 : index
    %c0_55 = arith.constant 0 : index
    %c0_56 = arith.constant 0 : index
    %67 = vector.load %arg5[%c0_53, %c2_54, %c0_55, %c0_56] : memref<1x4x128x512xbf16, #tpu.memory_space<vmem>>, vector<1x1x128x512xbf16>
    %68 = vector.shape_cast %67 : vector<1x1x128x512xbf16> to vector<128x512xbf16>
    %cst_57 = arith.constant dense<0.000000e+00> : vector<48x512xf32>
    %69 = tpu.matmul %66, %68, %cst_57 {dimension_numbers = #tpu.dot_dimension_numbers<[1], [0], [0], [1], [0, 0, 1, 1], [], []>} : vector<48x128xbf16>, vector<128x512xbf16>, vector<48x512xf32> -> vector<48x512xf32>
    %70 = arith.addf %64, %69 : vector<48x512xf32>
    %c12 = arith.constant 12 : index
    %c0_58 = arith.constant 0 : index
    %71 = vector.load %arg15[%c12, %c0_58] : memref<64x128xf32, #tpu.memory_space<vmem>>, vector<48x128xf32>
    %72 = arith.truncf %71 : vector<48x128xf32> to vector<48x128xbf16>
    %c0_59 = arith.constant 0 : index
    %c3_60 = arith.constant 3 : index
    %c0_61 = arith.constant 0 : index
    %c0_62 = arith.constant 0 : index
    %73 = vector.load %arg5[%c0_59, %c3_60, %c0_61, %c0_62] : memref<1x4x128x512xbf16, #tpu.memory_space<vmem>>, vector<1x1x128x512xbf16>
    %74 = vector.shape_cast %73 : vector<1x1x128x512xbf16> to vector<128x512xbf16>
    %cst_63 = arith.constant dense<0.000000e+00> : vector<48x512xf32>
    %75 = tpu.matmul %72, %74, %cst_63 {dimension_numbers = #tpu.dot_dimension_numbers<[1], [0], [0], [1], [0, 0, 1, 1], [], []>} : vector<48x128xbf16>, vector<128x512xbf16>, vector<48x512xf32> -> vector<48x512xf32>
    %76 = arith.addf %70, %75 : vector<48x512xf32>
    %c0_64 = arith.constant 0 : index
    %c0_65 = arith.constant 0 : index
    %c0_66 = arith.constant 0 : index
    %77 = vector.load %arg6[%c0_64, %c0_65, %c0_66] : memref<1x1x512xf32, #tpu.memory_space<vmem>>, vector<1x1x512xf32>
    %78 = vector.shape_cast %77 : vector<1x1x512xf32> to vector<1x512xf32>
    %79 = vector.broadcast %78 : vector<1x512xf32> to vector<48x512xf32>
    %80 = arith.mulf %76, %79 : vector<48x512xf32>
    %c0_67 = arith.constant 0 : index
    %c0_68 = arith.constant 0 : index
    %c0_69 = arith.constant 0 : index
    %81 = vector.load %arg7[%c0_67, %c0_68, %c0_69] : memref<1x1x512xf32, #tpu.memory_space<vmem>>, vector<1x1x512xf32>
    %82 = vector.shape_cast %81 : vector<1x1x512xf32> to vector<1x512xf32>
    %83 = vector.broadcast %82 : vector<1x512xf32> to vector<48x512xf32>
    %84 = arith.addf %80, %83 : vector<48x512xf32>
    %cst_70 = arith.constant 0.000000e+00 : f32
    %85 = vector.broadcast %cst_70 : f32 to vector<48x512xf32>
    %86 = arith.maximumf %84, %85 : vector<48x512xf32>
    %87 = vector.extract_strided_slice %86 {offsets = [0, 0], sizes = [48, 128], strides = [1, 1]} : vector<48x512xf32> to vector<48x128xf32>
    %88 = vector.extract_strided_slice %86 {offsets = [0, 128], sizes = [48, 128], strides = [1, 1]} : vector<48x512xf32> to vector<48x128xf32>
    %89 = arith.maximumf %87, %88 : vector<48x128xf32>
    %90 = vector.extract_strided_slice %86 {offsets = [0, 256], sizes = [48, 128], strides = [1, 1]} : vector<48x512xf32> to vector<48x128xf32>
    %91 = vector.extract_strided_slice %86 {offsets = [0, 384], sizes = [48, 128], strides = [1, 1]} : vector<48x512xf32> to vector<48x128xf32>
    %92 = arith.maximumf %90, %91 : vector<48x128xf32>
    %93 = arith.maximumf %89, %92 : vector<48x128xf32>
    %94 = vector.extract_strided_slice %93 {offsets = [0, 0], sizes = [16, 128], strides = [1, 1]} : vector<48x128xf32> to vector<16x128xf32>
    %c8_71 = arith.constant 8 : index
    %c0_72 = arith.constant 0 : index
    %95 = vector.load %arg15[%c8_71, %c0_72] : memref<64x128xf32, #tpu.memory_space<vmem>>, vector<16x128xf32>
    tpu.vector_store %arg15[%c8_71, %c0_72], %94 {strides = array<i32>} : memref<64x128xf32, #tpu.memory_space<vmem>>, vector<16x128xf32>,
    %96 = vector.extract_strided_slice %93 {offsets = [32, 0], sizes = [16, 128], strides = [1, 1]} : vector<48x128xf32> to vector<16x128xf32>
    %c40_73 = arith.constant 40 : index
    %c0_74 = arith.constant 0 : index
    %97 = vector.load %arg15[%c40_73, %c0_74] : memref<64x128xf32, #tpu.memory_space<vmem>>, vector<16x128xf32>
    tpu.vector_store %arg15[%c40_73, %c0_74], %96 {strides = array<i32>} : memref<64x128xf32, #tpu.memory_space<vmem>>, vector<16x128xf32>,
    %c8_75 = arith.constant 8 : index
    %c0_76 = arith.constant 0 : index
    %98 = vector.load %arg15[%c8_75, %c0_76] : memref<64x128xf32, #tpu.memory_space<vmem>>, vector<1x128xf32>
    %c0_77 = arith.constant 0 : index
    %c0_78 = arith.constant 0 : index
    %99 = vector.load %arg16[%c0_77, %c0_78] : memref<2x512xf32, #tpu.memory_space<vmem>>, vector<1x128xf32>
    tpu.vector_store %arg16[%c0_77, %c0_78], %98 {strides = array<i32>} : memref<2x512xf32, #tpu.memory_space<vmem>>, vector<1x128xf32>,
    %c12_79 = arith.constant 12 : index
    %c0_80 = arith.constant 0 : index
    %100 = vector.load %arg15[%c12_79, %c0_80] : memref<64x128xf32, #tpu.memory_space<vmem>>, vector<1x128xf32>
    %c0_81 = arith.constant 0 : index
    %c128 = arith.constant 128 : index
    %101 = vector.load %arg16[%c0_81, %c128] : memref<2x512xf32, #tpu.memory_space<vmem>>, vector<1x128xf32>
    tpu.vector_store %arg16[%c0_81, %c128], %100 {strides = array<i32>} : memref<2x512xf32, #tpu.memory_space<vmem>>, vector<1x128xf32>,
    %c16 = arith.constant 16 : index
    %c0_82 = arith.constant 0 : index
    %102 = vector.load %arg15[%c16, %c0_82] : memref<64x128xf32, #tpu.memory_space<vmem>>, vector<1x128xf32>
    %c0_83 = arith.constant 0 : index
    %c256 = arith.constant 256 : index
    %103 = vector.load %arg16[%c0_83, %c256] : memref<2x512xf32, #tpu.memory_space<vmem>>, vector<1x128xf32>
    tpu.vector_store %arg16[%c0_83, %c256], %102 {strides = array<i32>} : memref<2x512xf32, #tpu.memory_space<vmem>>, vector<1x128xf32>,
    %c20 = arith.constant 20 : index
    %c0_84 = arith.constant 0 : index
    %104 = vector.load %arg15[%c20, %c0_84] : memref<64x128xf32, #tpu.memory_space<vmem>>, vector<1x128xf32>
    %c0_85 = arith.constant 0 : index
    %c384 = arith.constant 384 : index
    %105 = vector.load %arg16[%c0_85, %c384] : memref<2x512xf32, #tpu.memory_space<vmem>>, vector<1x128xf32>
    tpu.vector_store %arg16[%c0_85, %c384], %104 {strides = array<i32>} : memref<2x512xf32, #tpu.memory_space<vmem>>, vector<1x128xf32>,
    %c40_86 = arith.constant 40 : index
    %c0_87 = arith.constant 0 : index
    %106 = vector.load %arg15[%c40_86, %c0_87] : memref<64x128xf32, #tpu.memory_space<vmem>>, vector<1x128xf32>
    %c1_88 = arith.constant 1 : index
    %c0_89 = arith.constant 0 : index
    %107 = vector.load %arg16[%c1_88, %c0_89] : memref<2x512xf32, #tpu.memory_space<vmem>>, vector<1x128xf32>
    tpu.vector_store %arg16[%c1_88, %c0_89], %106 {strides = array<i32>} : memref<2x512xf32, #tpu.memory_space<vmem>>, vector<1x128xf32>,
    %c44 = arith.constant 44 : index
    %c0_90 = arith.constant 0 : index
    %108 = vector.load %arg15[%c44, %c0_90] : memref<64x128xf32, #tpu.memory_space<vmem>>, vector<1x128xf32>
    %c1_91 = arith.constant 1 : index
    %c128_92 = arith.constant 128 : index
    %109 = vector.load %arg16[%c1_91, %c128_92] : memref<2x512xf32, #tpu.memory_space<vmem>>, vector<1x128xf32>
    tpu.vector_store %arg16[%c1_91, %c128_92], %108 {strides = array<i32>} : memref<2x512xf32, #tpu.memory_space<vmem>>, vector<1x128xf32>,
    %c48 = arith.constant 48 : index
    %c0_93 = arith.constant 0 : index
    %110 = vector.load %arg15[%c48, %c0_93] : memref<64x128xf32, #tpu.memory_space<vmem>>, vector<1x128xf32>
    %c1_94 = arith.constant 1 : index
    %c256_95 = arith.constant 256 : index
    %111 = vector.load %arg16[%c1_94, %c256_95] : memref<2x512xf32, #tpu.memory_space<vmem>>, vector<1x128xf32>
    tpu.vector_store %arg16[%c1_94, %c256_95], %110 {strides = array<i32>} : memref<2x512xf32, #tpu.memory_space<vmem>>, vector<1x128xf32>,
    %c52 = arith.constant 52 : index
    %c0_96 = arith.constant 0 : index
    %112 = vector.load %arg15[%c52, %c0_96] : memref<64x128xf32, #tpu.memory_space<vmem>>, vector<1x128xf32>
    %c1_97 = arith.constant 1 : index
    %c384_98 = arith.constant 384 : index
    %113 = vector.load %arg16[%c1_97, %c384_98] : memref<2x512xf32, #tpu.memory_space<vmem>>, vector<1x128xf32>
    tpu.vector_store %arg16[%c1_97, %c384_98], %112 {strides = array<i32>} : memref<2x512xf32, #tpu.memory_space<vmem>>, vector<1x128xf32>,
    %c0_99 = arith.constant 0 : index
    %c0_100 = arith.constant 0 : index
    %114 = vector.load %arg16[%c0_99, %c0_100] : memref<2x512xf32, #tpu.memory_space<vmem>>, vector<2x512xf32>
    %115 = arith.truncf %114 : vector<2x512xf32> to vector<2x512xbf16>
    %c0_101 = arith.constant 0 : index
    %c0_102 = arith.constant 0 : index
    %c0_103 = arith.constant 0 : index
    %116 = vector.load %arg8[%c0_101, %c0_102, %c0_103] : memref<1x512x64xbf16, #tpu.memory_space<vmem>>, vector<1x512x64xbf16>
    %117 = vector.shape_cast %116 : vector<1x512x64xbf16> to vector<512x64xbf16>
    %cst_104 = arith.constant dense<0.000000e+00> : vector<2x64xf32>
    %118 = tpu.matmul %115, %117, %cst_104 {dimension_numbers = #tpu.dot_dimension_numbers<[1], [0], [0], [1], [0, 0, 1, 1], [], []>} : vector<2x512xbf16>, vector<512x64xbf16>, vector<2x64xf32> -> vector<2x64xf32>
    %c0_105 = arith.constant 0 : index
    %c0_106 = arith.constant 0 : index
    %c0_107 = arith.constant 0 : index
    %119 = vector.load %arg9[%c0_105, %c0_106, %c0_107] : memref<1x1x64xf32, #tpu.memory_space<vmem>>, vector<1x1x64xf32>
    %120 = vector.shape_cast %119 : vector<1x1x64xf32> to vector<1x64xf32>
    %121 = vector.broadcast %120 : vector<1x64xf32> to vector<2x64xf32>
    %122 = arith.addf %118, %121 : vector<2x64xf32>
    %cst_108 = arith.constant 0.000000e+00 : f32
    %123 = vector.broadcast %cst_108 : f32 to vector<2x64xf32>
    %124 = arith.maximumf %122, %123 : vector<2x64xf32>
    %125 = arith.truncf %124 : vector<2x64xf32> to vector<2x64xbf16>
    %c0_109 = arith.constant 0 : index
    %c0_110 = arith.constant 0 : index
    %c0_111 = arith.constant 0 : index
    %126 = vector.load %arg10[%c0_109, %c0_110, %c0_111] : memref<1x64x32xbf16, #tpu.memory_space<vmem>>, vector<1x64x32xbf16>
    %127 = vector.shape_cast %126 : vector<1x64x32xbf16> to vector<64x32xbf16>
    %cst_112 = arith.constant dense<0.000000e+00> : vector<2x32xf32>
    %128 = tpu.matmul %125, %127, %cst_112 {dimension_numbers = #tpu.dot_dimension_numbers<[1], [0], [0], [1], [0, 0, 1, 1], [], []>} : vector<2x64xbf16>, vector<64x32xbf16>, vector<2x32xf32> -> vector<2x32xf32>
    %c0_113 = arith.constant 0 : index
    %c0_114 = arith.constant 0 : index
    %c0_115 = arith.constant 0 : index
    %129 = vector.load %arg11[%c0_113, %c0_114, %c0_115] : memref<1x1x32xf32, #tpu.memory_space<vmem>>, vector<1x1x32xf32>
    %130 = vector.shape_cast %129 : vector<1x1x32xf32> to vector<1x32xf32>
    %131 = vector.broadcast %130 : vector<1x32xf32> to vector<2x32xf32>
    %132 = arith.addf %128, %131 : vector<2x32xf32>
    %cst_116 = arith.constant 0.000000e+00 : f32
    %133 = vector.broadcast %cst_116 : f32 to vector<2x32xf32>
    %134 = arith.maximumf %132, %133 : vector<2x32xf32>
    %135 = arith.truncf %134 : vector<2x32xf32> to vector<2x32xbf16>
    %c0_117 = arith.constant 0 : index
    %c0_118 = arith.constant 0 : index
    %c0_119 = arith.constant 0 : index
    %136 = vector.load %arg12[%c0_117, %c0_118, %c0_119] : memref<1x32x128xbf16, #tpu.memory_space<vmem>>, vector<1x32x128xbf16>
    %137 = vector.shape_cast %136 : vector<1x32x128xbf16> to vector<32x128xbf16>
    %cst_120 = arith.constant dense<0.000000e+00> : vector<2x128xf32>
    %138 = tpu.matmul %135, %137, %cst_120 {dimension_numbers = #tpu.dot_dimension_numbers<[1], [0], [0], [1], [0, 0, 1, 1], [], []>} : vector<2x32xbf16>, vector<32x128xbf16>, vector<2x128xf32> -> vector<2x128xf32>
    %c0_121 = arith.constant 0 : index
    %c0_122 = arith.constant 0 : index
    %c0_123 = arith.constant 0 : index
    %139 = vector.load %arg13[%c0_121, %c0_122, %c0_123] : memref<1x1x128xf32, #tpu.memory_space<vmem>>, vector<1x1x128xf32>
    %140 = vector.shape_cast %139 : vector<1x1x128xf32> to vector<1x128xf32>
    %141 = vector.broadcast %140 : vector<1x128xf32> to vector<2x128xf32>
    %142 = arith.addf %138, %141 : vector<2x128xf32>
    %c0_124 = arith.constant 0 : index
    %c0_125 = arith.constant 0 : index
    %c0_126 = arith.constant 0 : index
    %143 = vector.load %arg14[%c0_124, %c0_125, %c0_126] : memref<1x2x128xf32, #tpu.memory_space<vmem>>, vector<1x2x128xf32>
    %144 = vector.shape_cast %143 : vector<1x2x128xf32> to vector<2x128xf32>
    %145 = vector.shape_cast %142 : vector<2x128xf32> to vector<1x2x128xf32>
    tpu.vector_store %arg14[%c0_124, %c0_125, %c0_126], %145 {strides = array<i32>} : memref<1x2x128xf32, #tpu.memory_space<vmem>>, vector<1x2x128xf32>,
    return
  }
  func.func @transform_0(%arg0: i32) -> (i32, i32, i32) {
    %c0_i32 = arith.constant 0 : i32
    %c0_i32_0 = arith.constant 0 : i32
    %c0_i32_1 = arith.constant 0 : i32
    return %arg0, %c0_i32, %c0_i32_0 : i32, i32, i32
  }
  func.func @transform_1(%arg0: i32) -> (i32, i32, i32, i32) {
    %c0_i32 = arith.constant 0 : i32
    %c0_i32_0 = arith.constant 0 : i32
    %c0_i32_1 = arith.constant 0 : i32
    %c0_i32_2 = arith.constant 0 : i32
    return %arg0, %c0_i32, %c0_i32_0, %c0_i32_1 : i32, i32, i32, i32
  }
  func.func @transform_2(%arg0: i32) -> (i32, i32, i32) {
    %c0_i32 = arith.constant 0 : i32
    %c0_i32_0 = arith.constant 0 : i32
    %c0_i32_1 = arith.constant 0 : i32
    return %arg0, %c0_i32, %c0_i32_0 : i32, i32, i32
  }
  func.func @transform_3(%arg0: i32) -> (i32, i32, i32) {
    %c0_i32 = arith.constant 0 : i32
    %c0_i32_0 = arith.constant 0 : i32
    %c0_i32_1 = arith.constant 0 : i32
    return %arg0, %c0_i32, %c0_i32_0 : i32, i32, i32
  }
  func.func @transform_4(%arg0: i32) -> (i32, i32, i32, i32) {
    %c0_i32 = arith.constant 0 : i32
    %c0_i32_0 = arith.constant 0 : i32
    %c0_i32_1 = arith.constant 0 : i32
    %c0_i32_2 = arith.constant 0 : i32
    return %arg0, %c0_i32, %c0_i32_0, %c0_i32_1 : i32, i32, i32, i32
  }
  func.func @transform_5(%arg0: i32) -> (i32, i32, i32) {
    %c0_i32 = arith.constant 0 : i32
    %c0_i32_0 = arith.constant 0 : i32
    %c0_i32_1 = arith.constant 0 : i32
    return %arg0, %c0_i32, %c0_i32_0 : i32, i32, i32
  }
  func.func @transform_6(%arg0: i32) -> (i32, i32, i32) {
    %c0_i32 = arith.constant 0 : i32
    %c0_i32_0 = arith.constant 0 : i32
    %c0_i32_1 = arith.constant 0 : i32
    return %arg0, %c0_i32, %c0_i32_0 : i32, i32, i32
  }
  func.func @transform_7(%arg0: i32) -> (i32, i32, i32) {
    %c0_i32 = arith.constant 0 : i32
    %c0_i32_0 = arith.constant 0 : i32
    %c0_i32_1 = arith.constant 0 : i32
    return %arg0, %c0_i32, %c0_i32_0 : i32, i32, i32
  }
  func.func @transform_8(%arg0: i32) -> (i32, i32, i32) {
    %c0_i32 = arith.constant 0 : i32
    %c0_i32_0 = arith.constant 0 : i32
    %c0_i32_1 = arith.constant 0 : i32
    return %arg0, %c0_i32, %c0_i32_0 : i32, i32, i32
  }
  func.func @transform_9(%arg0: i32) -> (i32, i32, i32) {
    %c0_i32 = arith.constant 0 : i32
    %c0_i32_0 = arith.constant 0 : i32
    %c0_i32_1 = arith.constant 0 : i32
    return %arg0, %c0_i32, %c0_i32_0 : i32, i32, i32
  }
  func.func @transform_10(%arg0: i32) -> (i32, i32, i32) {
    %c0_i32 = arith.constant 0 : i32
    %c0_i32_0 = arith.constant 0 : i32
    %c0_i32_1 = arith.constant 0 : i32
    return %arg0, %c0_i32, %c0_i32_0 : i32, i32, i32
  }
  func.func @transform_11(%arg0: i32) -> (i32, i32, i32) {
    %c0_i32 = arith.constant 0 : i32
    %c0_i32_0 = arith.constant 0 : i32
    %c0_i32_1 = arith.constant 0 : i32
    return %arg0, %c0_i32, %c0_i32_0 : i32, i32, i32
  }
  func.func @transform_12(%arg0: i32) -> (i32, i32, i32) {
    %c0_i32 = arith.constant 0 : i32
    %c0_i32_0 = arith.constant 0 : i32
    %c0_i32_1 = arith.constant 0 : i32
    return %arg0, %c0_i32, %c0_i32_0 : i32, i32, i32
  }
  func.func @transform_13(%arg0: i32) -> (i32, i32, i32) {
    %c0_i32 = arith.constant 0 : i32
    %c0_i32_0 = arith.constant 0 : i32
    %c0_i32_1 = arith.constant 0 : i32
    return %arg0, %c0_i32, %c0_i32_0 : i32, i32, i32
  }
}

</mosaic_0001>

<llo_original>
// kernel: forward.1
$region0: #{forward.1}
  #allocation0 [shape = 'u32[]', space=smem, size = 0x4, offset = 0x4, fixed_abs, tag = 'smem constant byte address 0x4 - core index']
  #allocation1 [shape = 'u32[144,128]{1,0:T(1,128)}', space=vmem, size = 0x12000, scoped, tag = 'internal scratch']
  #allocation2 [shape = 'f32[64,128]{1,0:T(8,128)}', space=vmem, size = 0x8000, scoped, tag = 'scratch operand']
  #allocation3 [shape = 'f32[2,512]{1,0:T(2,128)}', space=vmem, size = 0x1000, scoped, tag = 'scratch operand']
  %s0 = inlined_call_operand.vmem [shape: f32[2,64,288], index: 0, kind: input, shape index: {}]
  %s1 = inlined_call_operand.vmem [shape: bf16[2,4,288,512], index: 1, kind: input, shape index: {}]
  %s2 = inlined_call_operand.vmem [shape: f32[2,1,512], index: 2, kind: input, shape index: {}]
  %s3 = inlined_call_operand.vmem [shape: f32[2,1,512], index: 3, kind: input, shape index: {}]
  %s4 = inlined_call_operand.hbm [shape: bf16[2,4,128,512], index: 4, kind: input, shape index: {}]
  %s5 = inlined_call_operand.vmem [shape: f32[2,1,512], index: 5, kind: input, shape index: {}]
  %s6 = inlined_call_operand.vmem [shape: f32[2,1,512], index: 6, kind: input, shape index: {}]
  %s7 = inlined_call_operand.vmem [shape: bf16[2,512,64], index: 7, kind: input, shape index: {}]
  %s8 = inlined_call_operand.vmem [shape: f32[2,1,64], index: 8, kind: input, shape index: {}]
  %s9 = inlined_call_operand.vmem [shape: bf16[2,64,32], index: 9, kind: input, shape index: {}]
  %s10 = inlined_call_operand.vmem [shape: f32[2,1,32], index: 10, kind: input, shape index: {}]
  %s11 = inlined_call_operand.vmem [shape: bf16[2,32,128], index: 11, kind: input, shape index: {}]
  %s12 = inlined_call_operand.vmem [shape: f32[2,1,128], index: 12, kind: input, shape index: {}]
  %s13 = inlined_call_operand.vmem [shape: f32[2,2,128], index: 13, kind: output, shape index: {}]
  %s14 = sld [smem:[#allocation0]]
  $region89: #{forward.1} parent=0
    _
  %s16 = ssub.s32 1, %s14
  %s17 = scalar_select 0, %s16, %s14
  $region1: #{forward.1} parent=0
    #allocation4 [shape = 'u8[1048576]{0}', space=vmem, size = 0x100000, scoped, tag = 'input window, operand 4']
    #allocation5 [shape = 's32[2]{0}', space=sflag, size = 0x8, scoped, tag = 'scoped memory for forward.1']
    %18 = vsyncpa [#allocation5], 0
    %s19 = scalar_lea.sflag [#allocation5], 1
    %20 = vsyncpa %s19, 0
    loop: start=0, step=1, limit=4
    $region2: #{forward.1} parent=1 // loop_pre_header
      _
    $region3: #{forward.1} parent=1 // loop_header
      %s22 = sphi 0, %s26
      %p23 = scmp.ge.s32.totalorder %s22, 4
      %s32 = sphi 0, %s34
      %s35 = sphi 0, %s32
      %s36 = sphi 0, %s35
      %s52 = sphi 0, %s36
      %s58 = sphi 0, %s60
      %s61 = sphi 0, %s58
      %s62 = sphi 0, %s61
      %s78 = sphi 0, %s62
      %s84 = sphi 0, %s86
      %s87 = sphi 0, %s84
      %s88 = sphi 0, %s87
      %s104 = sphi 0, %s88
      %s110 = sphi 0, %s112
      %s113 = sphi 0, %s110
      %s114 = sphi 0, %s113
      %s130 = sphi 0, %s114
      %s136 = sphi 0, %s138
      %s139 = sphi 0, %s136
      %s140 = sphi 0, %s139
      %s156 = sphi 0, %s140
      %s162 = sphi 0, %s164
      %s165 = sphi 0, %s162
      %s166 = sphi 0, %s165
      %s182 = sphi 0, %s166
      %s188 = sphi 0, %s190
      %s191 = sphi 0, %s188
      %s192 = sphi 0, %s191
      %s208 = sphi 0, %s192
      %s214 = sphi 0, %s216
      %s217 = sphi 0, %s214
      %s218 = sphi 0, %s217
      %s234 = sphi 0, %s218
      %s240 = sphi 0, %s242
      %s243 = sphi 0, %s240
      %s244 = sphi 0, %s243
      %s260 = sphi 0, %s244
      %s266 = sphi 0, %s268
      %s269 = sphi 0, %s266
      %s270 = sphi 0, %s269
      %s286 = sphi 0, %s270
      %s292 = sphi 0, %s294
      %s295 = sphi 0, %s292
      %s296 = sphi 0, %s295
      %s312 = sphi 0, %s296
      %s318 = sphi 0, %s320
      %s321 = sphi 0, %s318
      %s322 = sphi 0, %s321
      %s338 = sphi 0, %s322
      %s344 = sphi 0, %s346
      %s347 = sphi 0, %s344
      %s348 = sphi 0, %s347
      %s364 = sphi 0, %s348
      %s370 = sphi 0, %s372
      %s373 = sphi 0, %s370
      %s374 = sphi 0, %s373
      %s390 = sphi 0, %s374
    $region4: #{forward.1} parent=1 // loop_header_branch
      %25 = sbr.rel (%p23) target = $region8
    $region5: #{forward.1} parent=1 // loop_body
      %s27 = ssub.s32 %s22, 1
      %s28 = ssub.s32 %s22, 2
      %s29 = sadd.s32 %s22, 1
      %s30 = ssub.s32 %s22, %s29
      %p31 = scmp.eq.s32.totalorder %s30, 0
      %s33 = sadd.s32 %s32, 1
      %s34 = scalar_select %p31, %s32, %s33
      %p37 = pneg %p31
      %p38 = scmp.eq.s32.totalorder %s22, 1
      %p39 = por %p37, %p38
      %p40 = scmp.ne.s32.totalorder %s32, %s35
      %p41 = scmp.eq.s32.totalorder %s22, 0
      %p42 = por %p40, %p41
      %p43 = scmp.ne.s32.totalorder %s32, %s35
      %p44 = scmp.eq.s32.totalorder %s27, 1
      %p45 = por %p43, %p44
      %p46 = scmp.ne.s32.totalorder %s35, %s36
      %p47 = scmp.eq.s32.totalorder %s27, 0
      %p48 = por %p46, %p47
      %p49 = scmp.ne.s32.totalorder %s35, %s36
      %p50 = scmp.eq.s32.totalorder %s28, 1
      %p51 = por %p49, %p50
      %p53 = scmp.ne.s32.totalorder %s36, %s52
      %p54 = scmp.eq.s32.totalorder %s28, 0
      %p55 = por %p53, %p54
      %s56 = ssub.s32 %s22, %s29
      %p57 = scmp.eq.s32.totalorder %s56, 0
      %s59 = sadd.s32 %s58, 1
      %s60 = scalar_select %p57, %s58, %s59
      %p63 = pneg %p57
      %p64 = scmp.eq.s32.totalorder %s22, 1
      %p65 = por %p63, %p64
      %p66 = scmp.ne.s32.totalorder %s58, %s61
      %p67 = scmp.eq.s32.totalorder %s22, 0
      %p68 = por %p66, %p67
      %p69 = scmp.ne.s32.totalorder %s58, %s61
      %p70 = scmp.eq.s32.totalorder %s27, 1
      %p71 = por %p69, %p70
      %p72 = scmp.ne.s32.totalorder %s61, %s62
      %p73 = scmp.eq.s32.totalorder %s27, 0
      %p74 = por %p72, %p73
      %p75 = scmp.ne.s32.totalorder %s61, %s62
      %p76 = scmp.eq.s32.totalorder %s28, 1
      %p77 = por %p75, %p76
      %p79 = scmp.ne.s32.totalorder %s62, %s78
      %p80 = scmp.eq.s32.totalorder %s28, 0
      %p81 = por %p79, %p80
      %s82 = ssub.s32 %s22, %s29
      %p83 = scmp.eq.s32.totalorder %s82, 0
      %s85 = sadd.s32 %s84, 1
      %s86 = scalar_select %p83, %s84, %s85
      %p89 = pneg %p83
      %p90 = scmp.eq.s32.totalorder %s22, 1
      %p91 = por %p89, %p90
      %p92 = scmp.ne.s32.totalorder %s84, %s87
      %p93 = scmp.eq.s32.totalorder %s22, 0
      %p94 = por %p92, %p93
      %p95 = scmp.ne.s32.totalorder %s84, %s87
      %p96 = scmp.eq.s32.totalorder %s27, 1
      %p97 = por %p95, %p96
      %p98 = scmp.ne.s32.totalorder %s87, %s88
      %p99 = scmp.eq.s32.totalorder %s27, 0
      %p100 = por %p98, %p99
      %p101 = scmp.ne.s32.totalorder %s87, %s88
      %p102 = scmp.eq.s32.totalorder %s28, 1
      %p103 = por %p101, %p102
      %p105 = scmp.ne.s32.totalorder %s88, %s104
      %p106 = scmp.eq.s32.totalorder %s28, 0
      %p107 = por %p105, %p106
      %s108 = ssub.s32 %s22, %s29
      %p109 = scmp.eq.s32.totalorder %s108, 0
      %s111 = sadd.s32 %s110, 1
      %s112 = scalar_select %p109, %s110, %s111
      %p115 = pneg %p109
      %p116 = scmp.eq.s32.totalorder %s22, 1
      %p117 = por %p115, %p116
      %p118 = scmp.ne.s32.totalorder %s110, %s113
      %p119 = scmp.eq.s32.totalorder %s22, 0
      %p120 = por %p118, %p119
      %p121 = scmp.ne.s32.totalorder %s110, %s113
      %p122 = scmp.eq.s32.totalorder %s27, 1
      %p123 = por %p121, %p122
      %p124 = scmp.ne.s32.totalorder %s113, %s114
      %p125 = scmp.eq.s32.totalorder %s27, 0
      %p126 = por %p124, %p125
      %p127 = scmp.ne.s32.totalorder %s113, %s114
      %p128 = scmp.eq.s32.totalorder %s28, 1
      %p129 = por %p127, %p128
      %p131 = scmp.ne.s32.totalorder %s114, %s130
      %p132 = scmp.eq.s32.totalorder %s28, 0
      %p133 = por %p131, %p132
      %s134 = ssub.s32 %s22, %s29
      %p135 = scmp.eq.s32.totalorder %s134, 0
      %s137 = sadd.s32 %s136, 1
      %s138 = scalar_select %p135, %s136, %s137
      %p141 = pneg %p135
      %p142 = scmp.eq.s32.totalorder %s22, 1
      %p143 = por %p141, %p142
      %p144 = scmp.ne.s32.totalorder %s136, %s139
      %p145 = scmp.eq.s32.totalorder %s22, 0
      %p146 = por %p144, %p145
      %p147 = scmp.ne.s32.totalorder %s136, %s139
      %p148 = scmp.eq.s32.totalorder %s27, 1
      %p149 = por %p147, %p148
      %p150 = scmp.ne.s32.totalorder %s139, %s140
      %p151 = scmp.eq.s32.totalorder %s27, 0
      %p152 = por %p150, %p151
      %p153 = scmp.ne.s32.totalorder %s139, %s140
      %p154 = scmp.eq.s32.totalorder %s28, 1
      %p155 = por %p153, %p154
      %p157 = scmp.ne.s32.totalorder %s140, %s156
      %p158 = scmp.eq.s32.totalorder %s28, 0
      %p159 = por %p157, %p158
      %s160 = ssub.s32 %s22, %s29
      %p161 = scmp.eq.s32.totalorder %s160, 0
      %s163 = sadd.s32 %s162, 1
      %s164 = scalar_select %p161, %s162, %s163
      %p167 = pneg %p161
      %p168 = scmp.eq.s32.totalorder %s22, 1
      %p169 = por %p167, %p168
      %p170 = scmp.ne.s32.totalorder %s162, %s165
      %p171 = scmp.eq.s32.totalorder %s22, 0
      %p172 = por %p170, %p171
      %p173 = scmp.ne.s32.totalorder %s162, %s165
      %p174 = scmp.eq.s32.totalorder %s27, 1
      %p175 = por %p173, %p174
      %p176 = scmp.ne.s32.totalorder %s165, %s166
      %p177 = scmp.eq.s32.totalorder %s27, 0
      %p178 = por %p176, %p177
      %p179 = scmp.ne.s32.totalorder %s165, %s166
      %p180 = scmp.eq.s32.totalorder %s28, 1
      %p181 = por %p179, %p180
      %p183 = scmp.ne.s32.totalorder %s166, %s182
      %p184 = scmp.eq.s32.totalorder %s28, 0
      %p185 = por %p183, %p184
      %s186 = ssub.s32 %s22, %s29
      %p187 = scmp.eq.s32.totalorder %s186, 0
      %s189 = sadd.s32 %s188, 1
      %s190 = scalar_select %p187, %s188, %s189
      %p193 = pneg %p187
      %p194 = scmp.eq.s32.totalorder %s22, 1
      %p195 = por %p193, %p194
      %p196 = scmp.ne.s32.totalorder %s188, %s191
      %p197 = scmp.eq.s32.totalorder %s22, 0
      %p198 = por %p196, %p197
      %p199 = scmp.ne.s32.totalorder %s188, %s191
      %p200 = scmp.eq.s32.totalorder %s27, 1
      %p201 = por %p199, %p200
      %p202 = scmp.ne.s32.totalorder %s191, %s192
      %p203 = scmp.eq.s32.totalorder %s27, 0
      %p204 = por %p202, %p203
      %p205 = scmp.ne.s32.totalorder %s191, %s192
      %p206 = scmp.eq.s32.totalorder %s28, 1
      %p207 = por %p205, %p206
      %p209 = scmp.ne.s32.totalorder %s192, %s208
      %p210 = scmp.eq.s32.totalorder %s28, 0
      %p211 = por %p209, %p210
      %s212 = ssub.s32 %s22, %s29
      %p213 = scmp.eq.s32.totalorder %s212, 0
      %s215 = sadd.s32 %s214, 1
      %s216 = scalar_select %p213, %s214, %s215
      %p219 = pneg %p213
      %p220 = scmp.eq.s32.totalorder %s22, 1
      %p221 = por %p219, %p220
      %p222 = scmp.ne.s32.totalorder %s214, %s217
      %p223 = scmp.eq.s32.totalorder %s22, 0
      %p224 = por %p222, %p223
      %p225 = scmp.ne.s32.totalorder %s214, %s217
      %p226 = scmp.eq.s32.totalorder %s27, 1
      %p227 = por %p225, %p226
      %p228 = scmp.ne.s32.totalorder %s217, %s218
      %p229 = scmp.eq.s32.totalorder %s27, 0
      %p230 = por %p228, %p229
      %p231 = scmp.ne.s32.totalorder %s217, %s218
      %p232 = scmp.eq.s32.totalorder %s28, 1
      %p233 = por %p231, %p232
      %p235 = scmp.ne.s32.totalorder %s218, %s234
      %p236 = scmp.eq.s32.totalorder %s28, 0
      %p237 = por %p235, %p236
      %s238 = ssub.s32 %s22, %s29
      %p239 = scmp.eq.s32.totalorder %s238, 0
      %s241 = sadd.s32 %s240, 1
      %s242 = scalar_select %p239, %s240, %s241
      %p245 = pneg %p239
      %p246 = scmp.eq.s32.totalorder %s22, 1
      %p247 = por %p245, %p246
      %p248 = scmp.ne.s32.totalorder %s240, %s243
      %p249 = scmp.eq.s32.totalorder %s22, 0
      %p250 = por %p248, %p249
      %p251 = scmp.ne.s32.totalorder %s240, %s243
      %p252 = scmp.eq.s32.totalorder %s27, 1
      %p253 = por %p251, %p252
      %p254 = scmp.ne.s32.totalorder %s243, %s244
      %p255 = scmp.eq.s32.totalorder %s27, 0
      %p256 = por %p254, %p255
      %p257 = scmp.ne.s32.totalorder %s243, %s244
      %p258 = scmp.eq.s32.totalorder %s28, 1
      %p259 = por %p257, %p258
      %p261 = scmp.ne.s32.totalorder %s244, %s260
      %p262 = scmp.eq.s32.totalorder %s28, 0
      %p263 = por %p261, %p262
      %s264 = ssub.s32 %s22, %s29
      %p265 = scmp.eq.s32.totalorder %s264, 0
      %s267 = sadd.s32 %s266, 1
      %s268 = scalar_select %p265, %s266, %s267
      %p271 = pneg %p265
      %p272 = scmp.eq.s32.totalorder %s22, 1
      %p273 = por %p271, %p272
      %p274 = scmp.ne.s32.totalorder %s266, %s269
      %p275 = scmp.eq.s32.totalorder %s22, 0
      %p276 = por %p274, %p275
      %p277 = scmp.ne.s32.totalorder %s266, %s269
      %p278 = scmp.eq.s32.totalorder %s27, 1
      %p279 = por %p277, %p278
      %p280 = scmp.ne.s32.totalorder %s269, %s270
      %p281 = scmp.eq.s32.totalorder %s27, 0
      %p282 = por %p280, %p281
      %p283 = scmp.ne.s32.totalorder %s269, %s270
      %p284 = scmp.eq.s32.totalorder %s28, 1
      %p285 = por %p283, %p284
      %p287 = scmp.ne.s32.totalorder %s270, %s286
      %p288 = scmp.eq.s32.totalorder %s28, 0
      %p289 = por %p287, %p288
      %s290 = ssub.s32 %s22, %s29
      %p291 = scmp.eq.s32.totalorder %s290, 0
      %s293 = sadd.s32 %s292, 1
      %s294 = scalar_select %p291, %s292, %s293
      %p297 = pneg %p291
      %p298 = scmp.eq.s32.totalorder %s22, 1
      %p299 = por %p297, %p298
      %p300 = scmp.ne.s32.totalorder %s292, %s295
      %p301 = scmp.eq.s32.totalorder %s22, 0
      %p302 = por %p300, %p301
      %p303 = scmp.ne.s32.totalorder %s292, %s295
      %p304 = scmp.eq.s32.totalorder %s27, 1
      %p305 = por %p303, %p304
      %p306 = scmp.ne.s32.totalorder %s295, %s296
      %p307 = scmp.eq.s32.totalorder %s27, 0
      %p308 = por %p306, %p307
      %p309 = scmp.ne.s32.totalorder %s295, %s296
      %p310 = scmp.eq.s32.totalorder %s28, 1
      %p311 = por %p309, %p310
      %p313 = scmp.ne.s32.totalorder %s296, %s312
      %p314 = scmp.eq.s32.totalorder %s28, 0
      %p315 = por %p313, %p314
      %s316 = ssub.s32 %s22, %s29
      %p317 = scmp.eq.s32.totalorder %s316, 0
      %s319 = sadd.s32 %s318, 1
      %s320 = scalar_select %p317, %s318, %s319
      %p323 = pneg %p317
      %p324 = scmp.eq.s32.totalorder %s22, 1
      %p325 = por %p323, %p324
      %p326 = scmp.ne.s32.totalorder %s318, %s321
      %p327 = scmp.eq.s32.totalorder %s22, 0
      %p328 = por %p326, %p327
      %p329 = scmp.ne.s32.totalorder %s318, %s321
      %p330 = scmp.eq.s32.totalorder %s27, 1
      %p331 = por %p329, %p330
      %p332 = scmp.ne.s32.totalorder %s321, %s322
      %p333 = scmp.eq.s32.totalorder %s27, 0
      %p334 = por %p332, %p333
      %p335 = scmp.ne.s32.totalorder %s321, %s322
      %p336 = scmp.eq.s32.totalorder %s28, 1
      %p337 = por %p335, %p336
      %p339 = scmp.ne.s32.totalorder %s322, %s338
      %p340 = scmp.eq.s32.totalorder %s28, 0
      %p341 = por %p339, %p340
      %s342 = ssub.s32 %s22, %s29
      %p343 = scmp.eq.s32.totalorder %s342, 0
      %s345 = sadd.s32 %s344, 1
      %s346 = scalar_select %p343, %s344, %s345
      %p349 = pneg %p343
      %p350 = scmp.eq.s32.totalorder %s22, 1
      %p351 = por %p349, %p350
      %p352 = scmp.ne.s32.totalorder %s344, %s347
      %p353 = scmp.eq.s32.totalorder %s22, 0
      %p354 = por %p352, %p353
      %p355 = scmp.ne.s32.totalorder %s344, %s347
      %p356 = scmp.eq.s32.totalorder %s27, 1
      %p357 = por %p355, %p356
      %p358 = scmp.ne.s32.totalorder %s347, %s348
      %p359 = scmp.eq.s32.totalorder %s27, 0
      %p360 = por %p358, %p359
      %p361 = scmp.ne.s32.totalorder %s347, %s348
      %p362 = scmp.eq.s32.totalorder %s28, 1
      %p363 = por %p361, %p362
      %p365 = scmp.ne.s32.totalorder %s348, %s364
      %p366 = scmp.eq.s32.totalorder %s28, 0
      %p367 = por %p365, %p366
      %s368 = ssub.s32 %s22, %s29
      %p369 = scmp.eq.s32.totalorder %s368, 0
      %s371 = sadd.s32 %s370, 1
      %s372 = scalar_select %p369, %s370, %s371
      %p375 = pneg %p369
      %p376 = scmp.eq.s32.totalorder %s22, 1
      %p377 = por %p375, %p376
      %p378 = scmp.ne.s32.totalorder %s370, %s373
      %p379 = scmp.eq.s32.totalorder %s22, 0
      %p380 = por %p378, %p379
      %p381 = scmp.ne.s32.totalorder %s370, %s373
      %p382 = scmp.eq.s32.totalorder %s27, 1
      %p383 = por %p381, %p382
      %p384 = scmp.ne.s32.totalorder %s373, %s374
      %p385 = scmp.eq.s32.totalorder %s27, 0
      %p386 = por %p384, %p385
      %p387 = scmp.ne.s32.totalorder %s373, %s374
      %p388 = scmp.eq.s32.totalorder %s28, 1
      %p389 = por %p387, %p388
      %p391 = scmp.ne.s32.totalorder %s374, %s390
      %p392 = scmp.eq.s32.totalorder %s28, 0
      %p393 = por %p391, %p392
      %p394 = scmp.le.s32.totalorder 1, %s22
      %p395 = scmp.lt.s32.totalorder %s22, 3
      %p396 = pnand %p394, %p395
      %p397 = pneg %p396
      // Predicated region
      $region9: #{forward.1} parent=5 // pred_check
        _
      $region10: #{forward.1} parent=5 // pred_check_branch
        %399 = sbr.rel (%p396) target = $region12
      $region11: #{forward.1} parent=5 // pred_region
        %s400 = ssub.s32 %s22, 1
      $region12: #{forward.1} parent=5 // pred_fallthru
        _
      %p401 = scmp.lt.s32.totalorder %s22, 2
      // Predicated region
      $region13: #{forward.1} parent=5 // pred_check
        %p402 = pneg %p401
      $region14: #{forward.1} parent=5 // pred_check_branch
        %404 = sbr.rel (%p402) target = $region16
      $region15: #{forward.1} parent=5 // pred_region
        // Predicated region
        $region17: #{forward.1} parent=15 // pred_check
          %p405 = pneg %p42
        $region18: #{forward.1} parent=15 // pred_check_branch
          %407 = sbr.rel (%p405) target = $region20
        $region19: #{forward.1} parent=15 // pred_region
          %p408 = scmp.lt.s32.totalorder %s22, 1
          %s409 = scalar_select %p408, %s22, 1
          %s410 = smul.addr %s409, 24
          %s411 = smul.addr %s410, 8
          %s412 = scalar_lea.vmem %s0, %s411
        $region20: #{forward.1} parent=15 // pred_fallthru
          _
        // Predicated region
        $region21: #{forward.1} parent=15 // pred_check
          %p413 = pneg %p68
        $region22: #{forward.1} parent=15 // pred_check_branch
          %415 = sbr.rel (%p413) target = $region24
        $region23: #{forward.1} parent=15 // pred_region
          %p416 = scmp.lt.s32.totalorder %s22, 1
          %s417 = scalar_select %p416, %s22, 1
          %s418 = smul.addr %s417, 576
          %s419 = smul.addr %s418, 4
          %s420 = scalar_lea.vmem %s1, %s419
        $region24: #{forward.1} parent=15 // pred_fallthru
          _
        // Predicated region
        $region25: #{forward.1} parent=15 // pred_check
          %p421 = pneg %p94
        $region26: #{forward.1} parent=15 // pred_check_branch
          %423 = sbr.rel (%p421) target = $region28
        $region27: #{forward.1} parent=15 // pred_region
          %p424 = scmp.lt.s32.totalorder %s22, 1
          %s425 = scalar_select %p424, %s22, 1
          %s426 = smul.addr %s425, 4
          %s427 = scalar_lea.vmem %s2, %s426
        $region28: #{forward.1} parent=15 // pred_fallthru
          _
        // Predicated region
        $region29: #{forward.1} parent=15 // pred_check
          %p428 = pneg %p120
        $region30: #{forward.1} parent=15 // pred_check_branch
          %430 = sbr.rel (%p428) target = $region32
        $region31: #{forward.1} parent=15 // pred_region
          %p431 = scmp.lt.s32.totalorder %s22, 1
          %s432 = scalar_select %p431, %s22, 1
          %s433 = smul.addr %s432, 4
          %s434 = scalar_lea.vmem %s3, %s433
        $region32: #{forward.1} parent=15 // pred_fallthru
          _
        // Predicated region
        $region33: #{forward.1} parent=15 // pred_check
          %p435 = pneg %p146
        $region34: #{forward.1} parent=15 // pred_check_branch
          %437 = sbr.rel (%p435) target = $region36
        $region35: #{forward.1} parent=15 // pred_region
          %s438 = sand.u32 %s136, 1
          %s439 = scalar_lea.sflag [#allocation5], %s438
          %s440 = sand.u32 %s136, 1
          %s441 = smul.addr %s440, 1024
          %s442 = scalar_lea.vmem [#allocation4], %s441
          %s444 = ssub.s32 16384, 16384
          %445 = vsyncadd %s439, %s444
          %s446 = smul.addr %s22, 256
          %s447 = smul.addr %s446, 64
          %s448 = scalar_lea.hbm %s4, %s447
          %s449 = sshll.u32 %s442, 4
          %s450 = int_to_ptr.vmem [resolvable:$true] %s449
          %455 = dma.hbm_to_vmem [thread:$0]  %s448, 16384, %s450, %s439, 256, 256, 16
        $region36: #{forward.1} parent=15 // pred_fallthru
          _
        // Predicated region
        $region37: #{forward.1} parent=15 // pred_check
          %p456 = pneg %p172
        $region38: #{forward.1} parent=15 // pred_check_branch
          %458 = sbr.rel (%p456) target = $region40
        $region39: #{forward.1} parent=15 // pred_region
          %p459 = scmp.lt.s32.totalorder %s22, 1
          %s460 = scalar_select %p459, %s22, 1
          %s461 = smul.addr %s460, 4
          %s462 = scalar_lea.vmem %s5, %s461
        $region40: #{forward.1} parent=15 // pred_fallthru
          _
        // Predicated region
        $region41: #{forward.1} parent=15 // pred_check
          %p463 = pneg %p198
        $region42: #{forward.1} parent=15 // pred_check_branch
          %465 = sbr.rel (%p463) target = $region44
        $region43: #{forward.1} parent=15 // pred_region
          %p466 = scmp.lt.s32.totalorder %s22, 1
          %s467 = scalar_select %p466, %s22, 1
          %s468 = smul.addr %s467, 4
          %s469 = scalar_lea.vmem %s6, %s468
        $region44: #{forward.1} parent=15 // pred_fallthru
          _
        // Predicated region
        $region45: #{forward.1} parent=15 // pred_check
          %p470 = pneg %p224
        $region46: #{forward.1} parent=15 // pred_check_branch
          %472 = sbr.rel (%p470) target = $region48
        $region47: #{forward.1} parent=15 // pred_region
          %p473 = scmp.lt.s32.totalorder %s22, 1
          %s474 = scalar_select %p473, %s22, 1
          %s475 = smul.addr %s474, 64
          %s476 = smul.addr %s475, 4
          %s477 = scalar_lea.vmem %s7, %s476
        $region48: #{forward.1} parent=15 // pred_fallthru
          _
        // Predicated region
        $region49: #{forward.1} parent=15 // pred_check
          %p478 = pneg %p250
        $region50: #{forward.1} parent=15 // pred_check_branch
          %480 = sbr.rel (%p478) target = $region52
        $region51: #{forward.1} parent=15 // pred_region
          %p481 = scmp.lt.s32.totalorder %s22, 1
          %s482 = scalar_select %p481, %s22, 1
          %s483 = scalar_lea.vmem %s8, %s482
        $region52: #{forward.1} parent=15 // pred_fallthru
          _
        // Predicated region
        $region53: #{forward.1} parent=15 // pred_check
          %p484 = pneg %p276
        $region54: #{forward.1} parent=15 // pred_check_branch
          %486 = sbr.rel (%p484) target = $region56
        $region55: #{forward.1} parent=15 // pred_region
          %p487 = scmp.lt.s32.totalorder %s22, 1
          %s488 = scalar_select %p487, %s22, 1
          %s489 = smul.addr %s488, 8
          %s490 = smul.addr %s489, 4
          %s491 = scalar_lea.vmem %s9, %s490
        $region56: #{forward.1} parent=15 // pred_fallthru
          _
        // Predicated region
        $region57: #{forward.1} parent=15 // pred_check
          %p492 = pneg %p302
        $region58: #{forward.1} parent=15 // pred_check_branch
          %494 = sbr.rel (%p492) target = $region60
        $region59: #{forward.1} parent=15 // pred_region
          %p495 = scmp.lt.s32.totalorder %s22, 1
          %s496 = scalar_select %p495, %s22, 1
          %s497 = scalar_lea.vmem %s10, %s496
        $region60: #{forward.1} parent=15 // pred_fallthru
          _
        // Predicated region
        $region61: #{forward.1} parent=15 // pred_check
          %p498 = pneg %p328
        $region62: #{forward.1} parent=15 // pred_check_branch
          %500 = sbr.rel (%p498) target = $region64
        $region63: #{forward.1} parent=15 // pred_region
          %p501 = scmp.lt.s32.totalorder %s22, 1
          %s502 = scalar_select %p501, %s22, 1
          %s503 = smul.addr %s502, 4
          %s504 = smul.addr %s503, 4
          %s505 = scalar_lea.vmem %s11, %s504
        $region64: #{forward.1} parent=15 // pred_fallthru
          _
        // Predicated region
        $region65: #{forward.1} parent=15 // pred_check
          %p506 = pneg %p354
        $region66: #{forward.1} parent=15 // pred_check_branch
          %508 = sbr.rel (%p506) target = $region68
        $region67: #{forward.1} parent=15 // pred_region
          %p509 = scmp.lt.s32.totalorder %s22, 1
          %s510 = scalar_select %p509, %s22, 1
          %s511 = scalar_lea.vmem %s12, %s510
        $region68: #{forward.1} parent=15 // pred_fallthru
          _
      $region16: #{forward.1} parent=5 // pred_fallthru
        _
      %p512 = scmp.le.s32.totalorder 1, %s22
      %p513 = scmp.lt.s32.totalorder %s22, 3
      %p514 = pnand %p512, %p513
      %p515 = pneg %p514
      // Predicated region
      $region69: #{forward.1} parent=5 // pred_check
        _
      $region70: #{forward.1} parent=5 // pred_check_branch
        %517 = sbr.rel (%p514) target = $region72
      $region71: #{forward.1} parent=5 // pred_region
        %s518 = ssub.s32 %s22, 1
        %s519 = sand.u32 %s139, 1
        %s520 = scalar_lea.sflag [#allocation5], %s519
        %s521 = sand.u32 %s139, 1
        %s522 = smul.addr %s521, 1024
        %s523 = scalar_lea.vmem [#allocation4], %s522
        // Predicated region
        $region73: #{forward.1} parent=71 // pred_check
          %p524 = pneg %p152
        $region74: #{forward.1} parent=71 // pred_check_branch
          %526 = sbr.rel (%p524) target = $region76
        $region75: #{forward.1} parent=71 // pred_region
          %527 = dma.done %s520, 16384
        $region76: #{forward.1} parent=71 // pred_fallthru
          _
        %p528 = scmp.lt.s32.totalorder %s27, 1
        %s529 = scalar_select %p528, %s27, 1
        %s530 = smul.addr %s529, 24
        %s531 = smul.addr %s530, 8
        %s532 = scalar_lea.vmem %s0, %s531
        %p533 = pneg %p48
        %p534 = pneg %p45
        %p535 = scmp.lt.s32.totalorder %s27, 1
        %s536 = scalar_select %p535, %s27, 1
        %s537 = smul.addr %s536, 576
        %s538 = smul.addr %s537, 4
        %s539 = scalar_lea.vmem %s1, %s538
        %p540 = pneg %p74
        %p541 = pneg %p71
        %p542 = scmp.lt.s32.totalorder %s27, 1
        %s543 = scalar_select %p542, %s27, 1
        %s544 = smul.addr %s543, 4
        %s545 = scalar_lea.vmem %s2, %s544
        %p546 = pneg %p100
        %p547 = pneg %p97
        %p548 = scmp.lt.s32.totalorder %s27, 1
        %s549 = scalar_select %p548, %s27, 1
        %s550 = smul.addr %s549, 4
        %s551 = scalar_lea.vmem %s3, %s550
        %p552 = pneg %p126
        %p553 = pneg %p123
        %s554 = sand.u32 %s139, 1
        %s555 = scalar_lea.sflag [#allocation5], %s554
        %s556 = sand.u32 %s139, 1
        %s557 = smul.addr %s556, 1024
        %s558 = scalar_lea.vmem [#allocation4], %s557
        %p559 = pneg %p152
        %p560 = pneg %p149
        %p561 = scmp.lt.s32.totalorder %s27, 1
        %s562 = scalar_select %p561, %s27, 1
        %s563 = smul.addr %s562, 4
        %s564 = scalar_lea.vmem %s5, %s563
        %p565 = pneg %p178
        %p566 = pneg %p175
        %p567 = scmp.lt.s32.totalorder %s27, 1
        %s568 = scalar_select %p567, %s27, 1
        %s569 = smul.addr %s568, 4
        %s570 = scalar_lea.vmem %s6, %s569
        %p571 = pneg %p204
        %p572 = pneg %p201
        %p573 = scmp.lt.s32.totalorder %s27, 1
        %s574 = scalar_select %p573, %s27, 1
        %s575 = smul.addr %s574, 64
        %s576 = smul.addr %s575, 4
        %s577 = scalar_lea.vmem %s7, %s576
        %p578 = pneg %p230
        %p579 = pneg %p227
        %p580 = scmp.lt.s32.totalorder %s27, 1
        %s581 = scalar_select %p580, %s27, 1
        %s582 = scalar_lea.vmem %s8, %s581
        %p583 = pneg %p256
        %p584 = pneg %p253
        %p585 = scmp.lt.s32.totalorder %s27, 1
        %s586 = scalar_select %p585, %s27, 1
        %s587 = smul.addr %s586, 8
        %s588 = smul.addr %s587, 4
        %s589 = scalar_lea.vmem %s9, %s588
        %p590 = pneg %p282
        %p591 = pneg %p279
        %p592 = scmp.lt.s32.totalorder %s27, 1
        %s593 = scalar_select %p592, %s27, 1
        %s594 = scalar_lea.vmem %s10, %s593
        %p595 = pneg %p308
        %p596 = pneg %p305
        %p597 = scmp.lt.s32.totalorder %s27, 1
        %s598 = scalar_select %p597, %s27, 1
        %s599 = smul.addr %s598, 4
        %s600 = smul.addr %s599, 4
        %s601 = scalar_lea.vmem %s11, %s600
        %p602 = pneg %p334
        %p603 = pneg %p331
        %p604 = scmp.lt.s32.totalorder %s27, 1
        %s605 = scalar_select %p604, %s27, 1
        %s606 = scalar_lea.vmem %s12, %s605
        %p607 = pneg %p360
        %p608 = pneg %p357
        %p609 = pneg %p386
        %p610 = pneg %p383
        %p611 = scmp.lt.s32.totalorder %s27, 1
        %s612 = scalar_select %p611, %s27, 1
        %s613 = smul.addr %s612, 2
        %s614 = scalar_lea.vmem %s13, %s613
        %p615 = scmp.lt.s32.totalorder %s27, 1
        %s616 = scalar_select %p615, %s27, 1
        %s617 = smul.addr %s616, 24
        %s618 = smul.addr %s617, 8
        %s619 = scalar_lea.vmem %s0, %s618
        %p620 = scmp.lt.s32.totalorder %s27, 1
        %s621 = scalar_select %p620, %s27, 1
        %s622 = smul.addr %s621, 576
        %s623 = smul.addr %s622, 4
        %s624 = scalar_lea.vmem %s1, %s623
        %p625 = scmp.lt.s32.totalorder %s27, 1
        %s626 = scalar_select %p625, %s27, 1
        %s627 = smul.addr %s626, 4
        %s628 = scalar_lea.vmem %s2, %s627
        %p629 = scmp.lt.s32.totalorder %s27, 1
        %s630 = scalar_select %p629, %s27, 1
        %s631 = smul.addr %s630, 4
        %s632 = scalar_lea.vmem %s3, %s631
        %p633 = scmp.lt.s32.totalorder %s27, 1
        %s634 = scalar_select %p633, %s27, 1
        %s635 = smul.addr %s634, 4
        %s636 = scalar_lea.vmem %s5, %s635
        %p637 = scmp.lt.s32.totalorder %s27, 1
        %s638 = scalar_select %p637, %s27, 1
        %s639 = smul.addr %s638, 4
        %s640 = scalar_lea.vmem %s6, %s639
        %p641 = scmp.lt.s32.totalorder %s27, 1
        %s642 = scalar_select %p641, %s27, 1
        %s643 = smul.addr %s642, 64
        %s644 = smul.addr %s643, 4
        %s645 = scalar_lea.vmem %s7, %s644
        %p646 = scmp.lt.s32.totalorder %s27, 1
        %s647 = scalar_select %p646, %s27, 1
        %s648 = scalar_lea.vmem %s8, %s647
        %p649 = scmp.lt.s32.totalorder %s27, 1
        %s650 = scalar_select %p649, %s27, 1
        %s651 = smul.addr %s650, 8
        %s652 = smul.addr %s651, 4
        %s653 = scalar_lea.vmem %s9, %s652
        %p654 = scmp.lt.s32.totalorder %s27, 1
        %s655 = scalar_select %p654, %s27, 1
        %s656 = scalar_lea.vmem %s10, %s655
        %p657 = scmp.lt.s32.totalorder %s27, 1
        %s658 = scalar_select %p657, %s27, 1
        %s659 = smul.addr %s658, 4
        %s660 = smul.addr %s659, 4
        %s661 = scalar_lea.vmem %s11, %s660
        %p662 = scmp.lt.s32.totalorder %s27, 1
        %s663 = scalar_select %p662, %s27, 1
        %s664 = scalar_lea.vmem %s12, %s663
        %p665 = scmp.lt.s32.totalorder %s27, 1
        %s666 = scalar_select %p665, %s27, 1
        %s667 = smul.addr %s666, 2
        %s668 = scalar_lea.vmem %s13, %s667
        %670 = vst [vmem:[#allocation2] sm:$0xff] 0.0
        %671 = vst [vmem:[#allocation2 + $0x8] sm:$0xff] 0.0
        %672 = vst [vmem:[#allocation2 + $0x10] sm:$0xff] 0.0
        %673 = vst [vmem:[#allocation2 + $0x18] sm:$0xff] 0.0
        %674 = vst [vmem:[#allocation2 + $0x20] sm:$0xff] 0.0
        %675 = vst [vmem:[#allocation2 + $0x28] sm:$0xff] 0.0
        %676 = vst [vmem:[#allocation2 + $0x30] sm:$0xff] 0.0
        %677 = vst [vmem:[#allocation2 + $0x38] sm:$0xff] 0.0
        %v678 = vld [vmem:[%s619] sm:$0x80]
        %v679 = vld [vmem:[%s619 + $0x8] sm:$0x80]
        %v680 = vld [vmem:[%s619 + $0x10] sm:$0x80]
        %v681 = vld [vmem:[%s619 + $0x18] sm:$0xff]
        %v682 = vld [vmem:[%s619 + $0x20] sm:$0xff]
        %v683 = vld [vmem:[%s619 + $0x28] sm:$0xff]
        %v684 = vld [vmem:[%s619 + $0x30] sm:$0xff]
        %v685 = vld [vmem:[%s619 + $0x38] sm:$0xff]
        %v686 = vld [vmem:[%s619 + $0x40] sm:$0xff]
        %v687 = vld [vmem:[%s619 + $0x48] sm:$0xff]
        %v688 = vld [vmem:[%s619 + $0x50] sm:$0xff]
        %v689 = vld [vmem:[%s619 + $0x58] sm:$0xff]
        %v690 = vld [vmem:[%s619 + $0x60] sm:$0xff]
        %v691 = vld [vmem:[%s619 + $0x68] sm:$0xff]
        %v692 = vld [vmem:[%s619 + $0x70] sm:$0xff]
        %v693 = vld [vmem:[%s619 + $0x78] sm:$0xff]
        %v694 = vld [vmem:[%s619 + $0x80] sm:$0xff]
        %v695 = vld [vmem:[%s619 + $0x88] sm:$0xff]
        %v696 = vld [vmem:[%s619 + $0x90] sm:$0x7f]
        %v697 = vld [vmem:[%s619 + $0x98] sm:$0x7f]
        %v698 = vld [vmem:[%s619 + $0xa0] sm:$0x7f]
        %v699 = vpack.c.bf16 %v681, %v678
        %v700 = vpack.c.bf16 %v682, %v679
        %v701 = vpack.c.bf16 %v683, %v680
        %v702 = vpack.c.bf16 %v687, %v684
        %v703 = vpack.c.bf16 %v688, %v685
        %v704 = vpack.c.bf16 %v689, %v686
        %v705 = vpack.c.bf16 %v693, %v690
        %v706 = vpack.c.bf16 %v694, %v691
        %v707 = vpack.c.bf16 %v695, %v692
        %v708 = vpack.c.bf16 %v696, %v696
        %v709 = vpack.c.bf16 %v697, %v697
        %v710 = vpack.c.bf16 %v698, %v698
        %v711 = vld [vmem:[%s624] sm:$0xff]
        %v712 = vld [vmem:[%s624 + $0x8] sm:$0xff]
        %v713 = vld [vmem:[%s624 + $0x10] sm:$0xff]
        %v714 = vld [vmem:[%s624 + $0x18] sm:$0xff]
        %v715 = vld [vmem:[%s624 + $0x20] sm:$0xff]
        %v716 = vld [vmem:[%s624 + $0x28] sm:$0xff]
        %v717 = vld [vmem:[%s624 + $0x30] sm:$0xff]
        %v718 = vld [vmem:[%s624 + $0x38] sm:$0xff]
        %v719 = vld [vmem:[%s624 + $0x40] sm:$0xff]
        %v720 = vld [vmem:[%s624 + $0x48] sm:$0xff]
        %v721 = vld [vmem:[%s624 + $0x50] sm:$0xff]
        %v722 = vld [vmem:[%s624 + $0x58] sm:$0xff]
        %v723 = vld [vmem:[%s624 + $0x60] sm:$0xff]
        %v724 = vld [vmem:[%s624 + $0x68] sm:$0xff]
        %v725 = vld [vmem:[%s624 + $0x70] sm:$0xff]
        %v726 = vld [vmem:[%s624 + $0x78] sm:$0xff]
        %v727 = vld [vmem:[%s624 + $0x80] sm:$0xff]
        %v728 = vld [vmem:[%s624 + $0x88] sm:$0xff]
        %v729 = vld [vmem:[%s624 + $0x90] sm:$0xff]
        %v730 = vld [vmem:[%s624 + $0x98] sm:$0xff]
        %v731 = vld [vmem:[%s624 + $0xa0] sm:$0xff]
        %v732 = vld [vmem:[%s624 + $0xa8] sm:$0xff]
        %v733 = vld [vmem:[%s624 + $0xb0] sm:$0xff]
        %v734 = vld [vmem:[%s624 + $0xb8] sm:$0xff]
        %v735 = vld [vmem:[%s624 + $0xc0] sm:$0xff]
        %v736 = vld [vmem:[%s624 + $0xc8] sm:$0xff]
        %v737 = vld [vmem:[%s624 + $0xd0] sm:$0xff]
        %v738 = vld [vmem:[%s624 + $0xd8] sm:$0xff]
        %v739 = vld [vmem:[%s624 + $0xe0] sm:$0xff]
        %v740 = vld [vmem:[%s624 + $0xe8] sm:$0xff]
        %v741 = vld [vmem:[%s624 + $0xf0] sm:$0xff]
        %v742 = vld [vmem:[%s624 + $0xf8] sm:$0xff]
        %v743 = vld [vmem:[%s624 + $0x100] sm:$0xff]
        %v744 = vld [vmem:[%s624 + $0x108] sm:$0xff]
        %v745 = vld [vmem:[%s624 + $0x110] sm:$0xff]
        %v746 = vld [vmem:[%s624 + $0x118] sm:$0xff]
        %v747 = vld [vmem:[%s624 + $0x120] sm:$0xff]
        %v748 = vld [vmem:[%s624 + $0x128] sm:$0xff]
        %v749 = vld [vmem:[%s624 + $0x130] sm:$0xff]
        %v750 = vld [vmem:[%s624 + $0x138] sm:$0xff]
        %v751 = vld [vmem:[%s624 + $0x140] sm:$0xff]
        %v752 = vld [vmem:[%s624 + $0x148] sm:$0xff]
        %v753 = vld [vmem:[%s624 + $0x150] sm:$0xff]
        %v754 = vld [vmem:[%s624 + $0x158] sm:$0xff]
        %v755 = vld [vmem:[%s624 + $0x160] sm:$0xff]
        %v756 = vld [vmem:[%s624 + $0x168] sm:$0xff]
        %v757 = vld [vmem:[%s624 + $0x170] sm:$0xff]
        %v758 = vld [vmem:[%s624 + $0x178] sm:$0xff]
        %v759 = vld [vmem:[%s624 + $0x180] sm:$0xff]
        %v760 = vld [vmem:[%s624 + $0x188] sm:$0xff]
        %v761 = vld [vmem:[%s624 + $0x190] sm:$0xff]
        %v762 = vld [vmem:[%s624 + $0x198] sm:$0xff]
        %v763 = vld [vmem:[%s624 + $0x1a0] sm:$0xff]
        %v764 = vld [vmem:[%s624 + $0x1a8] sm:$0xff]
        %v765 = vld [vmem:[%s624 + $0x1b0] sm:$0xff]
        %v766 = vld [vmem:[%s624 + $0x1b8] sm:$0xff]
        %v767 = vld [vmem:[%s624 + $0x1c0] sm:$0xff]
        %v768 = vld [vmem:[%s624 + $0x1c8] sm:$0xff]
        %v769 = vld [vmem:[%s624 + $0x1d0] sm:$0xff]
        %v770 = vld [vmem:[%s624 + $0x1d8] sm:$0xff]
        %v771 = vld [vmem:[%s624 + $0x1e0] sm:$0xff]
        %v772 = vld [vmem:[%s624 + $0x1e8] sm:$0xff]
        %v773 = vld [vmem:[%s624 + $0x1f0] sm:$0xff]
        %v774 = vld [vmem:[%s624 + $0x1f8] sm:$0xff]
        %v775 = vld [vmem:[%s624 + $0x200] sm:$0xff]
        %v776 = vld [vmem:[%s624 + $0x208] sm:$0xff]
        %v777 = vld [vmem:[%s624 + $0x210] sm:$0xff]
        %v778 = vld [vmem:[%s624 + $0x218] sm:$0xff]
        %v779 = vld [vmem:[%s624 + $0x220] sm:$0xff]
        %v780 = vld [vmem:[%s624 + $0x228] sm:$0xff]
        %v781 = vld [vmem:[%s624 + $0x230] sm:$0xff]
        %v782 = vld [vmem:[%s624 + $0x238] sm:$0xff]
        %v783 = vld [vmem:[%s619 + $0x90] sm:$0xff]
        %v784 = vld [vmem:[%s619 + $0x98] sm:$0xff]
        %v785 = vld [vmem:[%s619 + $0xa0] sm:$0xff]
        %v786 = vpack.c.bf16 %v684, %v681
        %v787 = vpack.c.bf16 %v685, %v682
        %v788 = vpack.c.bf16 %v686, %v683
        %v789 = vpack.c.bf16 %v690, %v687
        %v790 = vpack.c.bf16 %v691, %v688
        %v791 = vpack.c.bf16 %v692, %v689
        %v792 = vpack.c.bf16 %v783, %v693
        %v793 = vpack.c.bf16 %v784, %v694
        %v794 = vpack.c.bf16 %v785, %v695
        %s795 = scalar_lea.vmem %s624, 576
        %v796 = vld [vmem:[%s795] sm:$0xff]
        %v797 = vld [vmem:[%s795 + $0x8] sm:$0xff]
        %v798 = vld [vmem:[%s795 + $0x10] sm:$0xff]
        %v799 = vld [vmem:[%s795 + $0x18] sm:$0xff]
        %v800 = vld [vmem:[%s795 + $0x20] sm:$0xff]
        %v801 = vld [vmem:[%s795 + $0x28] sm:$0xff]
        %v802 = vld [vmem:[%s795 + $0x30] sm:$0xff]
        %v803 = vld [vmem:[%s795 + $0x38] sm:$0xff]
        %v804 = vld [vmem:[%s795 + $0x40] sm:$0xff]
        %v805 = vld [vmem:[%s795 + $0x48] sm:$0xff]
        %v806 = vld [vmem:[%s795 + $0x50] sm:$0xff]
        %v807 = vld [vmem:[%s795 + $0x58] sm:$0xff]
        %v808 = vld [vmem:[%s795 + $0x60] sm:$0xff]
        %v809 = vld [vmem:[%s795 + $0x68] sm:$0xff]
        %v810 = vld [vmem:[%s795 + $0x70] sm:$0xff]
        %v811 = vld [vmem:[%s795 + $0x78] sm:$0xff]
        %v812 = vld [vmem:[%s795 + $0x80] sm:$0xff]
        %v813 = vld [vmem:[%s795 + $0x88] sm:$0xff]
        %v814 = vld [vmem:[%s795 + $0x90] sm:$0xff]
        %v815 = vld [vmem:[%s795 + $0x98] sm:$0xff]
        %v816 = vld [vmem:[%s795 + $0xa0] sm:$0xff]
        %v817 = vld [vmem:[%s795 + $0xa8] sm:$0xff]
        %v818 = vld [vmem:[%s795 + $0xb0] sm:$0xff]
        %v819 = vld [vmem:[%s795 + $0xb8] sm:$0xff]
        %v820 = vld [vmem:[%s795 + $0xc0] sm:$0xff]
        %v821 = vld [vmem:[%s795 + $0xc8] sm:$0xff]
        %v822 = vld [vmem:[%s795 + $0xd0] sm:$0xff]
        %v823 = vld [vmem:[%s795 + $0xd8] sm:$0xff]
        %v824 = vld [vmem:[%s795 + $0xe0] sm:$0xff]
        %v825 = vld [vmem:[%s795 + $0xe8] sm:$0xff]
        %v826 = vld [vmem:[%s795 + $0xf0] sm:$0xff]
        %v827 = vld [vmem:[%s795 + $0xf8] sm:$0xff]
        %v828 = vld [vmem:[%s795 + $0x100] sm:$0xff]
        %v829 = vld [vmem:[%s795 + $0x108] sm:$0xff]
        %v830 = vld [vmem:[%s795 + $0x110] sm:$0xff]
        %v831 = vld [vmem:[%s795 + $0x118] sm:$0xff]
        %v832 = vld [vmem:[%s795 + $0x120] sm:$0xff]
        %v833 = vld [vmem:[%s795 + $0x128] sm:$0xff]
        %v834 = vld [vmem:[%s795 + $0x130] sm:$0xff]
        %v835 = vld [vmem:[%s795 + $0x138] sm:$0xff]
        %v836 = vld [vmem:[%s795 + $0x140] sm:$0xff]
        %v837 = vld [vmem:[%s795 + $0x148] sm:$0xff]
        %v838 = vld [vmem:[%s795 + $0x150] sm:$0xff]
        %v839 = vld [vmem:[%s795 + $0x158] sm:$0xff]
        %v840 = vld [vmem:[%s795 + $0x160] sm:$0xff]
        %v841 = vld [vmem:[%s795 + $0x168] sm:$0xff]
        %v842 = vld [vmem:[%s795 + $0x170] sm:$0xff]
        %v843 = vld [vmem:[%s795 + $0x178] sm:$0xff]
        %v844 = vld [vmem:[%s795 + $0x180] sm:$0xff]
        %v845 = vld [vmem:[%s795 + $0x188] sm:$0xff]
        %v846 = vld [vmem:[%s795 + $0x190] sm:$0xff]
        %v847 = vld [vmem:[%s795 + $0x198] sm:$0xff]
        %v848 = vld [vmem:[%s795 + $0x1a0] sm:$0xff]
        %v849 = vld [vmem:[%s795 + $0x1a8] sm:$0xff]
        %v850 = vld [vmem:[%s795 + $0x1b0] sm:$0xff]
        %v851 = vld [vmem:[%s795 + $0x1b8] sm:$0xff]
        %v852 = vld [vmem:[%s795 + $0x1c0] sm:$0xff]
        %v853 = vld [vmem:[%s795 + $0x1c8] sm:$0xff]
        %v854 = vld [vmem:[%s795 + $0x1d0] sm:$0xff]
        %v855 = vld [vmem:[%s795 + $0x1d8] sm:$0xff]
        %v856 = vld [vmem:[%s795 + $0x1e0] sm:$0xff]
        %v857 = vld [vmem:[%s795 + $0x1e8] sm:$0xff]
        %v858 = vld [vmem:[%s795 + $0x1f0] sm:$0xff]
        %v859 = vld [vmem:[%s795 + $0x1f8] sm:$0xff]
        %v860 = vld [vmem:[%s795 + $0x200] sm:$0xff]
        %v861 = vld [vmem:[%s795 + $0x208] sm:$0xff]
        %v862 = vld [vmem:[%s795 + $0x210] sm:$0xff]
        %v863 = vld [vmem:[%s795 + $0x218] sm:$0xff]
        %v864 = vld [vmem:[%s795 + $0x220] sm:$0xff]
        %v865 = vld [vmem:[%s795 + $0x228] sm:$0xff]
        %v866 = vld [vmem:[%s795 + $0x230] sm:$0xff]
        %v867 = vld [vmem:[%s795 + $0x238] sm:$0xff]
        %v940 = vunpack.c.l.b16 %v796
        %v941 = vunpack.c.h.b16 %v796
        %v942 = vunpack.c.l.b16 %v797
        %v943 = vunpack.c.h.b16 %v797
        %v944 = vunpack.c.l.b16 %v798
        %v945 = vunpack.c.h.b16 %v798
        %v946 = vunpack.c.l.b16 %v799
        %v947 = vunpack.c.h.b16 %v799
        %v948 = vunpack.c.l.b16 %v800
        %v949 = vunpack.c.h.b16 %v800
        %v950 = vunpack.c.l.b16 %v801
        %v951 = vunpack.c.h.b16 %v801
        %v952 = vunpack.c.l.b16 %v802
        %v953 = vunpack.c.h.b16 %v802
        %v954 = vunpack.c.l.b16 %v803
        %v955 = vunpack.c.h.b16 %v803
        %v956 = vunpack.c.l.b16 %v804
        %v957 = vunpack.c.h.b16 %v804
        %v958 = vunpack.c.l.b16 %v805
        %v959 = vunpack.c.h.b16 %v805
        %v960 = vunpack.c.l.b16 %v806
        %v961 = vunpack.c.h.b16 %v806
        %v962 = vunpack.c.l.b16 %v807
        %v963 = vunpack.c.h.b16 %v807
        %v964 = vunpack.c.l.b16 %v808
        %v965 = vunpack.c.h.b16 %v808
        %v966 = vunpack.c.l.b16 %v809
        %v967 = vunpack.c.h.b16 %v809
        %v968 = vunpack.c.l.b16 %v810
        %v969 = vunpack.c.h.b16 %v810
        %v970 = vunpack.c.l.b16 %v811
        %v971 = vunpack.c.h.b16 %v811
        %v972 = vunpack.c.l.b16 %v812
        %v973 = vunpack.c.h.b16 %v812
        %v974 = vunpack.c.l.b16 %v813
        %v975 = vunpack.c.h.b16 %v813
        %v976 = vunpack.c.l.b16 %v814
        %v977 = vunpack.c.h.b16 %v814
        %v978 = vunpack.c.l.b16 %v815
        %v979 = vunpack.c.h.b16 %v815
        %v980 = vunpack.c.l.b16 %v816
        %v981 = vunpack.c.h.b16 %v816
        %v982 = vunpack.c.l.b16 %v817
        %v983 = vunpack.c.h.b16 %v817
        %v984 = vunpack.c.l.b16 %v818
        %v985 = vunpack.c.h.b16 %v818
        %v986 = vunpack.c.l.b16 %v819
        %v987 = vunpack.c.h.b16 %v819
        %v988 = vunpack.c.l.b16 %v820
        %v989 = vunpack.c.h.b16 %v820
        %v990 = vunpack.c.l.b16 %v821
        %v991 = vunpack.c.h.b16 %v821
        %v992 = vunpack.c.l.b16 %v822
        %v993 = vunpack.c.h.b16 %v822
        %v994 = vunpack.c.l.b16 %v823
        %v995 = vunpack.c.h.b16 %v823
        %v996 = vunpack.c.l.b16 %v824
        %v997 = vunpack.c.h.b16 %v824
        %v998 = vunpack.c.l.b16 %v825
        %v999 = vunpack.c.h.b16 %v825
        %v1000 = vunpack.c.l.b16 %v826
        %v1001 = vunpack.c.h.b16 %v826
        %v1002 = vunpack.c.l.b16 %v827
        %v1003 = vunpack.c.h.b16 %v827
        %v1004 = vunpack.c.l.b16 %v828
        %v1005 = vunpack.c.h.b16 %v828
        %v1006 = vunpack.c.l.b16 %v829
        %v1007 = vunpack.c.h.b16 %v829
        %v1008 = vunpack.c.l.b16 %v830
        %v1009 = vunpack.c.h.b16 %v830
        %v1010 = vunpack.c.l.b16 %v831
        %v1011 = vunpack.c.h.b16 %v831
        %v1012 = vunpack.c.l.b16 %v832
        %v1013 = vunpack.c.h.b16 %v832
        %v1014 = vunpack.c.l.b16 %v833
        %v1015 = vunpack.c.h.b16 %v833
        %v1016 = vunpack.c.l.b16 %v834
        %v1017 = vunpack.c.h.b16 %v834
        %v1018 = vunpack.c.l.b16 %v835
        %v1019 = vunpack.c.h.b16 %v835
        %v1020 = vunpack.c.l.b16 %v836
        %v1021 = vunpack.c.h.b16 %v836
        %v1022 = vunpack.c.l.b16 %v837
        %v1023 = vunpack.c.h.b16 %v837
        %v1024 = vunpack.c.l.b16 %v838
        %v1025 = vunpack.c.h.b16 %v838
        %v1026 = vunpack.c.l.b16 %v839
        %v1027 = vunpack.c.h.b16 %v839
        %v1028 = vunpack.c.l.b16 %v840
        %v1029 = vunpack.c.h.b16 %v840
        %v1030 = vunpack.c.l.b16 %v841
        %v1031 = vunpack.c.h.b16 %v841
        %v1032 = vunpack.c.l.b16 %v842
        %v1033 = vunpack.c.h.b16 %v842
        %v1034 = vunpack.c.l.b16 %v843
        %v1035 = vunpack.c.h.b16 %v843
        %v1036 = vunpack.c.l.b16 %v844
        %v1037 = vunpack.c.h.b16 %v844
        %v1038 = vunpack.c.l.b16 %v845
        %v1039 = vunpack.c.h.b16 %v845
        %v1040 = vunpack.c.l.b16 %v846
        %v1041 = vunpack.c.h.b16 %v846
        %v1042 = vunpack.c.l.b16 %v847
        %v1043 = vunpack.c.h.b16 %v847
        %v1044 = vunpack.c.l.b16 %v848
        %v1045 = vunpack.c.h.b16 %v848
        %v1046 = vunpack.c.l.b16 %v849
        %v1047 = vunpack.c.h.b16 %v849
        %v1048 = vunpack.c.l.b16 %v850
        %v1049 = vunpack.c.h.b16 %v850
        %v1050 = vunpack.c.l.b16 %v851
        %v1051 = vunpack.c.h.b16 %v851
        %v1052 = vunpack.c.l.b16 %v852
        %v1053 = vunpack.c.h.b16 %v852
        %v1054 = vunpack.c.l.b16 %v853
        %v1055 = vunpack.c.h.b16 %v853
        %v1056 = vunpack.c.l.b16 %v854
        %v1057 = vunpack.c.h.b16 %v854
        %v1058 = vunpack.c.l.b16 %v855
        %v1059 = vunpack.c.h.b16 %v855
        %v1060 = vunpack.c.l.b16 %v856
        %v1061 = vunpack.c.h.b16 %v856
        %v1062 = vunpack.c.l.b16 %v857
        %v1063 = vunpack.c.h.b16 %v857
        %v1064 = vunpack.c.l.b16 %v858
        %v1065 = vunpack.c.h.b16 %v858
        %v1066 = vunpack.c.l.b16 %v859
        %v1067 = vunpack.c.h.b16 %v859
        %v1068 = vunpack.c.l.b16 %v860
        %v1069 = vunpack.c.h.b16 %v860
        %v1070 = vunpack.c.l.b16 %v861
        %v1071 = vunpack.c.h.b16 %v861
        %v1072 = vunpack.c.l.b16 %v862
        %v1073 = vunpack.c.h.b16 %v862
        %v1074 = vunpack.c.l.b16 %v863
        %v1075 = vunpack.c.h.b16 %v863
        %v1076 = vunpack.c.l.b16 %v864
        %v1077 = vunpack.c.h.b16 %v864
        %v1078 = vunpack.c.l.b16 %v865
        %v1079 = vunpack.c.h.b16 %v865
        %v1080 = vunpack.c.l.b16 %v866
        %v1081 = vunpack.c.h.b16 %v866
        %v1082 = vunpack.c.l.b16 %v867
        %v1083 = vunpack.c.h.b16 %v867
        %v1084 = vpack.c.b16 %v944, %v940
        %v1085 = vpack.c.b16 %v945, %v941
        %v1086 = vpack.c.b16 %v946, %v942
        %v1087 = vpack.c.b16 %v947, %v943
        %v1088 = vpack.c.b16 %v952, %v948
        %v1089 = vpack.c.b16 %v953, %v949
        %v1090 = vpack.c.b16 %v954, %v950
        %v1091 = vpack.c.b16 %v955, %v951
        %v1092 = vpack.c.b16 %v960, %v956
        %v1093 = vpack.c.b16 %v961, %v957
        %v1094 = vpack.c.b16 %v962, %v958
        %v1095 = vpack.c.b16 %v963, %v959
        %v1096 = vpack.c.b16 %v968, %v964
        %v1097 = vpack.c.b16 %v969, %v965
        %v1098 = vpack.c.b16 %v970, %v966
        %v1099 = vpack.c.b16 %v971, %v967
        %v1100 = vpack.c.b16 %v976, %v972
        %v1101 = vpack.c.b16 %v977, %v973
        %v1102 = vpack.c.b16 %v978, %v974
        %v1103 = vpack.c.b16 %v979, %v975
        %v1104 = vpack.c.b16 %v984, %v980
        %v1105 = vpack.c.b16 %v985, %v981
        %v1106 = vpack.c.b16 %v986, %v982
        %v1107 = vpack.c.b16 %v987, %v983
        %v1108 = vpack.c.b16 %v992, %v988
        %v1109 = vpack.c.b16 %v993, %v989
        %v1110 = vpack.c.b16 %v994, %v990
        %v1111 = vpack.c.b16 %v995, %v991
        %v1112 = vpack.c.b16 %v1000, %v996
        %v1113 = vpack.c.b16 %v1001, %v997
        %v1114 = vpack.c.b16 %v1002, %v998
        %v1115 = vpack.c.b16 %v1003, %v999
        %v1116 = vpack.c.b16 %v1008, %v1004
        %v1117 = vpack.c.b16 %v1009, %v1005
        %v1118 = vpack.c.b16 %v1010, %v1006
        %v1119 = vpack.c.b16 %v1011, %v1007
        %v1120 = vpack.c.b16 %v1016, %v1012
        %v1121 = vpack.c.b16 %v1017, %v1013
        %v1122 = vpack.c.b16 %v1018, %v1014
        %v1123 = vpack.c.b16 %v1019, %v1015
        %v1124 = vpack.c.b16 %v1024, %v1020
        %v1125 = vpack.c.b16 %v1025, %v1021
        %v1126 = vpack.c.b16 %v1026, %v1022
        %v1127 = vpack.c.b16 %v1027, %v1023
        %v1128 = vpack.c.b16 %v1032, %v1028
        %v1129 = vpack.c.b16 %v1033, %v1029
        %v1130 = vpack.c.b16 %v1034, %v1030
        %v1131 = vpack.c.b16 %v1035, %v1031
        %v1132 = vpack.c.b16 %v1040, %v1036
        %v1133 = vpack.c.b16 %v1041, %v1037
        %v1134 = vpack.c.b16 %v1042, %v1038
        %v1135 = vpack.c.b16 %v1043, %v1039
        %v1136 = vpack.c.b16 %v1048, %v1044
        %v1137 = vpack.c.b16 %v1049, %v1045
        %v1138 = vpack.c.b16 %v1050, %v1046
        %v1139 = vpack.c.b16 %v1051, %v1047
        %v1140 = vpack.c.b16 %v1056, %v1052
        %v1141 = vpack.c.b16 %v1057, %v1053
        %v1142 = vpack.c.b16 %v1058, %v1054
        %v1143 = vpack.c.b16 %v1059, %v1055
        %v1144 = vpack.c.b16 %v1064, %v1060
        %v1145 = vpack.c.b16 %v1065, %v1061
        %v1146 = vpack.c.b16 %v1066, %v1062
        %v1147 = vpack.c.b16 %v1067, %v1063
        %v1148 = vpack.c.b16 %v1072, %v1068
        %v1149 = vpack.c.b16 %v1073, %v1069
        %v1150 = vpack.c.b16 %v1074, %v1070
        %v1151 = vpack.c.b16 %v1075, %v1071
        %v1152 = vpack.c.b16 %v1080, %v1076
        %v1153 = vpack.c.b16 %v1081, %v1077
        %v1154 = vpack.c.b16 %v1082, %v1078
        %v1155 = vpack.c.b16 %v1083, %v1079
        %vm1228 = vcmask 261120
        %v1230 = vsel %vm1228, %v788, 0
        %v1233 = vsel %vm1228, %v791, 0
        %v1236 = vsel %vm1228, %v794, 0
        %1238 = vmatprep.subr.bf16.mxu0 %v1113
        %1239 = vmatpush1.bf16.msra.mxu0 %v1112
        %1240 = vmatprep.subr.bf16.mxu0 %v1109
        %1241 = vmatpush1.bf16.msra.mxu0 %v1108
        %1242 = vmatprep.subr.bf16.mxu0 %v1105
        %1243 = vmatpush1.bf16.msra.mxu0 %v1104
        %1244 = vmatprep.subr.bf16.mxu0 %v1101
        %1245 = vmatpush1.bf16.msra.mxu0 %v1100
        %1246 = vmatprep.subr.bf16.mxu0 %v1097
        %1247 = vmatpush1.bf16.msra.mxu0 %v1096
        %1248 = vmatprep.subr.bf16.mxu0 %v1093
        %1249 = vmatpush1.bf16.msra.mxu0 %v1092
        %1250 = vmatprep.subr.bf16.mxu0 %v1089
        %1251 = vmatpush1.bf16.msra.mxu0 %v1088
        %1252 = vmatprep.subr.bf16.mxu0 %v1085
        %1253 = vmatpush1.bf16.msra.mxu0 %v1084
        %1254 = vmatprep.subr.bf16.mxu0 %v1145
        %1255 = vmatpush2.bf16.msra.mxu0 %v1144
        %1256 = vmatprep.subr.bf16.mxu0 %v1141
        %1257 = vmatpush2.bf16.msra.mxu0 %v1140
        %1258 = vmatprep.subr.bf16.mxu0 %v1137
        %1259 = vmatpush2.bf16.msra.mxu0 %v1136
        %1260 = vmatprep.subr.bf16.mxu0 %v1133
        %1261 = vmatpush2.bf16.msra.mxu0 %v1132
        %1262 = vmatprep.subr.bf16.mxu0 %v1129
        %1263 = vmatpush2.bf16.msra.mxu0 %v1128
        %1264 = vmatprep.subr.bf16.mxu0 %v1125
        %1265 = vmatpush2.bf16.msra.mxu0 %v1124
        %1266 = vmatprep.subr.bf16.mxu0 %v1121
        %1267 = vmatpush2.bf16.msra.mxu0 %v1120
        %1268 = vmatprep.subr.bf16.mxu0 %v1117
        %1269 = vmatpush2.bf16.msra.mxu0 %v1116
        %1270 = vmatprep.mubr.bf16.mxu0 %v787
        %1271 = vmatmul.mubr.bf16.gmra.mxu0 %v786
        %v1272 = vpop.f32.mrf.mxu0
        %v1273 = vadd.f32 0.0, %v1272
        %v1274 = vpop.f32.mrf.mxu0
        %v1275 = vadd.f32 0.0, %v1274
        %v1276 = vpop.f32.mrf.mxu0
        %v1277 = vadd.f32 0.0, %v1276
        %v1278 = vpop.f32.mrf.mxu0
        %v1279 = vadd.f32 0.0, %v1278
        %1280 = vmatprep.mubr.bf16.mxu0 %v790
        %1281 = vmatmul.mubr.bf16.gmra.mxu0 %v789
        %v1282 = vpop.f32.mrf.mxu0
        %v1283 = vpop.f32.mrf.mxu0
        %v1284 = vpop.f32.mrf.mxu0
        %v1285 = vpop.f32.mrf.mxu0
        %1286 = vmatprep.mubr.bf16.mxu0 %v793
        %1287 = vmatmul.mubr.bf16.gmra.mxu0 %v792
        %v1288 = vpop.f32.mrf.mxu0
        %v1289 = vadd.f32 0.0, %v1288
        %v1290 = vpop.f32.mrf.mxu0
        %v1291 = vadd.f32 0.0, %v1290
        %v1292 = vpop.f32.mrf.mxu0
        %v1293 = vadd.f32 0.0, %v1292
        %v1294 = vpop.f32.mrf.mxu0
        %v1295 = vadd.f32 0.0, %v1294
        %1296 = vdwg.mxu0
        %1297 = vmatprep.subr.bf16.mxu0 0
        %1298 = vmatpush1.bf16.msra.mxu0 0
        %1299 = vmatprep.subr.bf16.mxu0 0
        %1300 = vmatpush1.bf16.msra.mxu0 0
        %1301 = vmatprep.subr.bf16.mxu0 0
        %1302 = vmatpush1.bf16.msra.mxu0 0
        %1303 = vmatprep.subr.bf16.mxu0 0
        %1304 = vmatpush1.bf16.msra.mxu0 0
        %1305 = vmatprep.subr.bf16.mxu0 0
        %1306 = vmatpush1.bf16.msra.mxu0 0
        %1307 = vmatprep.subr.bf16.mxu0 0
        %1308 = vmatpush1.bf16.msra.mxu0 0
        %1309 = vmatprep.subr.bf16.mxu0 %v1153
        %1310 = vmatpush1.bf16.msra.mxu0 %v1152
        %1311 = vmatprep.subr.bf16.mxu0 %v1149
        %1312 = vmatpush1.bf16.msra.mxu0 %v1148
        %1313 = vmatprep.subr.bf16.mxu0 0
        %1314 = vmatpush2.bf16.msra.mxu0 0
        %1315 = vmatprep.subr.bf16.mxu0 0
        %1316 = vmatpush2.bf16.msra.mxu0 0
        %1317 = vmatprep.subr.bf16.mxu0 0
        %1318 = vmatpush2.bf16.msra.mxu0 0
        %1319 = vmatprep.subr.bf16.mxu0 0
        %1320 = vmatpush2.bf16.msra.mxu0 0
        %1321 = vmatprep.subr.bf16.mxu0 0
        %1322 = vmatpush2.bf16.msra.mxu0 0
        %1323 = vmatprep.subr.bf16.mxu0 0
        %1324 = vmatpush2.bf16.msra.mxu0 0
        %1325 = vmatprep.subr.bf16.mxu0 0
        %1326 = vmatpush2.bf16.msra.mxu0 0
        %1327 = vmatprep.subr.bf16.mxu0 0
        %1328 = vmatpush2.bf16.msra.mxu0 0
        %1329 = vmatprep.mubr.bf16.mxu0 0
        %1330 = vmatmul.mubr.bf16.gmra.mxu0 %v1230
        %v1331 = vpop.f32.mrf.mxu0
        %v1332 = vadd.f32 %v1273, %v1331
        %v1333 = vpop.f32.mrf.mxu0
        %v1334 = vadd.f32 %v1275, %v1333
        %v1335 = vpop.f32.mrf.mxu0
        %v1336 = vadd.f32 %v1277, %v1335
        %v1337 = vpop.f32.mrf.mxu0
        %v1338 = vadd.f32 %v1279, %v1337
        %1339 = vmatprep.mubr.bf16.mxu0 0
        %1340 = vmatmul.mubr.bf16.gmra.mxu0 %v1233
        %v1341 = vpop.f32.mrf.mxu0
        %v1342 = vpop.f32.mrf.mxu0
        %v1343 = vpop.f32.mrf.mxu0
        %v1344 = vpop.f32.mrf.mxu0
        %1345 = vmatprep.mubr.bf16.mxu0 0
        %1346 = vmatmul.mubr.bf16.gmra.mxu0 %v1236
        %v1347 = vpop.f32.mrf.mxu0
        %v1348 = vadd.f32 %v1289, %v1347
        %v1349 = vpop.f32.mrf.mxu0
        %v1350 = vadd.f32 %v1291, %v1349
        %v1351 = vpop.f32.mrf.mxu0
        %v1352 = vadd.f32 %v1293, %v1351
        %v1353 = vpop.f32.mrf.mxu0
        %v1354 = vadd.f32 %v1295, %v1353
        %1355 = vdwg.mxu0
        %1356 = vmatprep.subr.bf16.mxu0 %v1115
        %1357 = vmatpush1.bf16.msra.mxu0 %v1114
        %1358 = vmatprep.subr.bf16.mxu0 %v1111
        %1359 = vmatpush1.bf16.msra.mxu0 %v1110
        %1360 = vmatprep.subr.bf16.mxu0 %v1107
        %1361 = vmatpush1.bf16.msra.mxu0 %v1106
        %1362 = vmatprep.subr.bf16.mxu0 %v1103
        %1363 = vmatpush1.bf16.msra.mxu0 %v1102
        %1364 = vmatprep.subr.bf16.mxu0 %v1099
        %1365 = vmatpush1.bf16.msra.mxu0 %v1098
        %1366 = vmatprep.subr.bf16.mxu0 %v1095
        %1367 = vmatpush1.bf16.msra.mxu0 %v1094
        %1368 = vmatprep.subr.bf16.mxu0 %v1091
        %1369 = vmatpush1.bf16.msra.mxu0 %v1090
        %1370 = vmatprep.subr.bf16.mxu0 %v1087
        %1371 = vmatpush1.bf16.msra.mxu0 %v1086
        %1372 = vmatprep.subr.bf16.mxu0 %v1147
        %1373 = vmatpush2.bf16.msra.mxu0 %v1146
        %1374 = vmatprep.subr.bf16.mxu0 %v1143
        %1375 = vmatpush2.bf16.msra.mxu0 %v1142
        %1376 = vmatprep.subr.bf16.mxu0 %v1139
        %1377 = vmatpush2.bf16.msra.mxu0 %v1138
        %1378 = vmatprep.subr.bf16.mxu0 %v1135
        %1379 = vmatpush2.bf16.msra.mxu0 %v1134
        %1380 = vmatprep.subr.bf16.mxu0 %v1131
        %1381 = vmatpush2.bf16.msra.mxu0 %v1130
        %1382 = vmatprep.subr.bf16.mxu0 %v1127
        %1383 = vmatpush2.bf16.msra.mxu0 %v1126
        %1384 = vmatprep.subr.bf16.mxu0 %v1123
        %1385 = vmatpush2.bf16.msra.mxu0 %v1122
        %1386 = vmatprep.subr.bf16.mxu0 %v1119
        %1387 = vmatpush2.bf16.msra.mxu0 %v1118
        %1388 = vmatprep.mubr.bf16.mxu0 %v787
        %1389 = vmatmul.mubr.bf16.gmra.mxu0 %v786
        %v1390 = vpop.f32.mrf.mxu0
        %v1391 = vadd.f32 0.0, %v1390
        %v1392 = vpop.f32.mrf.mxu0
        %v1393 = vadd.f32 0.0, %v1392
        %v1394 = vpop.f32.mrf.mxu0
        %v1395 = vadd.f32 0.0, %v1394
        %v1396 = vpop.f32.mrf.mxu0
        %v1397 = vadd.f32 0.0, %v1396
        %1398 = vmatprep.mubr.bf16.mxu0 %v790
        %1399 = vmatmul.mubr.bf16.gmra.mxu0 %v789
        %v1400 = vpop.f32.mrf.mxu0
        %v1401 = vpop.f32.mrf.mxu0
        %v1402 = vpop.f32.mrf.mxu0
        %v1403 = vpop.f32.mrf.mxu0
        %1404 = vmatprep.mubr.bf16.mxu0 %v793
        %1405 = vmatmul.mubr.bf16.gmra.mxu0 %v792
        %v1406 = vpop.f32.mrf.mxu0
        %v1407 = vadd.f32 0.0, %v1406
        %v1408 = vpop.f32.mrf.mxu0
        %v1409 = vadd.f32 0.0, %v1408
        %v1410 = vpop.f32.mrf.mxu0
        %v1411 = vadd.f32 0.0, %v1410
        %v1412 = vpop.f32.mrf.mxu0
        %v1413 = vadd.f32 0.0, %v1412
        %1414 = vdwg.mxu0
        %1415 = vmatprep.subr.bf16.mxu0 0
        %1416 = vmatpush1.bf16.msra.mxu0 0
        %1417 = vmatprep.subr.bf16.mxu0 0
        %1418 = vmatpush1.bf16.msra.mxu0 0
        %1419 = vmatprep.subr.bf16.mxu0 0
        %1420 = vmatpush1.bf16.msra.mxu0 0
        %1421 = vmatprep.subr.bf16.mxu0 0
        %1422 = vmatpush1.bf16.msra.mxu0 0
        %1423 = vmatprep.subr.bf16.mxu0 0
        %1424 = vmatpush1.bf16.msra.mxu0 0
        %1425 = vmatprep.subr.bf16.mxu0 0
        %1426 = vmatpush1.bf16.msra.mxu0 0
        %1427 = vmatprep.subr.bf16.mxu0 %v1155
        %1428 = vmatpush1.bf16.msra.mxu0 %v1154
        %1429 = vmatprep.subr.bf16.mxu0 %v1151
        %1430 = vmatpush1.bf16.msra.mxu0 %v1150
        %1431 = vmatprep.subr.bf16.mxu0 0
        %1432 = vmatpush2.bf16.msra.mxu0 0
        %1433 = vmatprep.subr.bf16.mxu0 0
        %1434 = vmatpush2.bf16.msra.mxu0 0
        %1435 = vmatprep.subr.bf16.mxu0 0
        %1436 = vmatpush2.bf16.msra.mxu0 0
        %1437 = vmatprep.subr.bf16.mxu0 0
        %1438 = vmatpush2.bf16.msra.mxu0 0
        %1439 = vmatprep.subr.bf16.mxu0 0
        %1440 = vmatpush2.bf16.msra.mxu0 0
        %1441 = vmatprep.subr.bf16.mxu0 0
        %1442 = vmatpush2.bf16.msra.mxu0 0
        %1443 = vmatprep.subr.bf16.mxu0 0
        %1444 = vmatpush2.bf16.msra.mxu0 0
        %1445 = vmatprep.subr.bf16.mxu0 0
        %1446 = vmatpush2.bf16.msra.mxu0 0
        %1447 = vmatprep.mubr.bf16.mxu0 0
        %1448 = vmatmul.mubr.bf16.gmra.mxu0 %v1230
        %v1449 = vpop.f32.mrf.mxu0
        %v1450 = vadd.f32 %v1391, %v1449
        %v1451 = vpop.f32.mrf.mxu0
        %v1452 = vadd.f32 %v1393, %v1451
        %v1453 = vpop.f32.mrf.mxu0
        %v1454 = vadd.f32 %v1395, %v1453
        %v1455 = vpop.f32.mrf.mxu0
        %v1456 = vadd.f32 %v1397, %v1455
        %1457 = vmatprep.mubr.bf16.mxu0 0
        %1458 = vmatmul.mubr.bf16.gmra.mxu0 %v1233
        %v1459 = vpop.f32.mrf.mxu0
        %v1460 = vpop.f32.mrf.mxu0
        %v1461 = vpop.f32.mrf.mxu0
        %v1462 = vpop.f32.mrf.mxu0
        %1463 = vmatprep.mubr.bf16.mxu0 0
        %1464 = vmatmul.mubr.bf16.gmra.mxu0 %v1236
        %v1465 = vpop.f32.mrf.mxu0
        %v1466 = vadd.f32 %v1407, %v1465
        %v1467 = vpop.f32.mrf.mxu0
        %v1468 = vadd.f32 %v1409, %v1467
        %v1469 = vpop.f32.mrf.mxu0
        %v1470 = vadd.f32 %v1411, %v1469
        %v1471 = vpop.f32.mrf.mxu0
        %v1472 = vadd.f32 %v1413, %v1471
        %1473 = vdwg.mxu0
        %vm1474 = vsmask.f32 4352
        %v1476 = vshrl.u32 %v699, 16
        %v1478 = vrot.slane %v1476, 3
        %v1479 = vshll.u32 %v699, 16
        %v1481 = vrot.slane %v1479, 4
        %v1482 = vor.u32 %v1478, %v1481
        %v1484 = vshrl.u32 %v702, 16
        %v1486 = vrot.slane %v1484, 3
        %v1487 = vshll.u32 %v702, 16
        %v1489 = vrot.slane %v1487, 4
        %v1490 = vor.u32 %v1486, %v1489
        %v1491 = vsel %vm1474, %v1482, %v1490
        %v1493 = vshrl.u32 %v700, 16
        %v1495 = vrot.slane %v1493, 3
        %v1496 = vshll.u32 %v700, 16
        %v1498 = vrot.slane %v1496, 4
        %v1499 = vor.u32 %v1495, %v1498
        %v1501 = vshrl.u32 %v703, 16
        %v1503 = vrot.slane %v1501, 3
        %v1504 = vshll.u32 %v703, 16
        %v1506 = vrot.slane %v1504, 4
        %v1507 = vor.u32 %v1503, %v1506
        %v1508 = vsel %vm1474, %v1499, %v1507
        %v1510 = vshrl.u32 %v701, 16
        %v1512 = vrot.slane %v1510, 3
        %v1513 = vshll.u32 %v701, 16
        %v1515 = vrot.slane %v1513, 4
        %v1516 = vor.u32 %v1512, %v1515
        %v1518 = vshrl.u32 %v704, 16
        %v1520 = vrot.slane %v1518, 3
        %v1521 = vshll.u32 %v704, 16
        %v1523 = vrot.slane %v1521, 4
        %v1524 = vor.u32 %v1520, %v1523
        %v1525 = vsel %vm1474, %v1516, %v1524
        %v1527 = vshrl.u32 %v705, 16
        %v1529 = vrot.slane %v1527, 3
        %v1530 = vshll.u32 %v705, 16
        %v1532 = vrot.slane %v1530, 4
        %v1533 = vor.u32 %v1529, %v1532
        %v1534 = vsel %vm1474, %v1490, %v1533
        %v1536 = vshrl.u32 %v706, 16
        %v1538 = vrot.slane %v1536, 3
        %v1539 = vshll.u32 %v706, 16
        %v1541 = vrot.slane %v1539, 4
        %v1542 = vor.u32 %v1538, %v1541
        %v1543 = vsel %vm1474, %v1507, %v1542
        %v1545 = vshrl.u32 %v707, 16
        %v1547 = vrot.slane %v1545, 3
        %v1548 = vshll.u32 %v707, 16
        %v1550 = vrot.slane %v1548, 4
        %v1551 = vor.u32 %v1547, %v1550
        %v1552 = vsel %vm1474, %v1524, %v1551
        %v1554 = vshrl.u32 %v708, 16
        %v1556 = vrot.slane %v1554, 3
        %v1557 = vshll.u32 %v708, 16
        %v1559 = vrot.slane %v1557, 4
        %v1560 = vor.u32 %v1556, %v1559
        %v1561 = vsel %vm1474, %v1533, %v1560
        %v1563 = vshrl.u32 %v709, 16
        %v1565 = vrot.slane %v1563, 3
        %v1566 = vshll.u32 %v709, 16
        %v1568 = vrot.slane %v1566, 4
        %v1569 = vor.u32 %v1565, %v1568
        %v1570 = vsel %vm1474, %v1542, %v1569
        %v1572 = vshrl.u32 %v710, 16
        %v1574 = vrot.slane %v1572, 3
        %v1575 = vshll.u32 %v710, 16
        %v1577 = vrot.slane %v1575, 4
        %v1578 = vor.u32 %v1574, %v1577
        %v1579 = vsel %vm1474, %v1551, %v1578
        %v1658 = vunpack.c.l.b16 %v711
        %v1659 = vunpack.c.h.b16 %v711
        %v1660 = vunpack.c.l.b16 %v712
        %v1661 = vunpack.c.h.b16 %v712
        %v1662 = vunpack.c.l.b16 %v713
        %v1663 = vunpack.c.h.b16 %v713
        %v1664 = vunpack.c.l.b16 %v714
        %v1665 = vunpack.c.h.b16 %v714
        %v1666 = vunpack.c.l.b16 %v715
        %v1667 = vunpack.c.h.b16 %v715
        %v1668 = vunpack.c.l.b16 %v716
        %v1669 = vunpack.c.h.b16 %v716
        %v1670 = vunpack.c.l.b16 %v717
        %v1671 = vunpack.c.h.b16 %v717
        %v1672 = vunpack.c.l.b16 %v718
        %v1673 = vunpack.c.h.b16 %v718
        %v1674 = vunpack.c.l.b16 %v719
        %v1675 = vunpack.c.h.b16 %v719
        %v1676 = vunpack.c.l.b16 %v720
        %v1677 = vunpack.c.h.b16 %v720
        %v1678 = vunpack.c.l.b16 %v721
        %v1679 = vunpack.c.h.b16 %v721
        %v1680 = vunpack.c.l.b16 %v722
        %v1681 = vunpack.c.h.b16 %v722
        %v1682 = vunpack.c.l.b16 %v723
        %v1683 = vunpack.c.h.b16 %v723
        %v1684 = vunpack.c.l.b16 %v724
        %v1685 = vunpack.c.h.b16 %v724
        %v1686 = vunpack.c.l.b16 %v725
        %v1687 = vunpack.c.h.b16 %v725
        %v1688 = vunpack.c.l.b16 %v726
        %v1689 = vunpack.c.h.b16 %v726
        %v1690 = vunpack.c.l.b16 %v727
        %v1691 = vunpack.c.h.b16 %v727
        %v1692 = vunpack.c.l.b16 %v728
        %v1693 = vunpack.c.h.b16 %v728
        %v1694 = vunpack.c.l.b16 %v729
        %v1695 = vunpack.c.h.b16 %v729
        %v1696 = vunpack.c.l.b16 %v730
        %v1697 = vunpack.c.h.b16 %v730
        %v1698 = vunpack.c.l.b16 %v731
        %v1699 = vunpack.c.h.b16 %v731
        %v1700 = vunpack.c.l.b16 %v732
        %v1701 = vunpack.c.h.b16 %v732
        %v1702 = vunpack.c.l.b16 %v733
        %v1703 = vunpack.c.h.b16 %v733
        %v1704 = vunpack.c.l.b16 %v734
        %v1705 = vunpack.c.h.b16 %v734
        %v1706 = vunpack.c.l.b16 %v735
        %v1707 = vunpack.c.h.b16 %v735
        %v1708 = vunpack.c.l.b16 %v736
        %v1709 = vunpack.c.h.b16 %v736
        %v1710 = vunpack.c.l.b16 %v737
        %v1711 = vunpack.c.h.b16 %v737
        %v1712 = vunpack.c.l.b16 %v738
        %v1713 = vunpack.c.h.b16 %v738
        %v1714 = vunpack.c.l.b16 %v739
        %v1715 = vunpack.c.h.b16 %v739
        %v1716 = vunpack.c.l.b16 %v740
        %v1717 = vunpack.c.h.b16 %v740
        %v1718 = vunpack.c.l.b16 %v741
        %v1719 = vunpack.c.h.b16 %v741
        %v1720 = vunpack.c.l.b16 %v742
        %v1721 = vunpack.c.h.b16 %v742
        %v1722 = vunpack.c.l.b16 %v743
        %v1723 = vunpack.c.h.b16 %v743
        %v1724 = vunpack.c.l.b16 %v744
        %v1725 = vunpack.c.h.b16 %v744
        %v1726 = vunpack.c.l.b16 %v745
        %v1727 = vunpack.c.h.b16 %v745
        %v1728 = vunpack.c.l.b16 %v746
        %v1729 = vunpack.c.h.b16 %v746
        %v1730 = vunpack.c.l.b16 %v747
        %v1731 = vunpack.c.h.b16 %v747
        %v1732 = vunpack.c.l.b16 %v748
        %v1733 = vunpack.c.h.b16 %v748
        %v1734 = vunpack.c.l.b16 %v749
        %v1735 = vunpack.c.h.b16 %v749
        %v1736 = vunpack.c.l.b16 %v750
        %v1737 = vunpack.c.h.b16 %v750
        %v1738 = vunpack.c.l.b16 %v751
        %v1739 = vunpack.c.h.b16 %v751
        %v1740 = vunpack.c.l.b16 %v752
        %v1741 = vunpack.c.h.b16 %v752
        %v1742 = vunpack.c.l.b16 %v753
        %v1743 = vunpack.c.h.b16 %v753
        %v1744 = vunpack.c.l.b16 %v754
        %v1745 = vunpack.c.h.b16 %v754
        %v1746 = vunpack.c.l.b16 %v755
        %v1747 = vunpack.c.h.b16 %v755
        %v1748 = vunpack.c.l.b16 %v756
        %v1749 = vunpack.c.h.b16 %v756
        %v1750 = vunpack.c.l.b16 %v757
        %v1751 = vunpack.c.h.b16 %v757
        %v1752 = vunpack.c.l.b16 %v758
        %v1753 = vunpack.c.h.b16 %v758
        %v1754 = vunpack.c.l.b16 %v759
        %v1755 = vunpack.c.h.b16 %v759
        %v1756 = vunpack.c.l.b16 %v760
        %v1757 = vunpack.c.h.b16 %v760
        %v1758 = vunpack.c.l.b16 %v761
        %v1759 = vunpack.c.h.b16 %v761
        %v1760 = vunpack.c.l.b16 %v762
        %v1761 = vunpack.c.h.b16 %v762
        %v1762 = vunpack.c.l.b16 %v763
        %v1763 = vunpack.c.h.b16 %v763
        %v1764 = vunpack.c.l.b16 %v764
        %v1765 = vunpack.c.h.b16 %v764
        %v1766 = vunpack.c.l.b16 %v765
        %v1767 = vunpack.c.h.b16 %v765
        %v1768 = vunpack.c.l.b16 %v766
        %v1769 = vunpack.c.h.b16 %v766
        %v1770 = vunpack.c.l.b16 %v767
        %v1771 = vunpack.c.h.b16 %v767
        %v1772 = vunpack.c.l.b16 %v768
        %v1773 = vunpack.c.h.b16 %v768
        %v1774 = vunpack.c.l.b16 %v769
        %v1775 = vunpack.c.h.b16 %v769
        %v1776 = vunpack.c.l.b16 %v770
        %v1777 = vunpack.c.h.b16 %v770
        %v1778 = vunpack.c.l.b16 %v771
        %v1779 = vunpack.c.h.b16 %v771
        %v1780 = vunpack.c.l.b16 %v772
        %v1781 = vunpack.c.h.b16 %v772
        %v1782 = vunpack.c.l.b16 %v773
        %v1783 = vunpack.c.h.b16 %v773
        %v1784 = vunpack.c.l.b16 %v774
        %v1785 = vunpack.c.h.b16 %v774
        %v1786 = vunpack.c.l.b16 %v775
        %v1787 = vunpack.c.h.b16 %v775
        %v1788 = vunpack.c.l.b16 %v776
        %v1789 = vunpack.c.h.b16 %v776
        %v1790 = vunpack.c.l.b16 %v777
        %v1791 = vunpack.c.h.b16 %v777
        %v1792 = vunpack.c.l.b16 %v778
        %v1793 = vunpack.c.h.b16 %v778
        %v1794 = vunpack.c.l.b16 %v779
        %v1795 = vunpack.c.h.b16 %v779
        %v1796 = vunpack.c.l.b16 %v780
        %v1797 = vunpack.c.h.b16 %v780
        %v1798 = vunpack.c.l.b16 %v781
        %v1799 = vunpack.c.h.b16 %v781
        %v1800 = vunpack.c.l.b16 %v782
        %v1801 = vunpack.c.h.b16 %v782
        %v1802 = vpack.c.b16 %v1662, %v1658
        %v1803 = vpack.c.b16 %v1663, %v1659
        %v1804 = vpack.c.b16 %v1664, %v1660
        %v1805 = vpack.c.b16 %v1665, %v1661
        %v1806 = vpack.c.b16 %v1670, %v1666
        %v1807 = vpack.c.b16 %v1671, %v1667
        %v1808 = vpack.c.b16 %v1672, %v1668
        %v1809 = vpack.c.b16 %v1673, %v1669
        %v1810 = vpack.c.b16 %v1678, %v1674
        %v1811 = vpack.c.b16 %v1679, %v1675
        %v1812 = vpack.c.b16 %v1680, %v1676
        %v1813 = vpack.c.b16 %v1681, %v1677
        %v1814 = vpack.c.b16 %v1686, %v1682
        %v1815 = vpack.c.b16 %v1687, %v1683
        %v1816 = vpack.c.b16 %v1688, %v1684
        %v1817 = vpack.c.b16 %v1689, %v1685
        %v1818 = vpack.c.b16 %v1694, %v1690
        %v1819 = vpack.c.b16 %v1695, %v1691
        %v1820 = vpack.c.b16 %v1696, %v1692
        %v1821 = vpack.c.b16 %v1697, %v1693
        %v1822 = vpack.c.b16 %v1702, %v1698
        %v1823 = vpack.c.b16 %v1703, %v1699
        %v1824 = vpack.c.b16 %v1704, %v1700
        %v1825 = vpack.c.b16 %v1705, %v1701
        %v1826 = vpack.c.b16 %v1710, %v1706
        %v1827 = vpack.c.b16 %v1711, %v1707
        %v1828 = vpack.c.b16 %v1712, %v1708
        %v1829 = vpack.c.b16 %v1713, %v1709
        %v1830 = vpack.c.b16 %v1718, %v1714
        %v1831 = vpack.c.b16 %v1719, %v1715
        %v1832 = vpack.c.b16 %v1720, %v1716
        %v1833 = vpack.c.b16 %v1721, %v1717
        %v1834 = vpack.c.b16 %v1726, %v1722
        %v1835 = vpack.c.b16 %v1727, %v1723
        %v1836 = vpack.c.b16 %v1728, %v1724
        %v1837 = vpack.c.b16 %v1729, %v1725
        %v1838 = vpack.c.b16 %v1734, %v1730
        %v1839 = vpack.c.b16 %v1735, %v1731
        %v1840 = vpack.c.b16 %v1736, %v1732
        %v1841 = vpack.c.b16 %v1737, %v1733
        %v1842 = vpack.c.b16 %v1742, %v1738
        %v1843 = vpack.c.b16 %v1743, %v1739
        %v1844 = vpack.c.b16 %v1744, %v1740
        %v1845 = vpack.c.b16 %v1745, %v1741
        %v1846 = vpack.c.b16 %v1750, %v1746
        %v1847 = vpack.c.b16 %v1751, %v1747
        %v1848 = vpack.c.b16 %v1752, %v1748
        %v1849 = vpack.c.b16 %v1753, %v1749
        %v1850 = vpack.c.b16 %v1758, %v1754
        %v1851 = vpack.c.b16 %v1759, %v1755
        %v1852 = vpack.c.b16 %v1760, %v1756
        %v1853 = vpack.c.b16 %v1761, %v1757
        %v1854 = vpack.c.b16 %v1766, %v1762
        %v1855 = vpack.c.b16 %v1767, %v1763
        %v1856 = vpack.c.b16 %v1768, %v1764
        %v1857 = vpack.c.b16 %v1769, %v1765
        %v1858 = vpack.c.b16 %v1774, %v1770
        %v1859 = vpack.c.b16 %v1775, %v1771
        %v1860 = vpack.c.b16 %v1776, %v1772
        %v1861 = vpack.c.b16 %v1777, %v1773
        %v1862 = vpack.c.b16 %v1782, %v1778
        %v1863 = vpack.c.b16 %v1783, %v1779
        %v1864 = vpack.c.b16 %v1784, %v1780
        %v1865 = vpack.c.b16 %v1785, %v1781
        %v1866 = vpack.c.b16 %v1790, %v1786
        %v1867 = vpack.c.b16 %v1791, %v1787
        %v1868 = vpack.c.b16 %v1792, %v1788
        %v1869 = vpack.c.b16 %v1793, %v1789
        %v1870 = vpack.c.b16 %v1798, %v1794
        %v1871 = vpack.c.b16 %v1799, %v1795
        %v1872 = vpack.c.b16 %v1800, %v1796
        %v1873 = vpack.c.b16 %v1801, %v1797
        %v1947 = vsel %vm1228, %v1525, 0
        %v1950 = vsel %vm1228, %v1552, 0
        %v1953 = vsel %vm1228, %v1579, 0
        %1955 = vmatprep.subr.bf16.mxu0 %v1831
        %1956 = vmatpush1.bf16.msra.mxu0 %v1830
        %1957 = vmatprep.subr.bf16.mxu0 %v1827
        %1958 = vmatpush1.bf16.msra.mxu0 %v1826
        %1959 = vmatprep.subr.bf16.mxu0 %v1823
        %1960 = vmatpush1.bf16.msra.mxu0 %v1822
        %1961 = vmatprep.subr.bf16.mxu0 %v1819
        %1962 = vmatpush1.bf16.msra.mxu0 %v1818
        %1963 = vmatprep.subr.bf16.mxu0 %v1815
        %1964 = vmatpush1.bf16.msra.mxu0 %v1814
        %1965 = vmatprep.subr.bf16.mxu0 %v1811
        %1966 = vmatpush1.bf16.msra.mxu0 %v1810
        %1967 = vmatprep.subr.bf16.mxu0 %v1807
        %1968 = vmatpush1.bf16.msra.mxu0 %v1806
        %1969 = vmatprep.subr.bf16.mxu0 %v1803
        %1970 = vmatpush1.bf16.msra.mxu0 %v1802
        %1971 = vmatprep.subr.bf16.mxu0 %v1863
        %1972 = vmatpush2.bf16.msra.mxu0 %v1862
        %1973 = vmatprep.subr.bf16.mxu0 %v1859
        %1974 = vmatpush2.bf16.msra.mxu0 %v1858
        %1975 = vmatprep.subr.bf16.mxu0 %v1855
        %1976 = vmatpush2.bf16.msra.mxu0 %v1854
        %1977 = vmatprep.subr.bf16.mxu0 %v1851
        %1978 = vmatpush2.bf16.msra.mxu0 %v1850
        %1979 = vmatprep.subr.bf16.mxu0 %v1847
        %1980 = vmatpush2.bf16.msra.mxu0 %v1846
        %1981 = vmatprep.subr.bf16.mxu0 %v1843
        %1982 = vmatpush2.bf16.msra.mxu0 %v1842
        %1983 = vmatprep.subr.bf16.mxu0 %v1839
        %1984 = vmatpush2.bf16.msra.mxu0 %v1838
        %1985 = vmatprep.subr.bf16.mxu0 %v1835
        %1986 = vmatpush2.bf16.msra.mxu0 %v1834
        %1987 = vmatprep.mubr.bf16.mxu0 %v1508
        %1988 = vmatmul.mubr.bf16.gmra.mxu0 %v1491
        %v1989 = vpop.f32.mrf.mxu0
        %v1990 = vadd.f32 %v1332, %v1989
        %v1991 = vpop.f32.mrf.mxu0
        %v1992 = vadd.f32 %v1334, %v1991
        %v1993 = vpop.f32.mrf.mxu0
        %v1994 = vadd.f32 %v1336, %v1993
        %v1995 = vpop.f32.mrf.mxu0
        %v1996 = vadd.f32 %v1338, %v1995
        %1997 = vmatprep.mubr.bf16.mxu0 %v1543
        %1998 = vmatmul.mubr.bf16.gmra.mxu0 %v1534
        %v1999 = vpop.f32.mrf.mxu0
        %v2000 = vpop.f32.mrf.mxu0
        %v2001 = vpop.f32.mrf.mxu0
        %v2002 = vpop.f32.mrf.mxu0
        %2003 = vmatprep.mubr.bf16.mxu0 %v1570
        %2004 = vmatmul.mubr.bf16.gmra.mxu0 %v1561
        %v2005 = vpop.f32.mrf.mxu0
        %v2006 = vadd.f32 %v1348, %v2005
        %v2007 = vpop.f32.mrf.mxu0
        %v2008 = vadd.f32 %v1350, %v2007
        %v2009 = vpop.f32.mrf.mxu0
        %v2010 = vadd.f32 %v1352, %v2009
        %v2011 = vpop.f32.mrf.mxu0
        %v2012 = vadd.f32 %v1354, %v2011
        %2013 = vdwg.mxu0
        %2014 = vmatprep.subr.bf16.mxu0 0
        %2015 = vmatpush1.bf16.msra.mxu0 0
        %2016 = vmatprep.subr.bf16.mxu0 0
        %2017 = vmatpush1.bf16.msra.mxu0 0
        %2018 = vmatprep.subr.bf16.mxu0 0
        %2019 = vmatpush1.bf16.msra.mxu0 0
        %2020 = vmatprep.subr.bf16.mxu0 0
        %2021 = vmatpush1.bf16.msra.mxu0 0
        %2022 = vmatprep.subr.bf16.mxu0 0
        %2023 = vmatpush1.bf16.msra.mxu0 0
        %2024 = vmatprep.subr.bf16.mxu0 0
        %2025 = vmatpush1.bf16.msra.mxu0 0
        %2026 = vmatprep.subr.bf16.mxu0 %v1871
        %2027 = vmatpush1.bf16.msra.mxu0 %v1870
        %2028 = vmatprep.subr.bf16.mxu0 %v1867
        %2029 = vmatpush1.bf16.msra.mxu0 %v1866
        %2030 = vmatprep.subr.bf16.mxu0 0
        %2031 = vmatpush2.bf16.msra.mxu0 0
        %2032 = vmatprep.subr.bf16.mxu0 0
        %2033 = vmatpush2.bf16.msra.mxu0 0
        %2034 = vmatprep.subr.bf16.mxu0 0
        %2035 = vmatpush2.bf16.msra.mxu0 0
        %2036 = vmatprep.subr.bf16.mxu0 0
        %2037 = vmatpush2.bf16.msra.mxu0 0
        %2038 = vmatprep.subr.bf16.mxu0 0
        %2039 = vmatpush2.bf16.msra.mxu0 0
        %2040 = vmatprep.subr.bf16.mxu0 0
        %2041 = vmatpush2.bf16.msra.mxu0 0
        %2042 = vmatprep.subr.bf16.mxu0 0
        %2043 = vmatpush2.bf16.msra.mxu0 0
        %2044 = vmatprep.subr.bf16.mxu0 0
        %2045 = vmatpush2.bf16.msra.mxu0 0
        %2046 = vmatprep.mubr.bf16.mxu0 0
        %2047 = vmatmul.mubr.bf16.gmra.mxu0 %v1947
        %v2048 = vpop.f32.mrf.mxu0
        %v2049 = vadd.f32 %v1990, %v2048
        %v2050 = vpop.f32.mrf.mxu0
        %v2051 = vadd.f32 %v1992, %v2050
        %v2052 = vpop.f32.mrf.mxu0
        %v2053 = vadd.f32 %v1994, %v2052
        %v2054 = vpop.f32.mrf.mxu0
        %v2055 = vadd.f32 %v1996, %v2054
        %2056 = vmatprep.mubr.bf16.mxu0 0
        %2057 = vmatmul.mubr.bf16.gmra.mxu0 %v1950
        %v2058 = vpop.f32.mrf.mxu0
        %v2059 = vpop.f32.mrf.mxu0
        %v2060 = vpop.f32.mrf.mxu0
        %v2061 = vpop.f32.mrf.mxu0
        %2062 = vmatprep.mubr.bf16.mxu0 0
        %2063 = vmatmul.mubr.bf16.gmra.mxu0 %v1953
        %v2064 = vpop.f32.mrf.mxu0
        %v2065 = vadd.f32 %v2006, %v2064
        %v2066 = vpop.f32.mrf.mxu0
        %v2067 = vadd.f32 %v2008, %v2066
        %v2068 = vpop.f32.mrf.mxu0
        %v2069 = vadd.f32 %v2010, %v2068
        %v2070 = vpop.f32.mrf.mxu0
        %v2071 = vadd.f32 %v2012, %v2070
        %2072 = vdwg.mxu0
        %2073 = vmatprep.subr.bf16.mxu0 %v1833
        %2074 = vmatpush1.bf16.msra.mxu0 %v1832
        %2075 = vmatprep.subr.bf16.mxu0 %v1829
        %2076 = vmatpush1.bf16.msra.mxu0 %v1828
        %2077 = vmatprep.subr.bf16.mxu0 %v1825
        %2078 = vmatpush1.bf16.msra.mxu0 %v1824
        %2079 = vmatprep.subr.bf16.mxu0 %v1821
        %2080 = vmatpush1.bf16.msra.mxu0 %v1820
        %2081 = vmatprep.subr.bf16.mxu0 %v1817
        %2082 = vmatpush1.bf16.msra.mxu0 %v1816
        %2083 = vmatprep.subr.bf16.mxu0 %v1813
        %2084 = vmatpush1.bf16.msra.mxu0 %v1812
        %2085 = vmatprep.subr.bf16.mxu0 %v1809
        %2086 = vmatpush1.bf16.msra.mxu0 %v1808
        %2087 = vmatprep.subr.bf16.mxu0 %v1805
        %2088 = vmatpush1.bf16.msra.mxu0 %v1804
        %2089 = vmatprep.subr.bf16.mxu0 %v1865
        %2090 = vmatpush2.bf16.msra.mxu0 %v1864
        %2091 = vmatprep.subr.bf16.mxu0 %v1861
        %2092 = vmatpush2.bf16.msra.mxu0 %v1860
        %2093 = vmatprep.subr.bf16.mxu0 %v1857
        %2094 = vmatpush2.bf16.msra.mxu0 %v1856
        %2095 = vmatprep.subr.bf16.mxu0 %v1853
        %2096 = vmatpush2.bf16.msra.mxu0 %v1852
        %2097 = vmatprep.subr.bf16.mxu0 %v1849
        %2098 = vmatpush2.bf16.msra.mxu0 %v1848
        %2099 = vmatprep.subr.bf16.mxu0 %v1845
        %2100 = vmatpush2.bf16.msra.mxu0 %v1844
        %2101 = vmatprep.subr.bf16.mxu0 %v1841
        %2102 = vmatpush2.bf16.msra.mxu0 %v1840
        %2103 = vmatprep.subr.bf16.mxu0 %v1837
        %2104 = vmatpush2.bf16.msra.mxu0 %v1836
        %2105 = vmatprep.mubr.bf16.mxu0 %v1508
        %2106 = vmatmul.mubr.bf16.gmra.mxu0 %v1491
        %v2107 = vpop.f32.mrf.mxu0
        %v2108 = vadd.f32 %v1450, %v2107
        %v2109 = vpop.f32.mrf.mxu0
        %v2110 = vadd.f32 %v1452, %v2109
        %v2111 = vpop.f32.mrf.mxu0
        %v2112 = vadd.f32 %v1454, %v2111
        %v2113 = vpop.f32.mrf.mxu0
        %v2114 = vadd.f32 %v1456, %v2113
        %2115 = vmatprep.mubr.bf16.mxu0 %v1543
        %2116 = vmatmul.mubr.bf16.gmra.mxu0 %v1534
        %v2117 = vpop.f32.mrf.mxu0
        %v2118 = vpop.f32.mrf.mxu0
        %v2119 = vpop.f32.mrf.mxu0
        %v2120 = vpop.f32.mrf.mxu0
        %2121 = vmatprep.mubr.bf16.mxu0 %v1570
        %2122 = vmatmul.mubr.bf16.gmra.mxu0 %v1561
        %v2123 = vpop.f32.mrf.mxu0
        %v2124 = vadd.f32 %v1466, %v2123
        %v2125 = vpop.f32.mrf.mxu0
        %v2126 = vadd.f32 %v1468, %v2125
        %v2127 = vpop.f32.mrf.mxu0
        %v2128 = vadd.f32 %v1470, %v2127
        %v2129 = vpop.f32.mrf.mxu0
        %v2130 = vadd.f32 %v1472, %v2129
        %2131 = vdwg.mxu0
        %2132 = vmatprep.subr.bf16.mxu0 0
        %2133 = vmatpush1.bf16.msra.mxu0 0
        %2134 = vmatprep.subr.bf16.mxu0 0
        %2135 = vmatpush1.bf16.msra.mxu0 0
        %2136 = vmatprep.subr.bf16.mxu0 0
        %2137 = vmatpush1.bf16.msra.mxu0 0
        %2138 = vmatprep.subr.bf16.mxu0 0
        %2139 = vmatpush1.bf16.msra.mxu0 0
        %2140 = vmatprep.subr.bf16.mxu0 0
        %2141 = vmatpush1.bf16.msra.mxu0 0
        %2142 = vmatprep.subr.bf16.mxu0 0
        %2143 = vmatpush1.bf16.msra.mxu0 0
        %2144 = vmatprep.subr.bf16.mxu0 %v1873
        %2145 = vmatpush1.bf16.msra.mxu0 %v1872
        %2146 = vmatprep.subr.bf16.mxu0 %v1869
        %2147 = vmatpush1.bf16.msra.mxu0 %v1868
        %2148 = vmatprep.subr.bf16.mxu0 0
        %2149 = vmatpush2.bf16.msra.mxu0 0
        %2150 = vmatprep.subr.bf16.mxu0 0
        %2151 = vmatpush2.bf16.msra.mxu0 0
        %2152 = vmatprep.subr.bf16.mxu0 0
        %2153 = vmatpush2.bf16.msra.mxu0 0
        %2154 = vmatprep.subr.bf16.mxu0 0
        %2155 = vmatpush2.bf16.msra.mxu0 0
        %2156 = vmatprep.subr.bf16.mxu0 0
        %2157 = vmatpush2.bf16.msra.mxu0 0
        %2158 = vmatprep.subr.bf16.mxu0 0
        %2159 = vmatpush2.bf16.msra.mxu0 0
        %2160 = vmatprep.subr.bf16.mxu0 0
        %2161 = vmatpush2.bf16.msra.mxu0 0
        %2162 = vmatprep.subr.bf16.mxu0 0
        %2163 = vmatpush2.bf16.msra.mxu0 0
        %2164 = vmatprep.mubr.bf16.mxu0 0
        %2165 = vmatmul.mubr.bf16.gmra.mxu0 %v1947
        %v2166 = vpop.f32.mrf.mxu0
        %v2167 = vadd.f32 %v2108, %v2166
        %v2168 = vpop.f32.mrf.mxu0
        %v2169 = vadd.f32 %v2110, %v2168
        %v2170 = vpop.f32.mrf.mxu0
        %v2171 = vadd.f32 %v2112, %v2170
        %v2172 = vpop.f32.mrf.mxu0
        %v2173 = vadd.f32 %v2114, %v2172
        %2174 = vmatprep.mubr.bf16.mxu0 0
        %2175 = vmatmul.mubr.bf16.gmra.mxu0 %v1950
        %v2176 = vpop.f32.mrf.mxu0
        %v2177 = vpop.f32.mrf.mxu0
        %v2178 = vpop.f32.mrf.mxu0
        %v2179 = vpop.f32.mrf.mxu0
        %2180 = vmatprep.mubr.bf16.mxu0 0
        %2181 = vmatmul.mubr.bf16.gmra.mxu0 %v1953
        %v2182 = vpop.f32.mrf.mxu0
        %v2183 = vadd.f32 %v2124, %v2182
        %v2184 = vpop.f32.mrf.mxu0
        %v2185 = vadd.f32 %v2126, %v2184
        %v2186 = vpop.f32.mrf.mxu0
        %v2187 = vadd.f32 %v2128, %v2186
        %v2188 = vpop.f32.mrf.mxu0
        %v2189 = vadd.f32 %v2130, %v2188
        %2190 = vdwg.mxu0
        %v2191 = vld [vmem:[%s619 + $0x18] sm:$0xfe]
        %v2192 = vld [vmem:[%s619 + $0x20] sm:$0xfe]
        %v2193 = vld [vmem:[%s619 + $0x28] sm:$0xfe]
        %v2194 = vld [vmem:[%s619 + $0x30] sm:$0xff]
        %v2195 = vld [vmem:[%s619 + $0x38] sm:$0xff]
        %v2196 = vld [vmem:[%s619 + $0x40] sm:$0xff]
        %v2197 = vld [vmem:[%s619 + $0x48] sm:$0xff]
        %v2198 = vld [vmem:[%s619 + $0x50] sm:$0xff]
        %v2199 = vld [vmem:[%s619 + $0x58] sm:$0xff]
        %v2200 = vld [vmem:[%s619 + $0x60] sm:$0xff]
        %v2201 = vld [vmem:[%s619 + $0x68] sm:$0xff]
        %v2202 = vld [vmem:[%s619 + $0x70] sm:$0xff]
        %v2203 = vld [vmem:[%s619 + $0x78] sm:$0xff]
        %v2204 = vld [vmem:[%s619 + $0x80] sm:$0xff]
        %v2205 = vld [vmem:[%s619 + $0x88] sm:$0xff]
        %v2206 = vld [vmem:[%s619 + $0x90] sm:$0xff]
        %v2207 = vld [vmem:[%s619 + $0x98] sm:$0xff]
        %v2208 = vld [vmem:[%s619 + $0xa0] sm:$0xff]
        %v2209 = vld [vmem:[%s619 + $0xa8] sm:$0x1]
        %v2210 = vld [vmem:[%s619 + $0xb0] sm:$0x1]
        %v2211 = vld [vmem:[%s619 + $0xb8] sm:$0x1]
        %v2212 = vpack.c.bf16 %v2194, %v2191
        %v2213 = vpack.c.bf16 %v2195, %v2192
        %v2214 = vpack.c.bf16 %v2196, %v2193
        %v2215 = vpack.c.bf16 %v2200, %v2197
        %v2216 = vpack.c.bf16 %v2201, %v2198
        %v2217 = vpack.c.bf16 %v2202, %v2199
        %v2218 = vpack.c.bf16 %v2206, %v2203
        %v2219 = vpack.c.bf16 %v2207, %v2204
        %v2220 = vpack.c.bf16 %v2208, %v2205
        %v2221 = vpack.c.bf16 %v2209, %v2209
        %v2222 = vpack.c.bf16 %v2210, %v2210
        %v2223 = vpack.c.bf16 %v2211, %v2211
        %s2224 = scalar_lea.vmem %s624, 1152
        %v2225 = vld [vmem:[%s2224] sm:$0xff]
        %v2226 = vld [vmem:[%s2224 + $0x8] sm:$0xff]
        %v2227 = vld [vmem:[%s2224 + $0x10] sm:$0xff]
        %v2228 = vld [vmem:[%s2224 + $0x18] sm:$0xff]
        %v2229 = vld [vmem:[%s2224 + $0x20] sm:$0xff]
        %v2230 = vld [vmem:[%s2224 + $0x28] sm:$0xff]
        %v2231 = vld [vmem:[%s2224 + $0x30] sm:$0xff]
        %v2232 = vld [vmem:[%s2224 + $0x38] sm:$0xff]
        %v2233 = vld [vmem:[%s2224 + $0x40] sm:$0xff]
        %v2234 = vld [vmem:[%s2224 + $0x48] sm:$0xff]
        %v2235 = vld [vmem:[%s2224 + $0x50] sm:$0xff]
        %v2236 = vld [vmem:[%s2224 + $0x58] sm:$0xff]
        %v2237 = vld [vmem:[%s2224 + $0x60] sm:$0xff]
        %v2238 = vld [vmem:[%s2224 + $0x68] sm:$0xff]
        %v2239 = vld [vmem:[%s2224 + $0x70] sm:$0xff]
        %v2240 = vld [vmem:[%s2224 + $0x78] sm:$0xff]
        %v2241 = vld [vmem:[%s2224 + $0x80] sm:$0xff]
        %v2242 = vld [vmem:[%s2224 + $0x88] sm:$0xff]
        %v2243 = vld [vmem:[%s2224 + $0x90] sm:$0xff]
        %v2244 = vld [vmem:[%s2224 + $0x98] sm:$0xff]
        %v2245 = vld [vmem:[%s2224 + $0xa0] sm:$0xff]
        %v2246 = vld [vmem:[%s2224 + $0xa8] sm:$0xff]
        %v2247 = vld [vmem:[%s2224 + $0xb0] sm:$0xff]
        %v2248 = vld [vmem:[%s2224 + $0xb8] sm:$0xff]
        %v2249 = vld [vmem:[%s2224 + $0xc0] sm:$0xff]
        %v2250 = vld [vmem:[%s2224 + $0xc8] sm:$0xff]
        %v2251 = vld [vmem:[%s2224 + $0xd0] sm:$0xff]
        %v2252 = vld [vmem:[%s2224 + $0xd8] sm:$0xff]
        %v2253 = vld [vmem:[%s2224 + $0xe0] sm:$0xff]
        %v2254 = vld [vmem:[%s2224 + $0xe8] sm:$0xff]
        %v2255 = vld [vmem:[%s2224 + $0xf0] sm:$0xff]
        %v2256 = vld [vmem:[%s2224 + $0xf8] sm:$0xff]
        %v2257 = vld [vmem:[%s2224 + $0x100] sm:$0xff]
        %v2258 = vld [vmem:[%s2224 + $0x108] sm:$0xff]
        %v2259 = vld [vmem:[%s2224 + $0x110] sm:$0xff]
        %v2260 = vld [vmem:[%s2224 + $0x118] sm:$0xff]
        %v2261 = vld [vmem:[%s2224 + $0x120] sm:$0xff]
        %v2262 = vld [vmem:[%s2224 + $0x128] sm:$0xff]
        %v2263 = vld [vmem:[%s2224 + $0x130] sm:$0xff]
        %v2264 = vld [vmem:[%s2224 + $0x138] sm:$0xff]
        %v2265 = vld [vmem:[%s2224 + $0x140] sm:$0xff]
        %v2266 = vld [vmem:[%s2224 + $0x148] sm:$0xff]
        %v2267 = vld [vmem:[%s2224 + $0x150] sm:$0xff]
        %v2268 = vld [vmem:[%s2224 + $0x158] sm:$0xff]
        %v2269 = vld [vmem:[%s2224 + $0x160] sm:$0xff]
        %v2270 = vld [vmem:[%s2224 + $0x168] sm:$0xff]
        %v2271 = vld [vmem:[%s2224 + $0x170] sm:$0xff]
        %v2272 = vld [vmem:[%s2224 + $0x178] sm:$0xff]
        %v2273 = vld [vmem:[%s2224 + $0x180] sm:$0xff]
        %v2274 = vld [vmem:[%s2224 + $0x188] sm:$0xff]
        %v2275 = vld [vmem:[%s2224 + $0x190] sm:$0xff]
        %v2276 = vld [vmem:[%s2224 + $0x198] sm:$0xff]
        %v2277 = vld [vmem:[%s2224 + $0x1a0] sm:$0xff]
        %v2278 = vld [vmem:[%s2224 + $0x1a8] sm:$0xff]
        %v2279 = vld [vmem:[%s2224 + $0x1b0] sm:$0xff]
        %v2280 = vld [vmem:[%s2224 + $0x1b8] sm:$0xff]
        %v2281 = vld [vmem:[%s2224 + $0x1c0] sm:$0xff]
        %v2282 = vld [vmem:[%s2224 + $0x1c8] sm:$0xff]
        %v2283 = vld [vmem:[%s2224 + $0x1d0] sm:$0xff]
        %v2284 = vld [vmem:[%s2224 + $0x1d8] sm:$0xff]
        %v2285 = vld [vmem:[%s2224 + $0x1e0] sm:$0xff]
        %v2286 = vld [vmem:[%s2224 + $0x1e8] sm:$0xff]
        %v2287 = vld [vmem:[%s2224 + $0x1f0] sm:$0xff]
        %v2288 = vld [vmem:[%s2224 + $0x1f8] sm:$0xff]
        %v2289 = vld [vmem:[%s2224 + $0x200] sm:$0xff]
        %v2290 = vld [vmem:[%s2224 + $0x208] sm:$0xff]
        %v2291 = vld [vmem:[%s2224 + $0x210] sm:$0xff]
        %v2292 = vld [vmem:[%s2224 + $0x218] sm:$0xff]
        %v2293 = vld [vmem:[%s2224 + $0x220] sm:$0xff]
        %v2294 = vld [vmem:[%s2224 + $0x228] sm:$0xff]
        %v2295 = vld [vmem:[%s2224 + $0x230] sm:$0xff]
        %v2296 = vld [vmem:[%s2224 + $0x238] sm:$0xff]
        %vm2297 = vsmask.f32 7424
        %v2299 = vshrl.u32 %v2212, 16
        %v2301 = vshll.u32 %v2212, 16
        %v2303 = vrot.slane %v2301, 1
        %v2304 = vor.u32 %v2299, %v2303
        %v2306 = vshll.u32 %v2215, 16
        %v2308 = vrot.slane %v2306, 1
        %v2309 = vsel %vm2297, %v2304, %v2308
        %v2311 = vshrl.u32 %v2213, 16
        %v2313 = vshll.u32 %v2213, 16
        %v2315 = vrot.slane %v2313, 1
        %v2316 = vor.u32 %v2311, %v2315
        %v2318 = vshll.u32 %v2216, 16
        %v2320 = vrot.slane %v2318, 1
        %v2321 = vsel %vm2297, %v2316, %v2320
        %v2323 = vshrl.u32 %v2214, 16
        %v2325 = vshll.u32 %v2214, 16
        %v2327 = vrot.slane %v2325, 1
        %v2328 = vor.u32 %v2323, %v2327
        %v2330 = vshll.u32 %v2217, 16
        %v2332 = vrot.slane %v2330, 1
        %v2333 = vsel %vm2297, %v2328, %v2332
        %v2334 = vshrl.u32 %v2215, 16
        %v2336 = vor.u32 %v2334, %v2308
        %v2338 = vshll.u32 %v2218, 16
        %v2340 = vrot.slane %v2338, 1
        %v2341 = vsel %vm2297, %v2336, %v2340
        %v2342 = vshrl.u32 %v2216, 16
        %v2344 = vor.u32 %v2342, %v2320
        %v2346 = vshll.u32 %v2219, 16
        %v2348 = vrot.slane %v2346, 1
        %v2349 = vsel %vm2297, %v2344, %v2348
        %v2350 = vshrl.u32 %v2217, 16
        %v2352 = vor.u32 %v2350, %v2332
        %v2354 = vshll.u32 %v2220, 16
        %v2356 = vrot.slane %v2354, 1
        %v2357 = vsel %vm2297, %v2352, %v2356
        %v2358 = vshrl.u32 %v2218, 16
        %v2360 = vor.u32 %v2358, %v2340
        %v2362 = vshll.u32 %v2221, 16
        %v2364 = vrot.slane %v2362, 1
        %v2365 = vsel %vm2297, %v2360, %v2364
        %v2366 = vshrl.u32 %v2219, 16
        %v2368 = vor.u32 %v2366, %v2348
        %v2370 = vshll.u32 %v2222, 16
        %v2372 = vrot.slane %v2370, 1
        %v2373 = vsel %vm2297, %v2368, %v2372
        %v2374 = vshrl.u32 %v2220, 16
        %v2376 = vor.u32 %v2374, %v2356
        %v2378 = vshll.u32 %v2223, 16
        %v2380 = vrot.slane %v2378, 1
        %v2381 = vsel %vm2297, %v2376, %v2380
        %v2460 = vunpack.c.l.b16 %v2225
        %v2461 = vunpack.c.h.b16 %v2225
        %v2462 = vunpack.c.l.b16 %v2226
        %v2463 = vunpack.c.h.b16 %v2226
        %v2464 = vunpack.c.l.b16 %v2227
        %v2465 = vunpack.c.h.b16 %v2227
        %v2466 = vunpack.c.l.b16 %v2228
        %v2467 = vunpack.c.h.b16 %v2228
        %v2468 = vunpack.c.l.b16 %v2229
        %v2469 = vunpack.c.h.b16 %v2229
        %v2470 = vunpack.c.l.b16 %v2230
        %v2471 = vunpack.c.h.b16 %v2230
        %v2472 = vunpack.c.l.b16 %v2231
        %v2473 = vunpack.c.h.b16 %v2231
        %v2474 = vunpack.c.l.b16 %v2232
        %v2475 = vunpack.c.h.b16 %v2232
        %v2476 = vunpack.c.l.b16 %v2233
        %v2477 = vunpack.c.h.b16 %v2233
        %v2478 = vunpack.c.l.b16 %v2234
        %v2479 = vunpack.c.h.b16 %v2234
        %v2480 = vunpack.c.l.b16 %v2235
        %v2481 = vunpack.c.h.b16 %v2235
        %v2482 = vunpack.c.l.b16 %v2236
        %v2483 = vunpack.c.h.b16 %v2236
        %v2484 = vunpack.c.l.b16 %v2237
        %v2485 = vunpack.c.h.b16 %v2237
        %v2486 = vunpack.c.l.b16 %v2238
        %v2487 = vunpack.c.h.b16 %v2238
        %v2488 = vunpack.c.l.b16 %v2239
        %v2489 = vunpack.c.h.b16 %v2239
        %v2490 = vunpack.c.l.b16 %v2240
        %v2491 = vunpack.c.h.b16 %v2240
        %v2492 = vunpack.c.l.b16 %v2241
        %v2493 = vunpack.c.h.b16 %v2241
        %v2494 = vunpack.c.l.b16 %v2242
        %v2495 = vunpack.c.h.b16 %v2242
        %v2496 = vunpack.c.l.b16 %v2243
        %v2497 = vunpack.c.h.b16 %v2243
        %v2498 = vunpack.c.l.b16 %v2244
        %v2499 = vunpack.c.h.b16 %v2244
        %v2500 = vunpack.c.l.b16 %v2245
        %v2501 = vunpack.c.h.b16 %v2245
        %v2502 = vunpack.c.l.b16 %v2246
        %v2503 = vunpack.c.h.b16 %v2246
        %v2504 = vunpack.c.l.b16 %v2247
        %v2505 = vunpack.c.h.b16 %v2247
        %v2506 = vunpack.c.l.b16 %v2248
        %v2507 = vunpack.c.h.b16 %v2248
        %v2508 = vunpack.c.l.b16 %v2249
        %v2509 = vunpack.c.h.b16 %v2249
        %v2510 = vunpack.c.l.b16 %v2250
        %v2511 = vunpack.c.h.b16 %v2250
        %v2512 = vunpack.c.l.b16 %v2251
        %v2513 = vunpack.c.h.b16 %v2251
        %v2514 = vunpack.c.l.b16 %v2252
        %v2515 = vunpack.c.h.b16 %v2252
        %v2516 = vunpack.c.l.b16 %v2253
        %v2517 = vunpack.c.h.b16 %v2253
        %v2518 = vunpack.c.l.b16 %v2254
        %v2519 = vunpack.c.h.b16 %v2254
        %v2520 = vunpack.c.l.b16 %v2255
        %v2521 = vunpack.c.h.b16 %v2255
        %v2522 = vunpack.c.l.b16 %v2256
        %v2523 = vunpack.c.h.b16 %v2256
        %v2524 = vunpack.c.l.b16 %v2257
        %v2525 = vunpack.c.h.b16 %v2257
        %v2526 = vunpack.c.l.b16 %v2258
        %v2527 = vunpack.c.h.b16 %v2258
        %v2528 = vunpack.c.l.b16 %v2259
        %v2529 = vunpack.c.h.b16 %v2259
        %v2530 = vunpack.c.l.b16 %v2260
        %v2531 = vunpack.c.h.b16 %v2260
        %v2532 = vunpack.c.l.b16 %v2261
        %v2533 = vunpack.c.h.b16 %v2261
        %v2534 = vunpack.c.l.b16 %v2262
        %v2535 = vunpack.c.h.b16 %v2262
        %v2536 = vunpack.c.l.b16 %v2263
        %v2537 = vunpack.c.h.b16 %v2263
        %v2538 = vunpack.c.l.b16 %v2264
        %v2539 = vunpack.c.h.b16 %v2264
        %v2540 = vunpack.c.l.b16 %v2265
        %v2541 = vunpack.c.h.b16 %v2265
        %v2542 = vunpack.c.l.b16 %v2266
        %v2543 = vunpack.c.h.b16 %v2266
        %v2544 = vunpack.c.l.b16 %v2267
        %v2545 = vunpack.c.h.b16 %v2267
        %v2546 = vunpack.c.l.b16 %v2268
        %v2547 = vunpack.c.h.b16 %v2268
        %v2548 = vunpack.c.l.b16 %v2269
        %v2549 = vunpack.c.h.b16 %v2269
        %v2550 = vunpack.c.l.b16 %v2270
        %v2551 = vunpack.c.h.b16 %v2270
        %v2552 = vunpack.c.l.b16 %v2271
        %v2553 = vunpack.c.h.b16 %v2271
        %v2554 = vunpack.c.l.b16 %v2272
        %v2555 = vunpack.c.h.b16 %v2272
        %v2556 = vunpack.c.l.b16 %v2273
        %v2557 = vunpack.c.h.b16 %v2273
        %v2558 = vunpack.c.l.b16 %v2274
        %v2559 = vunpack.c.h.b16 %v2274
        %v2560 = vunpack.c.l.b16 %v2275
        %v2561 = vunpack.c.h.b16 %v2275
        %v2562 = vunpack.c.l.b16 %v2276
        %v2563 = vunpack.c.h.b16 %v2276
        %v2564 = vunpack.c.l.b16 %v2277
        %v2565 = vunpack.c.h.b16 %v2277
        %v2566 = vunpack.c.l.b16 %v2278
        %v2567 = vunpack.c.h.b16 %v2278
        %v2568 = vunpack.c.l.b16 %v2279
        %v2569 = vunpack.c.h.b16 %v2279
        %v2570 = vunpack.c.l.b16 %v2280
        %v2571 = vunpack.c.h.b16 %v2280
        %v2572 = vunpack.c.l.b16 %v2281
        %v2573 = vunpack.c.h.b16 %v2281
        %v2574 = vunpack.c.l.b16 %v2282
        %v2575 = vunpack.c.h.b16 %v2282
        %v2576 = vunpack.c.l.b16 %v2283
        %v2577 = vunpack.c.h.b16 %v2283
        %v2578 = vunpack.c.l.b16 %v2284
        %v2579 = vunpack.c.h.b16 %v2284
        %v2580 = vunpack.c.l.b16 %v2285
        %v2581 = vunpack.c.h.b16 %v2285
        %v2582 = vunpack.c.l.b16 %v2286
        %v2583 = vunpack.c.h.b16 %v2286
        %v2584 = vunpack.c.l.b16 %v2287
        %v2585 = vunpack.c.h.b16 %v2287
        %v2586 = vunpack.c.l.b16 %v2288
        %v2587 = vunpack.c.h.b16 %v2288
        %v2588 = vunpack.c.l.b16 %v2289
        %v2589 = vunpack.c.h.b16 %v2289
        %v2590 = vunpack.c.l.b16 %v2290
        %v2591 = vunpack.c.h.b16 %v2290
        %v2592 = vunpack.c.l.b16 %v2291
        %v2593 = vunpack.c.h.b16 %v2291
        %v2594 = vunpack.c.l.b16 %v2292
        %v2595 = vunpack.c.h.b16 %v2292
        %v2596 = vunpack.c.l.b16 %v2293
        %v2597 = vunpack.c.h.b16 %v2293
        %v2598 = vunpack.c.l.b16 %v2294
        %v2599 = vunpack.c.h.b16 %v2294
        %v2600 = vunpack.c.l.b16 %v2295
        %v2601 = vunpack.c.h.b16 %v2295
        %v2602 = vunpack.c.l.b16 %v2296
        %v2603 = vunpack.c.h.b16 %v2296
        %v2604 = vpack.c.b16 %v2464, %v2460
        %v2605 = vpack.c.b16 %v2465, %v2461
        %v2606 = vpack.c.b16 %v2466, %v2462
        %v2607 = vpack.c.b16 %v2467, %v2463
        %v2608 = vpack.c.b16 %v2472, %v2468
        %v2609 = vpack.c.b16 %v2473, %v2469
        %v2610 = vpack.c.b16 %v2474, %v2470
        %v2611 = vpack.c.b16 %v2475, %v2471
        %v2612 = vpack.c.b16 %v2480, %v2476
        %v2613 = vpack.c.b16 %v2481, %v2477
        %v2614 = vpack.c.b16 %v2482, %v2478
        %v2615 = vpack.c.b16 %v2483, %v2479
        %v2616 = vpack.c.b16 %v2488, %v2484
        %v2617 = vpack.c.b16 %v2489, %v2485
        %v2618 = vpack.c.b16 %v2490, %v2486
        %v2619 = vpack.c.b16 %v2491, %v2487
        %v2620 = vpack.c.b16 %v2496, %v2492
        %v2621 = vpack.c.b16 %v2497, %v2493
        %v2622 = vpack.c.b16 %v2498, %v2494
        %v2623 = vpack.c.b16 %v2499, %v2495
        %v2624 = vpack.c.b16 %v2504, %v2500
        %v2625 = vpack.c.b16 %v2505, %v2501
        %v2626 = vpack.c.b16 %v2506, %v2502
        %v2627 = vpack.c.b16 %v2507, %v2503
        %v2628 = vpack.c.b16 %v2512, %v2508
        %v2629 = vpack.c.b16 %v2513, %v2509
        %v2630 = vpack.c.b16 %v2514, %v2510
        %v2631 = vpack.c.b16 %v2515, %v2511
        %v2632 = vpack.c.b16 %v2520, %v2516
        %v2633 = vpack.c.b16 %v2521, %v2517
        %v2634 = vpack.c.b16 %v2522, %v2518
        %v2635 = vpack.c.b16 %v2523, %v2519
        %v2636 = vpack.c.b16 %v2528, %v2524
        %v2637 = vpack.c.b16 %v2529, %v2525
        %v2638 = vpack.c.b16 %v2530, %v2526
        %v2639 = vpack.c.b16 %v2531, %v2527
        %v2640 = vpack.c.b16 %v2536, %v2532
        %v2641 = vpack.c.b16 %v2537, %v2533
        %v2642 = vpack.c.b16 %v2538, %v2534
        %v2643 = vpack.c.b16 %v2539, %v2535
        %v2644 = vpack.c.b16 %v2544, %v2540
        %v2645 = vpack.c.b16 %v2545, %v2541
        %v2646 = vpack.c.b16 %v2546, %v2542
        %v2647 = vpack.c.b16 %v2547, %v2543
        %v2648 = vpack.c.b16 %v2552, %v2548
        %v2649 = vpack.c.b16 %v2553, %v2549
        %v2650 = vpack.c.b16 %v2554, %v2550
        %v2651 = vpack.c.b16 %v2555, %v2551
        %v2652 = vpack.c.b16 %v2560, %v2556
        %v2653 = vpack.c.b16 %v2561, %v2557
        %v2654 = vpack.c.b16 %v2562, %v2558
        %v2655 = vpack.c.b16 %v2563, %v2559
        %v2656 = vpack.c.b16 %v2568, %v2564
        %v2657 = vpack.c.b16 %v2569, %v2565
        %v2658 = vpack.c.b16 %v2570, %v2566
        %v2659 = vpack.c.b16 %v2571, %v2567
        %v2660 = vpack.c.b16 %v2576, %v2572
        %v2661 = vpack.c.b16 %v2577, %v2573
        %v2662 = vpack.c.b16 %v2578, %v2574
        %v2663 = vpack.c.b16 %v2579, %v2575
        %v2664 = vpack.c.b16 %v2584, %v2580
        %v2665 = vpack.c.b16 %v2585, %v2581
        %v2666 = vpack.c.b16 %v2586, %v2582
        %v2667 = vpack.c.b16 %v2587, %v2583
        %v2668 = vpack.c.b16 %v2592, %v2588
        %v2669 = vpack.c.b16 %v2593, %v2589
        %v2670 = vpack.c.b16 %v2594, %v2590
        %v2671 = vpack.c.b16 %v2595, %v2591
        %v2672 = vpack.c.b16 %v2600, %v2596
        %v2673 = vpack.c.b16 %v2601, %v2597
        %v2674 = vpack.c.b16 %v2602, %v2598
        %v2675 = vpack.c.b16 %v2603, %v2599
        %v2749 = vsel %vm1228, %v2333, 0
        %v2752 = vsel %vm1228, %v2357, 0
        %v2755 = vsel %vm1228, %v2381, 0
        %2757 = vmatprep.subr.bf16.mxu0 %v2633
        %2758 = vmatpush1.bf16.msra.mxu0 %v2632
        %2759 = vmatprep.subr.bf16.mxu0 %v2629
        %2760 = vmatpush1.bf16.msra.mxu0 %v2628
        %2761 = vmatprep.subr.bf16.mxu0 %v2625
        %2762 = vmatpush1.bf16.msra.mxu0 %v2624
        %2763 = vmatprep.subr.bf16.mxu0 %v2621
        %2764 = vmatpush1.bf16.msra.mxu0 %v2620
        %2765 = vmatprep.subr.bf16.mxu0 %v2617
        %2766 = vmatpush1.bf16.msra.mxu0 %v2616
        %2767 = vmatprep.subr.bf16.mxu0 %v2613
        %2768 = vmatpush1.bf16.msra.mxu0 %v2612
        %2769 = vmatprep.subr.bf16.mxu0 %v2609
        %2770 = vmatpush1.bf16.msra.mxu0 %v2608
        %2771 = vmatprep.subr.bf16.mxu0 %v2605
        %2772 = vmatpush1.bf16.msra.mxu0 %v2604
        %2773 = vmatprep.subr.bf16.mxu0 %v2665
        %2774 = vmatpush2.bf16.msra.mxu0 %v2664
        %2775 = vmatprep.subr.bf16.mxu0 %v2661
        %2776 = vmatpush2.bf16.msra.mxu0 %v2660
        %2777 = vmatprep.subr.bf16.mxu0 %v2657
        %2778 = vmatpush2.bf16.msra.mxu0 %v2656
        %2779 = vmatprep.subr.bf16.mxu0 %v2653
        %2780 = vmatpush2.bf16.msra.mxu0 %v2652
        %2781 = vmatprep.subr.bf16.mxu0 %v2649
        %2782 = vmatpush2.bf16.msra.mxu0 %v2648
        %2783 = vmatprep.subr.bf16.mxu0 %v2645
        %2784 = vmatpush2.bf16.msra.mxu0 %v2644
        %2785 = vmatprep.subr.bf16.mxu0 %v2641
        %2786 = vmatpush2.bf16.msra.mxu0 %v2640
        %2787 = vmatprep.subr.bf16.mxu0 %v2637
        %2788 = vmatpush2.bf16.msra.mxu0 %v2636
        %2789 = vmatprep.mubr.bf16.mxu0 %v2321
        %2790 = vmatmul.mubr.bf16.gmra.mxu0 %v2309
        %v2791 = vpop.f32.mrf.mxu0
        %v2792 = vadd.f32 0.0, %v2791
        %v2793 = vpop.f32.mrf.mxu0
        %v2794 = vadd.f32 0.0, %v2793
        %v2795 = vpop.f32.mrf.mxu0
        %v2796 = vadd.f32 0.0, %v2795
        %v2797 = vpop.f32.mrf.mxu0
        %v2798 = vadd.f32 0.0, %v2797
        %2799 = vmatprep.mubr.bf16.mxu0 %v2349
        %2800 = vmatmul.mubr.bf16.gmra.mxu0 %v2341
        %v2801 = vpop.f32.mrf.mxu0
        %v2802 = vpop.f32.mrf.mxu0
        %v2803 = vpop.f32.mrf.mxu0
        %v2804 = vpop.f32.mrf.mxu0
        %2805 = vmatprep.mubr.bf16.mxu0 %v2373
        %2806 = vmatmul.mubr.bf16.gmra.mxu0 %v2365
        %v2807 = vpop.f32.mrf.mxu0
        %v2808 = vadd.f32 0.0, %v2807
        %v2809 = vpop.f32.mrf.mxu0
        %v2810 = vadd.f32 0.0, %v2809
        %v2811 = vpop.f32.mrf.mxu0
        %v2812 = vadd.f32 0.0, %v2811
        %v2813 = vpop.f32.mrf.mxu0
        %v2814 = vadd.f32 0.0, %v2813
        %2815 = vdwg.mxu0
        %2816 = vmatprep.subr.bf16.mxu0 0
        %2817 = vmatpush1.bf16.msra.mxu0 0
        %2818 = vmatprep.subr.bf16.mxu0 0
        %2819 = vmatpush1.bf16.msra.mxu0 0
        %2820 = vmatprep.subr.bf16.mxu0 0
        %2821 = vmatpush1.bf16.msra.mxu0 0
        %2822 = vmatprep.subr.bf16.mxu0 0
        %2823 = vmatpush1.bf16.msra.mxu0 0
        %2824 = vmatprep.subr.bf16.mxu0 0
        %2825 = vmatpush1.bf16.msra.mxu0 0
        %2826 = vmatprep.subr.bf16.mxu0 0
        %2827 = vmatpush1.bf16.msra.mxu0 0
        %2828 = vmatprep.subr.bf16.mxu0 %v2673
        %2829 = vmatpush1.bf16.msra.mxu0 %v2672
        %2830 = vmatprep.subr.bf16.mxu0 %v2669
        %2831 = vmatpush1.bf16.msra.mxu0 %v2668
        %2832 = vmatprep.subr.bf16.mxu0 0
        %2833 = vmatpush2.bf16.msra.mxu0 0
        %2834 = vmatprep.subr.bf16.mxu0 0
        %2835 = vmatpush2.bf16.msra.mxu0 0
        %2836 = vmatprep.subr.bf16.mxu0 0
        %2837 = vmatpush2.bf16.msra.mxu0 0
        %2838 = vmatprep.subr.bf16.mxu0 0
        %2839 = vmatpush2.bf16.msra.mxu0 0
        %2840 = vmatprep.subr.bf16.mxu0 0
        %2841 = vmatpush2.bf16.msra.mxu0 0
        %2842 = vmatprep.subr.bf16.mxu0 0
        %2843 = vmatpush2.bf16.msra.mxu0 0
        %2844 = vmatprep.subr.bf16.mxu0 0
        %2845 = vmatpush2.bf16.msra.mxu0 0
        %2846 = vmatprep.subr.bf16.mxu0 0
        %2847 = vmatpush2.bf16.msra.mxu0 0
        %2848 = vmatprep.mubr.bf16.mxu0 0
        %2849 = vmatmul.mubr.bf16.gmra.mxu0 %v2749
        %v2850 = vpop.f32.mrf.mxu0
        %v2851 = vadd.f32 %v2792, %v2850
        %v2852 = vpop.f32.mrf.mxu0
        %v2853 = vadd.f32 %v2794, %v2852
        %v2854 = vpop.f32.mrf.mxu0
        %v2855 = vadd.f32 %v2796, %v2854
        %v2856 = vpop.f32.mrf.mxu0
        %v2857 = vadd.f32 %v2798, %v2856
        %2858 = vmatprep.mubr.bf16.mxu0 0
        %2859 = vmatmul.mubr.bf16.gmra.mxu0 %v2752
        %v2860 = vpop.f32.mrf.mxu0
        %v2861 = vpop.f32.mrf.mxu0
        %v2862 = vpop.f32.mrf.mxu0
        %v2863 = vpop.f32.mrf.mxu0
        %2864 = vmatprep.mubr.bf16.mxu0 0
        %2865 = vmatmul.mubr.bf16.gmra.mxu0 %v2755
        %v2866 = vpop.f32.mrf.mxu0
        %v2867 = vadd.f32 %v2808, %v2866
        %v2868 = vpop.f32.mrf.mxu0
        %v2869 = vadd.f32 %v2810, %v2868
        %v2870 = vpop.f32.mrf.mxu0
        %v2871 = vadd.f32 %v2812, %v2870
        %v2872 = vpop.f32.mrf.mxu0
        %v2873 = vadd.f32 %v2814, %v2872
        %2874 = vdwg.mxu0
        %2875 = vmatprep.subr.bf16.mxu0 %v2635
        %2876 = vmatpush1.bf16.msra.mxu0 %v2634
        %2877 = vmatprep.subr.bf16.mxu0 %v2631
        %2878 = vmatpush1.bf16.msra.mxu0 %v2630
        %2879 = vmatprep.subr.bf16.mxu0 %v2627
        %2880 = vmatpush1.bf16.msra.mxu0 %v2626
        %2881 = vmatprep.subr.bf16.mxu0 %v2623
        %2882 = vmatpush1.bf16.msra.mxu0 %v2622
        %2883 = vmatprep.subr.bf16.mxu0 %v2619
        %2884 = vmatpush1.bf16.msra.mxu0 %v2618
        %2885 = vmatprep.subr.bf16.mxu0 %v2615
        %2886 = vmatpush1.bf16.msra.mxu0 %v2614
        %2887 = vmatprep.subr.bf16.mxu0 %v2611
        %2888 = vmatpush1.bf16.msra.mxu0 %v2610
        %2889 = vmatprep.subr.bf16.mxu0 %v2607
        %2890 = vmatpush1.bf16.msra.mxu0 %v2606
        %2891 = vmatprep.subr.bf16.mxu0 %v2667
        %2892 = vmatpush2.bf16.msra.mxu0 %v2666
        %2893 = vmatprep.subr.bf16.mxu0 %v2663
        %2894 = vmatpush2.bf16.msra.mxu0 %v2662
        %2895 = vmatprep.subr.bf16.mxu0 %v2659
        %2896 = vmatpush2.bf16.msra.mxu0 %v2658
        %2897 = vmatprep.subr.bf16.mxu0 %v2655
        %2898 = vmatpush2.bf16.msra.mxu0 %v2654
        %2899 = vmatprep.subr.bf16.mxu0 %v2651
        %2900 = vmatpush2.bf16.msra.mxu0 %v2650
        %2901 = vmatprep.subr.bf16.mxu0 %v2647
        %2902 = vmatpush2.bf16.msra.mxu0 %v2646
        %2903 = vmatprep.subr.bf16.mxu0 %v2643
        %2904 = vmatpush2.bf16.msra.mxu0 %v2642
        %2905 = vmatprep.subr.bf16.mxu0 %v2639
        %2906 = vmatpush2.bf16.msra.mxu0 %v2638
        %2907 = vmatprep.mubr.bf16.mxu0 %v2321
        %2908 = vmatmul.mubr.bf16.gmra.mxu0 %v2309
        %v2909 = vpop.f32.mrf.mxu0
        %v2910 = vadd.f32 0.0, %v2909
        %v2911 = vpop.f32.mrf.mxu0
        %v2912 = vadd.f32 0.0, %v2911
        %v2913 = vpop.f32.mrf.mxu0
        %v2914 = vadd.f32 0.0, %v2913
        %v2915 = vpop.f32.mrf.mxu0
        %v2916 = vadd.f32 0.0, %v2915
        %2917 = vmatprep.mubr.bf16.mxu0 %v2349
        %2918 = vmatmul.mubr.bf16.gmra.mxu0 %v2341
        %v2919 = vpop.f32.mrf.mxu0
        %v2920 = vpop.f32.mrf.mxu0
        %v2921 = vpop.f32.mrf.mxu0
        %v2922 = vpop.f32.mrf.mxu0
        %2923 = vmatprep.mubr.bf16.mxu0 %v2373
        %2924 = vmatmul.mubr.bf16.gmra.mxu0 %v2365
        %v2925 = vpop.f32.mrf.mxu0
        %v2926 = vadd.f32 0.0, %v2925
        %v2927 = vpop.f32.mrf.mxu0
        %v2928 = vadd.f32 0.0, %v2927
        %v2929 = vpop.f32.mrf.mxu0
        %v2930 = vadd.f32 0.0, %v2929
        %v2931 = vpop.f32.mrf.mxu0
        %v2932 = vadd.f32 0.0, %v2931
        %2933 = vdwg.mxu0
        %2934 = vmatprep.subr.bf16.mxu0 0
        %2935 = vmatpush1.bf16.msra.mxu0 0
        %2936 = vmatprep.subr.bf16.mxu0 0
        %2937 = vmatpush1.bf16.msra.mxu0 0
        %2938 = vmatprep.subr.bf16.mxu0 0
        %2939 = vmatpush1.bf16.msra.mxu0 0
        %2940 = vmatprep.subr.bf16.mxu0 0
        %2941 = vmatpush1.bf16.msra.mxu0 0
        %2942 = vmatprep.subr.bf16.mxu0 0
        %2943 = vmatpush1.bf16.msra.mxu0 0
        %2944 = vmatprep.subr.bf16.mxu0 0
        %2945 = vmatpush1.bf16.msra.mxu0 0
        %2946 = vmatprep.subr.bf16.mxu0 %v2675
        %2947 = vmatpush1.bf16.msra.mxu0 %v2674
        %2948 = vmatprep.subr.bf16.mxu0 %v2671
        %2949 = vmatpush1.bf16.msra.mxu0 %v2670
        %2950 = vmatprep.subr.bf16.mxu0 0
        %2951 = vmatpush2.bf16.msra.mxu0 0
        %2952 = vmatprep.subr.bf16.mxu0 0
        %2953 = vmatpush2.bf16.msra.mxu0 0
        %2954 = vmatprep.subr.bf16.mxu0 0
        %2955 = vmatpush2.bf16.msra.mxu0 0
        %2956 = vmatprep.subr.bf16.mxu0 0
        %2957 = vmatpush2.bf16.msra.mxu0 0
        %2958 = vmatprep.subr.bf16.mxu0 0
        %2959 = vmatpush2.bf16.msra.mxu0 0
        %2960 = vmatprep.subr.bf16.mxu0 0
        %2961 = vmatpush2.bf16.msra.mxu0 0
        %2962 = vmatprep.subr.bf16.mxu0 0
        %2963 = vmatpush2.bf16.msra.mxu0 0
        %2964 = vmatprep.subr.bf16.mxu0 0
        %2965 = vmatpush2.bf16.msra.mxu0 0
        %2966 = vmatprep.mubr.bf16.mxu0 0
        %2967 = vmatmul.mubr.bf16.gmra.mxu0 %v2749
        %v2968 = vpop.f32.mrf.mxu0
        %v2969 = vadd.f32 %v2910, %v2968
        %v2970 = vpop.f32.mrf.mxu0
        %v2971 = vadd.f32 %v2912, %v2970
        %v2972 = vpop.f32.mrf.mxu0
        %v2973 = vadd.f32 %v2914, %v2972
        %v2974 = vpop.f32.mrf.mxu0
        %v2975 = vadd.f32 %v2916, %v2974
        %2976 = vmatprep.mubr.bf16.mxu0 0
        %2977 = vmatmul.mubr.bf16.gmra.mxu0 %v2752
        %v2978 = vpop.f32.mrf.mxu0
        %v2979 = vpop.f32.mrf.mxu0
        %v2980 = vpop.f32.mrf.mxu0
        %v2981 = vpop.f32.mrf.mxu0
        %2982 = vmatprep.mubr.bf16.mxu0 0
        %2983 = vmatmul.mubr.bf16.gmra.mxu0 %v2755
        %v2984 = vpop.f32.mrf.mxu0
        %v2985 = vadd.f32 %v2926, %v2984
        %v2986 = vpop.f32.mrf.mxu0
        %v2987 = vadd.f32 %v2928, %v2986
        %v2988 = vpop.f32.mrf.mxu0
        %v2989 = vadd.f32 %v2930, %v2988
        %v2990 = vpop.f32.mrf.mxu0
        %v2991 = vadd.f32 %v2932, %v2990
        %2992 = vdwg.mxu0
        %v2993 = vadd.f32 %v2049, %v2851
        %v2994 = vadd.f32 %v2051, %v2853
        %v2995 = vadd.f32 %v2167, %v2969
        %v2996 = vadd.f32 %v2169, %v2971
        %v2997 = vadd.f32 %v2053, %v2855
        %v2998 = vadd.f32 %v2055, %v2857
        %v2999 = vadd.f32 %v2171, %v2973
        %v3000 = vadd.f32 %v2173, %v2975
        %v3001 = vadd.f32 %v2065, %v2867
        %v3002 = vadd.f32 %v2067, %v2869
        %v3003 = vadd.f32 %v2183, %v2985
        %v3004 = vadd.f32 %v2185, %v2987
        %v3005 = vadd.f32 %v2069, %v2871
        %v3006 = vadd.f32 %v2071, %v2873
        %v3007 = vadd.f32 %v2187, %v2989
        %v3008 = vadd.f32 %v2189, %v2991
        %v3009 = vld [vmem:[%s619 + $0x18] sm:$0xfc]
        %v3010 = vld [vmem:[%s619 + $0x20] sm:$0xfc]
        %v3011 = vld [vmem:[%s619 + $0x28] sm:$0xfc]
        %v3012 = vld [vmem:[%s619 + $0xa8] sm:$0x3]
        %v3013 = vld [vmem:[%s619 + $0xb0] sm:$0x3]
        %v3014 = vld [vmem:[%s619 + $0xb8] sm:$0x3]
        %v3015 = vpack.c.bf16 %v2194, %v3009
        %v3016 = vpack.c.bf16 %v2195, %v3010
        %v3017 = vpack.c.bf16 %v2196, %v3011
        %v3018 = vpack.c.bf16 %v3012, %v3012
        %v3019 = vpack.c.bf16 %v3013, %v3013
        %v3020 = vpack.c.bf16 %v3014, %v3014
        %s3021 = scalar_lea.vmem %s624, 1728
        %v3022 = vld [vmem:[%s3021] sm:$0xff]
        %v3023 = vld [vmem:[%s3021 + $0x8] sm:$0xff]
        %v3024 = vld [vmem:[%s3021 + $0x10] sm:$0xff]
        %v3025 = vld [vmem:[%s3021 + $0x18] sm:$0xff]
        %v3026 = vld [vmem:[%s3021 + $0x20] sm:$0xff]
        %v3027 = vld [vmem:[%s3021 + $0x28] sm:$0xff]
        %v3028 = vld [vmem:[%s3021 + $0x30] sm:$0xff]
        %v3029 = vld [vmem:[%s3021 + $0x38] sm:$0xff]
        %v3030 = vld [vmem:[%s3021 + $0x40] sm:$0xff]
        %v3031 = vld [vmem:[%s3021 + $0x48] sm:$0xff]
        %v3032 = vld [vmem:[%s3021 + $0x50] sm:$0xff]
        %v3033 = vld [vmem:[%s3021 + $0x58] sm:$0xff]
        %v3034 = vld [vmem:[%s3021 + $0x60] sm:$0xff]
        %v3035 = vld [vmem:[%s3021 + $0x68] sm:$0xff]
        %v3036 = vld [vmem:[%s3021 + $0x70] sm:$0xff]
        %v3037 = vld [vmem:[%s3021 + $0x78] sm:$0xff]
        %v3038 = vld [vmem:[%s3021 + $0x80] sm:$0xff]
        %v3039 = vld [vmem:[%s3021 + $0x88] sm:$0xff]
        %v3040 = vld [vmem:[%s3021 + $0x90] sm:$0xff]
        %v3041 = vld [vmem:[%s3021 + $0x98] sm:$0xff]
        %v3042 = vld [vmem:[%s3021 + $0xa0] sm:$0xff]
        %v3043 = vld [vmem:[%s3021 + $0xa8] sm:$0xff]
        %v3044 = vld [vmem:[%s3021 + $0xb0] sm:$0xff]
        %v3045 = vld [vmem:[%s3021 + $0xb8] sm:$0xff]
        %v3046 = vld [vmem:[%s3021 + $0xc0] sm:$0xff]
        %v3047 = vld [vmem:[%s3021 + $0xc8] sm:$0xff]
        %v3048 = vld [vmem:[%s3021 + $0xd0] sm:$0xff]
        %v3049 = vld [vmem:[%s3021 + $0xd8] sm:$0xff]
        %v3050 = vld [vmem:[%s3021 + $0xe0] sm:$0xff]
        %v3051 = vld [vmem:[%s3021 + $0xe8] sm:$0xff]
        %v3052 = vld [vmem:[%s3021 + $0xf0] sm:$0xff]
        %v3053 = vld [vmem:[%s3021 + $0xf8] sm:$0xff]
        %v3054 = vld [vmem:[%s3021 + $0x100] sm:$0xff]
        %v3055 = vld [vmem:[%s3021 + $0x108] sm:$0xff]
        %v3056 = vld [vmem:[%s3021 + $0x110] sm:$0xff]
        %v3057 = vld [vmem:[%s3021 + $0x118] sm:$0xff]
        %v3058 = vld [vmem:[%s3021 + $0x120] sm:$0xff]
        %v3059 = vld [vmem:[%s3021 + $0x128] sm:$0xff]
        %v3060 = vld [vmem:[%s3021 + $0x130] sm:$0xff]
        %v3061 = vld [vmem:[%s3021 + $0x138] sm:$0xff]
        %v3062 = vld [vmem:[%s3021 + $0x140] sm:$0xff]
        %v3063 = vld [vmem:[%s3021 + $0x148] sm:$0xff]
        %v3064 = vld [vmem:[%s3021 + $0x150] sm:$0xff]
        %v3065 = vld [vmem:[%s3021 + $0x158] sm:$0xff]
        %v3066 = vld [vmem:[%s3021 + $0x160] sm:$0xff]
        %v3067 = vld [vmem:[%s3021 + $0x168] sm:$0xff]
        %v3068 = vld [vmem:[%s3021 + $0x170] sm:$0xff]
        %v3069 = vld [vmem:[%s3021 + $0x178] sm:$0xff]
        %v3070 = vld [vmem:[%s3021 + $0x180] sm:$0xff]
        %v3071 = vld [vmem:[%s3021 + $0x188] sm:$0xff]
        %v3072 = vld [vmem:[%s3021 + $0x190] sm:$0xff]
        %v3073 = vld [vmem:[%s3021 + $0x198] sm:$0xff]
        %v3074 = vld [vmem:[%s3021 + $0x1a0] sm:$0xff]
        %v3075 = vld [vmem:[%s3021 + $0x1a8] sm:$0xff]
        %v3076 = vld [vmem:[%s3021 + $0x1b0] sm:$0xff]
        %v3077 = vld [vmem:[%s3021 + $0x1b8] sm:$0xff]
        %v3078 = vld [vmem:[%s3021 + $0x1c0] sm:$0xff]
        %v3079 = vld [vmem:[%s3021 + $0x1c8] sm:$0xff]
        %v3080 = vld [vmem:[%s3021 + $0x1d0] sm:$0xff]
        %v3081 = vld [vmem:[%s3021 + $0x1d8] sm:$0xff]
        %v3082 = vld [vmem:[%s3021 + $0x1e0] sm:$0xff]
        %v3083 = vld [vmem:[%s3021 + $0x1e8] sm:$0xff]
        %v3084 = vld [vmem:[%s3021 + $0x1f0] sm:$0xff]
        %v3085 = vld [vmem:[%s3021 + $0x1f8] sm:$0xff]
        %v3086 = vld [vmem:[%s3021 + $0x200] sm:$0xff]
        %v3087 = vld [vmem:[%s3021 + $0x208] sm:$0xff]
        %v3088 = vld [vmem:[%s3021 + $0x210] sm:$0xff]
        %v3089 = vld [vmem:[%s3021 + $0x218] sm:$0xff]
        %v3090 = vld [vmem:[%s3021 + $0x220] sm:$0xff]
        %v3091 = vld [vmem:[%s3021 + $0x228] sm:$0xff]
        %v3092 = vld [vmem:[%s3021 + $0x230] sm:$0xff]
        %v3093 = vld [vmem:[%s3021 + $0x238] sm:$0xff]
        %vm3106 = vcmask 1046528
        %v3107 = vrot.slane %v3015, 1
        %v3108 = vrot.slane %v2215, 1
        %v3109 = vsel %vm3106, %v3107, %v3108
        %v3110 = vrot.slane %v3016, 1
        %v3111 = vrot.slane %v2216, 1
        %v3112 = vsel %vm3106, %v3110, %v3111
        %v3113 = vrot.slane %v3017, 1
        %v3114 = vrot.slane %v2217, 1
        %v3115 = vsel %vm3106, %v3113, %v3114
        %v3116 = vrot.slane %v2218, 1
        %v3117 = vsel %vm3106, %v3108, %v3116
        %v3118 = vrot.slane %v2219, 1
        %v3119 = vsel %vm3106, %v3111, %v3118
        %v3120 = vrot.slane %v2220, 1
        %v3121 = vsel %vm3106, %v3114, %v3120
        %v3122 = vrot.slane %v3018, 1
        %v3123 = vsel %vm3106, %v3116, %v3122
        %v3124 = vrot.slane %v3019, 1
        %v3125 = vsel %vm3106, %v3118, %v3124
        %v3126 = vrot.slane %v3020, 1
        %v3127 = vsel %vm3106, %v3120, %v3126
        %v3206 = vunpack.c.l.b16 %v3022
        %v3207 = vunpack.c.h.b16 %v3022
        %v3208 = vunpack.c.l.b16 %v3023
        %v3209 = vunpack.c.h.b16 %v3023
        %v3210 = vunpack.c.l.b16 %v3024
        %v3211 = vunpack.c.h.b16 %v3024
        %v3212 = vunpack.c.l.b16 %v3025
        %v3213 = vunpack.c.h.b16 %v3025
        %v3214 = vunpack.c.l.b16 %v3026
        %v3215 = vunpack.c.h.b16 %v3026
        %v3216 = vunpack.c.l.b16 %v3027
        %v3217 = vunpack.c.h.b16 %v3027
        %v3218 = vunpack.c.l.b16 %v3028
        %v3219 = vunpack.c.h.b16 %v3028
        %v3220 = vunpack.c.l.b16 %v3029
        %v3221 = vunpack.c.h.b16 %v3029
        %v3222 = vunpack.c.l.b16 %v3030
        %v3223 = vunpack.c.h.b16 %v3030
        %v3224 = vunpack.c.l.b16 %v3031
        %v3225 = vunpack.c.h.b16 %v3031
        %v3226 = vunpack.c.l.b16 %v3032
        %v3227 = vunpack.c.h.b16 %v3032
        %v3228 = vunpack.c.l.b16 %v3033
        %v3229 = vunpack.c.h.b16 %v3033
        %v3230 = vunpack.c.l.b16 %v3034
        %v3231 = vunpack.c.h.b16 %v3034
        %v3232 = vunpack.c.l.b16 %v3035
        %v3233 = vunpack.c.h.b16 %v3035
        %v3234 = vunpack.c.l.b16 %v3036
        %v3235 = vunpack.c.h.b16 %v3036
        %v3236 = vunpack.c.l.b16 %v3037
        %v3237 = vunpack.c.h.b16 %v3037
        %v3238 = vunpack.c.l.b16 %v3038
        %v3239 = vunpack.c.h.b16 %v3038
        %v3240 = vunpack.c.l.b16 %v3039
        %v3241 = vunpack.c.h.b16 %v3039
        %v3242 = vunpack.c.l.b16 %v3040
        %v3243 = vunpack.c.h.b16 %v3040
        %v3244 = vunpack.c.l.b16 %v3041
        %v3245 = vunpack.c.h.b16 %v3041
        %v3246 = vunpack.c.l.b16 %v3042
        %v3247 = vunpack.c.h.b16 %v3042
        %v3248 = vunpack.c.l.b16 %v3043
        %v3249 = vunpack.c.h.b16 %v3043
        %v3250 = vunpack.c.l.b16 %v3044
        %v3251 = vunpack.c.h.b16 %v3044
        %v3252 = vunpack.c.l.b16 %v3045
        %v3253 = vunpack.c.h.b16 %v3045
        %v3254 = vunpack.c.l.b16 %v3046
        %v3255 = vunpack.c.h.b16 %v3046
        %v3256 = vunpack.c.l.b16 %v3047
        %v3257 = vunpack.c.h.b16 %v3047
        %v3258 = vunpack.c.l.b16 %v3048
        %v3259 = vunpack.c.h.b16 %v3048
        %v3260 = vunpack.c.l.b16 %v3049
        %v3261 = vunpack.c.h.b16 %v3049
        %v3262 = vunpack.c.l.b16 %v3050
        %v3263 = vunpack.c.h.b16 %v3050
        %v3264 = vunpack.c.l.b16 %v3051
        %v3265 = vunpack.c.h.b16 %v3051
        %v3266 = vunpack.c.l.b16 %v3052
        %v3267 = vunpack.c.h.b16 %v3052
        %v3268 = vunpack.c.l.b16 %v3053
        %v3269 = vunpack.c.h.b16 %v3053
        %v3270 = vunpack.c.l.b16 %v3054
        %v3271 = vunpack.c.h.b16 %v3054
        %v3272 = vunpack.c.l.b16 %v3055
        %v3273 = vunpack.c.h.b16 %v3055
        %v3274 = vunpack.c.l.b16 %v3056
        %v3275 = vunpack.c.h.b16 %v3056
        %v3276 = vunpack.c.l.b16 %v3057
        %v3277 = vunpack.c.h.b16 %v3057
        %v3278 = vunpack.c.l.b16 %v3058
        %v3279 = vunpack.c.h.b16 %v3058
        %v3280 = vunpack.c.l.b16 %v3059
        %v3281 = vunpack.c.h.b16 %v3059
        %v3282 = vunpack.c.l.b16 %v3060
        %v3283 = vunpack.c.h.b16 %v3060
        %v3284 = vunpack.c.l.b16 %v3061
        %v3285 = vunpack.c.h.b16 %v3061
        %v3286 = vunpack.c.l.b16 %v3062
        %v3287 = vunpack.c.h.b16 %v3062
        %v3288 = vunpack.c.l.b16 %v3063
        %v3289 = vunpack.c.h.b16 %v3063
        %v3290 = vunpack.c.l.b16 %v3064
        %v3291 = vunpack.c.h.b16 %v3064
        %v3292 = vunpack.c.l.b16 %v3065
        %v3293 = vunpack.c.h.b16 %v3065
        %v3294 = vunpack.c.l.b16 %v3066
        %v3295 = vunpack.c.h.b16 %v3066
        %v3296 = vunpack.c.l.b16 %v3067
        %v3297 = vunpack.c.h.b16 %v3067
        %v3298 = vunpack.c.l.b16 %v3068
        %v3299 = vunpack.c.h.b16 %v3068
        %v3300 = vunpack.c.l.b16 %v3069
        %v3301 = vunpack.c.h.b16 %v3069
        %v3302 = vunpack.c.l.b16 %v3070
        %v3303 = vunpack.c.h.b16 %v3070
        %v3304 = vunpack.c.l.b16 %v3071
        %v3305 = vunpack.c.h.b16 %v3071
        %v3306 = vunpack.c.l.b16 %v3072
        %v3307 = vunpack.c.h.b16 %v3072
        %v3308 = vunpack.c.l.b16 %v3073
        %v3309 = vunpack.c.h.b16 %v3073
        %v3310 = vunpack.c.l.b16 %v3074
        %v3311 = vunpack.c.h.b16 %v3074
        %v3312 = vunpack.c.l.b16 %v3075
        %v3313 = vunpack.c.h.b16 %v3075
        %v3314 = vunpack.c.l.b16 %v3076
        %v3315 = vunpack.c.h.b16 %v3076
        %v3316 = vunpack.c.l.b16 %v3077
        %v3317 = vunpack.c.h.b16 %v3077
        %v3318 = vunpack.c.l.b16 %v3078
        %v3319 = vunpack.c.h.b16 %v3078
        %v3320 = vunpack.c.l.b16 %v3079
        %v3321 = vunpack.c.h.b16 %v3079
        %v3322 = vunpack.c.l.b16 %v3080
        %v3323 = vunpack.c.h.b16 %v3080
        %v3324 = vunpack.c.l.b16 %v3081
        %v3325 = vunpack.c.h.b16 %v3081
        %v3326 = vunpack.c.l.b16 %v3082
        %v3327 = vunpack.c.h.b16 %v3082
        %v3328 = vunpack.c.l.b16 %v3083
        %v3329 = vunpack.c.h.b16 %v3083
        %v3330 = vunpack.c.l.b16 %v3084
        %v3331 = vunpack.c.h.b16 %v3084
        %v3332 = vunpack.c.l.b16 %v3085
        %v3333 = vunpack.c.h.b16 %v3085
        %v3334 = vunpack.c.l.b16 %v3086
        %v3335 = vunpack.c.h.b16 %v3086
        %v3336 = vunpack.c.l.b16 %v3087
        %v3337 = vunpack.c.h.b16 %v3087
        %v3338 = vunpack.c.l.b16 %v3088
        %v3339 = vunpack.c.h.b16 %v3088
        %v3340 = vunpack.c.l.b16 %v3089
        %v3341 = vunpack.c.h.b16 %v3089
        %v3342 = vunpack.c.l.b16 %v3090
        %v3343 = vunpack.c.h.b16 %v3090
        %v3344 = vunpack.c.l.b16 %v3091
        %v3345 = vunpack.c.h.b16 %v3091
        %v3346 = vunpack.c.l.b16 %v3092
        %v3347 = vunpack.c.h.b16 %v3092
        %v3348 = vunpack.c.l.b16 %v3093
        %v3349 = vunpack.c.h.b16 %v3093
        %v3350 = vpack.c.b16 %v3210, %v3206
        %v3351 = vpack.c.b16 %v3211, %v3207
        %v3352 = vpack.c.b16 %v3212, %v3208
        %v3353 = vpack.c.b16 %v3213, %v3209
        %v3354 = vpack.c.b16 %v3218, %v3214
        %v3355 = vpack.c.b16 %v3219, %v3215
        %v3356 = vpack.c.b16 %v3220, %v3216
        %v3357 = vpack.c.b16 %v3221, %v3217
        %v3358 = vpack.c.b16 %v3226, %v3222
        %v3359 = vpack.c.b16 %v3227, %v3223
        %v3360 = vpack.c.b16 %v3228, %v3224
        %v3361 = vpack.c.b16 %v3229, %v3225
        %v3362 = vpack.c.b16 %v3234, %v3230
        %v3363 = vpack.c.b16 %v3235, %v3231
        %v3364 = vpack.c.b16 %v3236, %v3232
        %v3365 = vpack.c.b16 %v3237, %v3233
        %v3366 = vpack.c.b16 %v3242, %v3238
        %v3367 = vpack.c.b16 %v3243, %v3239
        %v3368 = vpack.c.b16 %v3244, %v3240
        %v3369 = vpack.c.b16 %v3245, %v3241
        %v3370 = vpack.c.b16 %v3250, %v3246
        %v3371 = vpack.c.b16 %v3251, %v3247
        %v3372 = vpack.c.b16 %v3252, %v3248
        %v3373 = vpack.c.b16 %v3253, %v3249
        %v3374 = vpack.c.b16 %v3258, %v3254
        %v3375 = vpack.c.b16 %v3259, %v3255
        %v3376 = vpack.c.b16 %v3260, %v3256
        %v3377 = vpack.c.b16 %v3261, %v3257
        %v3378 = vpack.c.b16 %v3266, %v3262
        %v3379 = vpack.c.b16 %v3267, %v3263
        %v3380 = vpack.c.b16 %v3268, %v3264
        %v3381 = vpack.c.b16 %v3269, %v3265
        %v3382 = vpack.c.b16 %v3274, %v3270
        %v3383 = vpack.c.b16 %v3275, %v3271
        %v3384 = vpack.c.b16 %v3276, %v3272
        %v3385 = vpack.c.b16 %v3277, %v3273
        %v3386 = vpack.c.b16 %v3282, %v3278
        %v3387 = vpack.c.b16 %v3283, %v3279
        %v3388 = vpack.c.b16 %v3284, %v3280
        %v3389 = vpack.c.b16 %v3285, %v3281
        %v3390 = vpack.c.b16 %v3290, %v3286
        %v3391 = vpack.c.b16 %v3291, %v3287
        %v3392 = vpack.c.b16 %v3292, %v3288
        %v3393 = vpack.c.b16 %v3293, %v3289
        %v3394 = vpack.c.b16 %v3298, %v3294
        %v3395 = vpack.c.b16 %v3299, %v3295
        %v3396 = vpack.c.b16 %v3300, %v3296
        %v3397 = vpack.c.b16 %v3301, %v3297
        %v3398 = vpack.c.b16 %v3306, %v3302
        %v3399 = vpack.c.b16 %v3307, %v3303
        %v3400 = vpack.c.b16 %v3308, %v3304
        %v3401 = vpack.c.b16 %v3309, %v3305
        %v3402 = vpack.c.b16 %v3314, %v3310
        %v3403 = vpack.c.b16 %v3315, %v3311
        %v3404 = vpack.c.b16 %v3316, %v3312
        %v3405 = vpack.c.b16 %v3317, %v3313
        %v3406 = vpack.c.b16 %v3322, %v3318
        %v3407 = vpack.c.b16 %v3323, %v3319
        %v3408 = vpack.c.b16 %v3324, %v3320
        %v3409 = vpack.c.b16 %v3325, %v3321
        %v3410 = vpack.c.b16 %v3330, %v3326
        %v3411 = vpack.c.b16 %v3331, %v3327
        %v3412 = vpack.c.b16 %v3332, %v3328
        %v3413 = vpack.c.b16 %v3333, %v3329
        %v3414 = vpack.c.b16 %v3338, %v3334
        %v3415 = vpack.c.b16 %v3339, %v3335
        %v3416 = vpack.c.b16 %v3340, %v3336
        %v3417 = vpack.c.b16 %v3341, %v3337
        %v3418 = vpack.c.b16 %v3346, %v3342
        %v3419 = vpack.c.b16 %v3347, %v3343
        %v3420 = vpack.c.b16 %v3348, %v3344
        %v3421 = vpack.c.b16 %v3349, %v3345
        %v3495 = vsel %vm1228, %v3115, 0
        %v3498 = vsel %vm1228, %v3121, 0
        %v3501 = vsel %vm1228, %v3127, 0
        %3503 = vmatprep.subr.bf16.mxu0 %v3379
        %3504 = vmatpush1.bf16.msra.mxu0 %v3378
        %3505 = vmatprep.subr.bf16.mxu0 %v3375
        %3506 = vmatpush1.bf16.msra.mxu0 %v3374
        %3507 = vmatprep.subr.bf16.mxu0 %v3371
        %3508 = vmatpush1.bf16.msra.mxu0 %v3370
        %3509 = vmatprep.subr.bf16.mxu0 %v3367
        %3510 = vmatpush1.bf16.msra.mxu0 %v3366
        %3511 = vmatprep.subr.bf16.mxu0 %v3363
        %3512 = vmatpush1.bf16.msra.mxu0 %v3362
        %3513 = vmatprep.subr.bf16.mxu0 %v3359
        %3514 = vmatpush1.bf16.msra.mxu0 %v3358
        %3515 = vmatprep.subr.bf16.mxu0 %v3355
        %3516 = vmatpush1.bf16.msra.mxu0 %v3354
        %3517 = vmatprep.subr.bf16.mxu0 %v3351
        %3518 = vmatpush1.bf16.msra.mxu0 %v3350
        %3519 = vmatprep.subr.bf16.mxu0 %v3411
        %3520 = vmatpush2.bf16.msra.mxu0 %v3410
        %3521 = vmatprep.subr.bf16.mxu0 %v3407
        %3522 = vmatpush2.bf16.msra.mxu0 %v3406
        %3523 = vmatprep.subr.bf16.mxu0 %v3403
        %3524 = vmatpush2.bf16.msra.mxu0 %v3402
        %3525 = vmatprep.subr.bf16.mxu0 %v3399
        %3526 = vmatpush2.bf16.msra.mxu0 %v3398
        %3527 = vmatprep.subr.bf16.mxu0 %v3395
        %3528 = vmatpush2.bf16.msra.mxu0 %v3394
        %3529 = vmatprep.subr.bf16.mxu0 %v3391
        %3530 = vmatpush2.bf16.msra.mxu0 %v3390
        %3531 = vmatprep.subr.bf16.mxu0 %v3387
        %3532 = vmatpush2.bf16.msra.mxu0 %v3386
        %3533 = vmatprep.subr.bf16.mxu0 %v3383
        %3534 = vmatpush2.bf16.msra.mxu0 %v3382
        %3535 = vmatprep.mubr.bf16.mxu0 %v3112
        %3536 = vmatmul.mubr.bf16.gmra.mxu0 %v3109
        %v3537 = vpop.f32.mrf.mxu0
        %v3538 = vadd.f32 0.0, %v3537
        %v3539 = vpop.f32.mrf.mxu0
        %v3540 = vadd.f32 0.0, %v3539
        %v3541 = vpop.f32.mrf.mxu0
        %v3542 = vadd.f32 0.0, %v3541
        %v3543 = vpop.f32.mrf.mxu0
        %v3544 = vadd.f32 0.0, %v3543
        %3545 = vmatprep.mubr.bf16.mxu0 %v3119
        %3546 = vmatmul.mubr.bf16.gmra.mxu0 %v3117
        %v3547 = vpop.f32.mrf.mxu0
        %v3548 = vpop.f32.mrf.mxu0
        %v3549 = vpop.f32.mrf.mxu0
        %v3550 = vpop.f32.mrf.mxu0
        %3551 = vmatprep.mubr.bf16.mxu0 %v3125
        %3552 = vmatmul.mubr.bf16.gmra.mxu0 %v3123
        %v3553 = vpop.f32.mrf.mxu0
        %v3554 = vadd.f32 0.0, %v3553
        %v3555 = vpop.f32.mrf.mxu0
        %v3556 = vadd.f32 0.0, %v3555
        %v3557 = vpop.f32.mrf.mxu0
        %v3558 = vadd.f32 0.0, %v3557
        %v3559 = vpop.f32.mrf.mxu0
        %v3560 = vadd.f32 0.0, %v3559
        %3561 = vdwg.mxu0
        %3562 = vmatprep.subr.bf16.mxu0 0
        %3563 = vmatpush1.bf16.msra.mxu0 0
        %3564 = vmatprep.subr.bf16.mxu0 0
        %3565 = vmatpush1.bf16.msra.mxu0 0
        %3566 = vmatprep.subr.bf16.mxu0 0
        %3567 = vmatpush1.bf16.msra.mxu0 0
        %3568 = vmatprep.subr.bf16.mxu0 0
        %3569 = vmatpush1.bf16.msra.mxu0 0
        %3570 = vmatprep.subr.bf16.mxu0 0
        %3571 = vmatpush1.bf16.msra.mxu0 0
        %3572 = vmatprep.subr.bf16.mxu0 0
        %3573 = vmatpush1.bf16.msra.mxu0 0
        %3574 = vmatprep.subr.bf16.mxu0 %v3419
        %3575 = vmatpush1.bf16.msra.mxu0 %v3418
        %3576 = vmatprep.subr.bf16.mxu0 %v3415
        %3577 = vmatpush1.bf16.msra.mxu0 %v3414
        %3578 = vmatprep.subr.bf16.mxu0 0
        %3579 = vmatpush2.bf16.msra.mxu0 0
        %3580 = vmatprep.subr.bf16.mxu0 0
        %3581 = vmatpush2.bf16.msra.mxu0 0
        %3582 = vmatprep.subr.bf16.mxu0 0
        %3583 = vmatpush2.bf16.msra.mxu0 0
        %3584 = vmatprep.subr.bf16.mxu0 0
        %3585 = vmatpush2.bf16.msra.mxu0 0
        %3586 = vmatprep.subr.bf16.mxu0 0
        %3587 = vmatpush2.bf16.msra.mxu0 0
        %3588 = vmatprep.subr.bf16.mxu0 0
        %3589 = vmatpush2.bf16.msra.mxu0 0
        %3590 = vmatprep.subr.bf16.mxu0 0
        %3591 = vmatpush2.bf16.msra.mxu0 0
        %3592 = vmatprep.subr.bf16.mxu0 0
        %3593 = vmatpush2.bf16.msra.mxu0 0
        %3594 = vmatprep.mubr.bf16.mxu0 0
        %3595 = vmatmul.mubr.bf16.gmra.mxu0 %v3495
        %v3596 = vpop.f32.mrf.mxu0
        %v3597 = vadd.f32 %v3538, %v3596
        %v3598 = vpop.f32.mrf.mxu0
        %v3599 = vadd.f32 %v3540, %v3598
        %v3600 = vpop.f32.mrf.mxu0
        %v3601 = vadd.f32 %v3542, %v3600
        %v3602 = vpop.f32.mrf.mxu0
        %v3603 = vadd.f32 %v3544, %v3602
        %3604 = vmatprep.mubr.bf16.mxu0 0
        %3605 = vmatmul.mubr.bf16.gmra.mxu0 %v3498
        %v3606 = vpop.f32.mrf.mxu0
        %v3607 = vpop.f32.mrf.mxu0
        %v3608 = vpop.f32.mrf.mxu0
        %v3609 = vpop.f32.mrf.mxu0
        %3610 = vmatprep.mubr.bf16.mxu0 0
        %3611 = vmatmul.mubr.bf16.gmra.mxu0 %v3501
        %v3612 = vpop.f32.mrf.mxu0
        %v3613 = vadd.f32 %v3554, %v3612
        %v3614 = vpop.f32.mrf.mxu0
        %v3615 = vadd.f32 %v3556, %v3614
        %v3616 = vpop.f32.mrf.mxu0
        %v3617 = vadd.f32 %v3558, %v3616
        %v3618 = vpop.f32.mrf.mxu0
        %v3619 = vadd.f32 %v3560, %v3618
        %3620 = vdwg.mxu0
        %3621 = vmatprep.subr.bf16.mxu0 %v3381
        %3622 = vmatpush1.bf16.msra.mxu0 %v3380
        %3623 = vmatprep.subr.bf16.mxu0 %v3377
        %3624 = vmatpush1.bf16.msra.mxu0 %v3376
        %3625 = vmatprep.subr.bf16.mxu0 %v3373
        %3626 = vmatpush1.bf16.msra.mxu0 %v3372
        %3627 = vmatprep.subr.bf16.mxu0 %v3369
        %3628 = vmatpush1.bf16.msra.mxu0 %v3368
        %3629 = vmatprep.subr.bf16.mxu0 %v3365
        %3630 = vmatpush1.bf16.msra.mxu0 %v3364
        %3631 = vmatprep.subr.bf16.mxu0 %v3361
        %3632 = vmatpush1.bf16.msra.mxu0 %v3360
        %3633 = vmatprep.subr.bf16.mxu0 %v3357
        %3634 = vmatpush1.bf16.msra.mxu0 %v3356
        %3635 = vmatprep.subr.bf16.mxu0 %v3353
        %3636 = vmatpush1.bf16.msra.mxu0 %v3352
        %3637 = vmatprep.subr.bf16.mxu0 %v3413
        %3638 = vmatpush2.bf16.msra.mxu0 %v3412
        %3639 = vmatprep.subr.bf16.mxu0 %v3409
        %3640 = vmatpush2.bf16.msra.mxu0 %v3408
        %3641 = vmatprep.subr.bf16.mxu0 %v3405
        %3642 = vmatpush2.bf16.msra.mxu0 %v3404
        %3643 = vmatprep.subr.bf16.mxu0 %v3401
        %3644 = vmatpush2.bf16.msra.mxu0 %v3400
        %3645 = vmatprep.subr.bf16.mxu0 %v3397
        %3646 = vmatpush2.bf16.msra.mxu0 %v3396
        %3647 = vmatprep.subr.bf16.mxu0 %v3393
        %3648 = vmatpush2.bf16.msra.mxu0 %v3392
        %3649 = vmatprep.subr.bf16.mxu0 %v3389
        %3650 = vmatpush2.bf16.msra.mxu0 %v3388
        %3651 = vmatprep.subr.bf16.mxu0 %v3385
        %3652 = vmatpush2.bf16.msra.mxu0 %v3384
        %3653 = vmatprep.mubr.bf16.mxu0 %v3112
        %3654 = vmatmul.mubr.bf16.gmra.mxu0 %v3109
        %v3655 = vpop.f32.mrf.mxu0
        %v3656 = vadd.f32 0.0, %v3655
        %v3657 = vpop.f32.mrf.mxu0
        %v3658 = vadd.f32 0.0, %v3657
        %v3659 = vpop.f32.mrf.mxu0
        %v3660 = vadd.f32 0.0, %v3659
        %v3661 = vpop.f32.mrf.mxu0
        %v3662 = vadd.f32 0.0, %v3661
        %3663 = vmatprep.mubr.bf16.mxu0 %v3119
        %3664 = vmatmul.mubr.bf16.gmra.mxu0 %v3117
        %v3665 = vpop.f32.mrf.mxu0
        %v3666 = vpop.f32.mrf.mxu0
        %v3667 = vpop.f32.mrf.mxu0
        %v3668 = vpop.f32.mrf.mxu0
        %3669 = vmatprep.mubr.bf16.mxu0 %v3125
        %3670 = vmatmul.mubr.bf16.gmra.mxu0 %v3123
        %v3671 = vpop.f32.mrf.mxu0
        %v3672 = vadd.f32 0.0, %v3671
        %v3673 = vpop.f32.mrf.mxu0
        %v3674 = vadd.f32 0.0, %v3673
        %v3675 = vpop.f32.mrf.mxu0
        %v3676 = vadd.f32 0.0, %v3675
        %v3677 = vpop.f32.mrf.mxu0
        %v3678 = vadd.f32 0.0, %v3677
        %3679 = vdwg.mxu0
        %3680 = vmatprep.subr.bf16.mxu0 0
        %3681 = vmatpush1.bf16.msra.mxu0 0
        %3682 = vmatprep.subr.bf16.mxu0 0
        %3683 = vmatpush1.bf16.msra.mxu0 0
        %3684 = vmatprep.subr.bf16.mxu0 0
        %3685 = vmatpush1.bf16.msra.mxu0 0
        %3686 = vmatprep.subr.bf16.mxu0 0
        %3687 = vmatpush1.bf16.msra.mxu0 0
        %3688 = vmatprep.subr.bf16.mxu0 0
        %3689 = vmatpush1.bf16.msra.mxu0 0
        %3690 = vmatprep.subr.bf16.mxu0 0
        %3691 = vmatpush1.bf16.msra.mxu0 0
        %3692 = vmatprep.subr.bf16.mxu0 %v3421
        %3693 = vmatpush1.bf16.msra.mxu0 %v3420
        %3694 = vmatprep.subr.bf16.mxu0 %v3417
        %3695 = vmatpush1.bf16.msra.mxu0 %v3416
        %3696 = vmatprep.subr.bf16.mxu0 0
        %3697 = vmatpush2.bf16.msra.mxu0 0
        %3698 = vmatprep.subr.bf16.mxu0 0
        %3699 = vmatpush2.bf16.msra.mxu0 0
        %3700 = vmatprep.subr.bf16.mxu0 0
        %3701 = vmatpush2.bf16.msra.mxu0 0
        %3702 = vmatprep.subr.bf16.mxu0 0
        %3703 = vmatpush2.bf16.msra.mxu0 0
        %3704 = vmatprep.subr.bf16.mxu0 0
        %3705 = vmatpush2.bf16.msra.mxu0 0
        %3706 = vmatprep.subr.bf16.mxu0 0
        %3707 = vmatpush2.bf16.msra.mxu0 0
        %3708 = vmatprep.subr.bf16.mxu0 0
        %3709 = vmatpush2.bf16.msra.mxu0 0
        %3710 = vmatprep.subr.bf16.mxu0 0
        %3711 = vmatpush2.bf16.msra.mxu0 0
        %3712 = vmatprep.mubr.bf16.mxu0 0
        %3713 = vmatmul.mubr.bf16.gmra.mxu0 %v3495
        %v3714 = vpop.f32.mrf.mxu0
        %v3715 = vadd.f32 %v3656, %v3714
        %v3716 = vpop.f32.mrf.mxu0
        %v3717 = vadd.f32 %v3658, %v3716
        %v3718 = vpop.f32.mrf.mxu0
        %v3719 = vadd.f32 %v3660, %v3718
        %v3720 = vpop.f32.mrf.mxu0
        %v3721 = vadd.f32 %v3662, %v3720
        %3722 = vmatprep.mubr.bf16.mxu0 0
        %3723 = vmatmul.mubr.bf16.gmra.mxu0 %v3498
        %v3724 = vpop.f32.mrf.mxu0
        %v3725 = vpop.f32.mrf.mxu0
        %v3726 = vpop.f32.mrf.mxu0
        %v3727 = vpop.f32.mrf.mxu0
        %3728 = vmatprep.mubr.bf16.mxu0 0
        %3729 = vmatmul.mubr.bf16.gmra.mxu0 %v3501
        %v3730 = vpop.f32.mrf.mxu0
        %v3731 = vadd.f32 %v3672, %v3730
        %v3732 = vpop.f32.mrf.mxu0
        %v3733 = vadd.f32 %v3674, %v3732
        %v3734 = vpop.f32.mrf.mxu0
        %v3735 = vadd.f32 %v3676, %v3734
        %v3736 = vpop.f32.mrf.mxu0
        %v3737 = vadd.f32 %v3678, %v3736
        %3738 = vdwg.mxu0
        %v3739 = vadd.f32 %v2993, %v3597
        %v3740 = vadd.f32 %v2994, %v3599
        %v3741 = vadd.f32 %v2995, %v3715
        %v3742 = vadd.f32 %v2996, %v3717
        %v3743 = vadd.f32 %v2997, %v3601
        %v3744 = vadd.f32 %v2998, %v3603
        %v3745 = vadd.f32 %v2999, %v3719
        %v3746 = vadd.f32 %v3000, %v3721
        %v3747 = vadd.f32 %v3001, %v3613
        %v3748 = vadd.f32 %v3002, %v3615
        %v3749 = vadd.f32 %v3003, %v3731
        %v3750 = vadd.f32 %v3004, %v3733
        %v3751 = vadd.f32 %v3005, %v3617
        %v3752 = vadd.f32 %v3006, %v3619
        %v3753 = vadd.f32 %v3007, %v3735
        %v3754 = vadd.f32 %v3008, %v3737
        %v3755 = vld [vmem:[%s628] sm:$0xf]
        %v3757 = vlaneseq
        %v3758 = vshrl.u32 %v3757, 7
        %v3759 = vsub.s32 0, %v3758
        %v3760 = vrot.slane %v3755, %v3759
        %v3761 = vlaneseq
        %v3762 = vshrl.u32 %v3761, 7
        %v3763 = vsub.s32 1, %v3762
        %v3764 = vrot.slane %v3755, %v3763
        %v3765 = vlaneseq
        %v3766 = vshrl.u32 %v3765, 7
        %v3767 = vsub.s32 2, %v3766
        %v3768 = vrot.slane %v3755, %v3767
        %v3769 = vlaneseq
        %v3770 = vshrl.u32 %v3769, 7
        %v3771 = vsub.s32 3, %v3770
        %v3772 = vrot.slane %v3755, %v3771
        %v3777 = vmul.f32 %v3739, %v3760
        %v3778 = vmul.f32 %v3740, %v3764
        %v3779 = vmul.f32 %v3741, %v3768
        %v3780 = vmul.f32 %v3742, %v3772
        %v3781 = vmul.f32 %v3743, %v3760
        %v3782 = vmul.f32 %v3744, %v3764
        %v3783 = vmul.f32 %v3745, %v3768
        %v3784 = vmul.f32 %v3746, %v3772
        %v3785 = vmul.f32 %v3747, %v3760
        %v3786 = vmul.f32 %v3748, %v3764
        %v3787 = vmul.f32 %v3749, %v3768
        %v3788 = vmul.f32 %v3750, %v3772
        %v3789 = vmul.f32 %v3751, %v3760
        %v3790 = vmul.f32 %v3752, %v3764
        %v3791 = vmul.f32 %v3753, %v3768
        %v3792 = vmul.f32 %v3754, %v3772
        %v3793 = vld [vmem:[%s632] sm:$0xf]
        %v3795 = vlaneseq
        %v3796 = vshrl.u32 %v3795, 7
        %v3797 = vsub.s32 0, %v3796
        %v3798 = vrot.slane %v3793, %v3797
        %v3799 = vlaneseq
        %v3800 = vshrl.u32 %v3799, 7
        %v3801 = vsub.s32 1, %v3800
        %v3802 = vrot.slane %v3793, %v3801
        %v3803 = vlaneseq
        %v3804 = vshrl.u32 %v3803, 7
        %v3805 = vsub.s32 2, %v3804
        %v3806 = vrot.slane %v3793, %v3805
        %v3807 = vlaneseq
        %v3808 = vshrl.u32 %v3807, 7
        %v3809 = vsub.s32 3, %v3808
        %v3810 = vrot.slane %v3793, %v3809
        %v3815 = vadd.f32 %v3777, %v3798
        %v3816 = vadd.f32 %v3778, %v3802
        %v3817 = vadd.f32 %v3779, %v3806
        %v3818 = vadd.f32 %v3780, %v3810
        %v3819 = vadd.f32 %v3781, %v3798
        %v3820 = vadd.f32 %v3782, %v3802
        %v3821 = vadd.f32 %v3783, %v3806
        %v3822 = vadd.f32 %v3784, %v3810
        %v3823 = vadd.f32 %v3785, %v3798
        %v3824 = vadd.f32 %v3786, %v3802
        %v3825 = vadd.f32 %v3787, %v3806
        %v3826 = vadd.f32 %v3788, %v3810
        %v3827 = vadd.f32 %v3789, %v3798
        %v3828 = vadd.f32 %v3790, %v3802
        %v3829 = vadd.f32 %v3791, %v3806
        %v3830 = vadd.f32 %v3792, %v3810
        %v3831 = vmax.f32 %v3815, 0.0
        %v3832 = vmax.f32 %v3816, 0.0
        %v3833 = vmax.f32 %v3817, 0.0
        %v3834 = vmax.f32 %v3818, 0.0
        %v3835 = vmax.f32 %v3819, 0.0
        %v3836 = vmax.f32 %v3820, 0.0
        %v3837 = vmax.f32 %v3821, 0.0
        %v3838 = vmax.f32 %v3822, 0.0
        %v3839 = vmax.f32 %v3823, 0.0
        %v3840 = vmax.f32 %v3824, 0.0
        %v3841 = vmax.f32 %v3825, 0.0
        %v3842 = vmax.f32 %v3826, 0.0
        %v3843 = vmax.f32 %v3827, 0.0
        %v3844 = vmax.f32 %v3828, 0.0
        %v3845 = vmax.f32 %v3829, 0.0
        %v3846 = vmax.f32 %v3830, 0.0
        %v3847 = vmax.f32 %v3831, %v3832
        %v3848 = vmax.f32 %v3835, %v3836
        %v3849 = vmax.f32 %v3839, %v3840
        %v3850 = vmax.f32 %v3843, %v3844
        %v3851 = vmax.f32 %v3833, %v3834
        %v3852 = vmax.f32 %v3837, %v3838
        %v3853 = vmax.f32 %v3841, %v3842
        %v3854 = vmax.f32 %v3845, %v3846
        %v3855 = vmax.f32 %v3847, %v3851
        %v3856 = vmax.f32 %v3848, %v3852
        %v3857 = vmax.f32 %v3849, %v3853
        %v3858 = vmax.f32 %v3850, %v3854
        %3859 = vst [vmem:[#allocation2 + $0x8] sm:$0xff] %v3855
        %3860 = vst [vmem:[#allocation2 + $0x10] sm:$0xff] %v3856
        %3861 = vst [vmem:[#allocation2 + $0x28] sm:$0xff] %v3857
        %3862 = vst [vmem:[#allocation2 + $0x30] sm:$0xff] %v3858
        %v3863 = vld [vmem:[#allocation2 + $0x6] sm:$0xff]
        %v3864 = vld [vmem:[#allocation2 + $0xe] sm:$0xff]
        %v3865 = vld [vmem:[#allocation2 + $0x16] sm:$0xff]
        %v3866 = vld [vmem:[#allocation2 + $0x1e] sm:$0xff]
        %v3867 = vld [vmem:[#allocation2 + $0x26] sm:$0xff]
        %v3868 = vld [vmem:[#allocation2 + $0x2e] sm:$0xff]
        %v3869 = vpack.c.bf16 %v3864, %v3863
        %v3870 = vpack.c.bf16 %v3866, %v3865
        %v3871 = vpack.c.bf16 %v3868, %v3867
        %v3872 = vld [vmem:[%s523] sm:$0xff]
        %v3873 = vld [vmem:[%s523 + $0x8] sm:$0xff]
        %v3874 = vld [vmem:[%s523 + $0x10] sm:$0xff]
        %v3875 = vld [vmem:[%s523 + $0x18] sm:$0xff]
        %v3876 = vld [vmem:[%s523 + $0x20] sm:$0xff]
        %v3877 = vld [vmem:[%s523 + $0x28] sm:$0xff]
        %v3878 = vld [vmem:[%s523 + $0x30] sm:$0xff]
        %v3879 = vld [vmem:[%s523 + $0x38] sm:$0xff]
        %v3880 = vld [vmem:[%s523 + $0x40] sm:$0xff]
        %v3881 = vld [vmem:[%s523 + $0x48] sm:$0xff]
        %v3882 = vld [vmem:[%s523 + $0x50] sm:$0xff]
        %v3883 = vld [vmem:[%s523 + $0x58] sm:$0xff]
        %v3884 = vld [vmem:[%s523 + $0x60] sm:$0xff]
        %v3885 = vld [vmem:[%s523 + $0x68] sm:$0xff]
        %v3886 = vld [vmem:[%s523 + $0x70] sm:$0xff]
        %v3887 = vld [vmem:[%s523 + $0x78] sm:$0xff]
        %v3888 = vld [vmem:[%s523 + $0x80] sm:$0xff]
        %v3889 = vld [vmem:[%s523 + $0x88] sm:$0xff]
        %v3890 = vld [vmem:[%s523 + $0x90] sm:$0xff]
        %v3891 = vld [vmem:[%s523 + $0x98] sm:$0xff]
        %v3892 = vld [vmem:[%s523 + $0xa0] sm:$0xff]
        %v3893 = vld [vmem:[%s523 + $0xa8] sm:$0xff]
        %v3894 = vld [vmem:[%s523 + $0xb0] sm:$0xff]
        %v3895 = vld [vmem:[%s523 + $0xb8] sm:$0xff]
        %v3896 = vld [vmem:[%s523 + $0xc0] sm:$0xff]
        %v3897 = vld [vmem:[%s523 + $0xc8] sm:$0xff]
        %v3898 = vld [vmem:[%s523 + $0xd0] sm:$0xff]
        %v3899 = vld [vmem:[%s523 + $0xd8] sm:$0xff]
        %v3900 = vld [vmem:[%s523 + $0xe0] sm:$0xff]
        %v3901 = vld [vmem:[%s523 + $0xe8] sm:$0xff]
        %v3902 = vld [vmem:[%s523 + $0xf0] sm:$0xff]
        %v3903 = vld [vmem:[%s523 + $0xf8] sm:$0xff]
        %v3904 = vld [vmem:[#allocation2 + $0x8] sm:$0xff]
        %v3905 = vld [vmem:[#allocation2 + $0x10] sm:$0xff]
        %v3906 = vld [vmem:[#allocation2 + $0x18] sm:$0xff]
        %v3907 = vld [vmem:[#allocation2 + $0x20] sm:$0xff]
        %v3908 = vld [vmem:[#allocation2 + $0x28] sm:$0xff]
        %v3909 = vld [vmem:[#allocation2 + $0x30] sm:$0xff]
        %v3910 = vpack.c.bf16 %v3905, %v3904
        %v3911 = vpack.c.bf16 %v3907, %v3906
        %v3912 = vpack.c.bf16 %v3909, %v3908
        %s3913 = scalar_lea.vmem %s523, 256 [#allocation4]
        %v3914 = vld [vmem:[%s3913] sm:$0xff]
        %v3915 = vld [vmem:[%s3913 + $0x8] sm:$0xff]
        %v3916 = vld [vmem:[%s3913 + $0x10] sm:$0xff]
        %v3917 = vld [vmem:[%s3913 + $0x18] sm:$0xff]
        %v3918 = vld [vmem:[%s3913 + $0x20] sm:$0xff]
        %v3919 = vld [vmem:[%s3913 + $0x28] sm:$0xff]
        %v3920 = vld [vmem:[%s3913 + $0x30] sm:$0xff]
        %v3921 = vld [vmem:[%s3913 + $0x38] sm:$0xff]
        %v3922 = vld [vmem:[%s3913 + $0x40] sm:$0xff]
        %v3923 = vld [vmem:[%s3913 + $0x48] sm:$0xff]
        %v3924 = vld [vmem:[%s3913 + $0x50] sm:$0xff]
        %v3925 = vld [vmem:[%s3913 + $0x58] sm:$0xff]
        %v3926 = vld [vmem:[%s3913 + $0x60] sm:$0xff]
        %v3927 = vld [vmem:[%s3913 + $0x68] sm:$0xff]
        %v3928 = vld [vmem:[%s3913 + $0x70] sm:$0xff]
        %v3929 = vld [vmem:[%s3913 + $0x78] sm:$0xff]
        %v3930 = vld [vmem:[%s3913 + $0x80] sm:$0xff]
        %v3931 = vld [vmem:[%s3913 + $0x88] sm:$0xff]
        %v3932 = vld [vmem:[%s3913 + $0x90] sm:$0xff]
        %v3933 = vld [vmem:[%s3913 + $0x98] sm:$0xff]
        %v3934 = vld [vmem:[%s3913 + $0xa0] sm:$0xff]
        %v3935 = vld [vmem:[%s3913 + $0xa8] sm:$0xff]
        %v3936 = vld [vmem:[%s3913 + $0xb0] sm:$0xff]
        %v3937 = vld [vmem:[%s3913 + $0xb8] sm:$0xff]
        %v3938 = vld [vmem:[%s3913 + $0xc0] sm:$0xff]
        %v3939 = vld [vmem:[%s3913 + $0xc8] sm:$0xff]
        %v3940 = vld [vmem:[%s3913 + $0xd0] sm:$0xff]
        %v3941 = vld [vmem:[%s3913 + $0xd8] sm:$0xff]
        %v3942 = vld [vmem:[%s3913 + $0xe0] sm:$0xff]
        %v3943 = vld [vmem:[%s3913 + $0xe8] sm:$0xff]
        %v3944 = vld [vmem:[%s3913 + $0xf0] sm:$0xff]
        %v3945 = vld [vmem:[%s3913 + $0xf8] sm:$0xff]
        %v3978 = vunpack.c.l.b16 %v3914
        %v3979 = vunpack.c.h.b16 %v3914
        %v3980 = vunpack.c.l.b16 %v3915
        %v3981 = vunpack.c.h.b16 %v3915
        %v3982 = vunpack.c.l.b16 %v3916
        %v3983 = vunpack.c.h.b16 %v3916
        %v3984 = vunpack.c.l.b16 %v3917
        %v3985 = vunpack.c.h.b16 %v3917
        %v3986 = vunpack.c.l.b16 %v3918
        %v3987 = vunpack.c.h.b16 %v3918
        %v3988 = vunpack.c.l.b16 %v3919
        %v3989 = vunpack.c.h.b16 %v3919
        %v3990 = vunpack.c.l.b16 %v3920
        %v3991 = vunpack.c.h.b16 %v3920
        %v3992 = vunpack.c.l.b16 %v3921
        %v3993 = vunpack.c.h.b16 %v3921
        %v3994 = vunpack.c.l.b16 %v3922
        %v3995 = vunpack.c.h.b16 %v3922
        %v3996 = vunpack.c.l.b16 %v3923
        %v3997 = vunpack.c.h.b16 %v3923
        %v3998 = vunpack.c.l.b16 %v3924
        %v3999 = vunpack.c.h.b16 %v3924
        %v4000 = vunpack.c.l.b16 %v3925
        %v4001 = vunpack.c.h.b16 %v3925
        %v4002 = vunpack.c.l.b16 %v3926
        %v4003 = vunpack.c.h.b16 %v3926
        %v4004 = vunpack.c.l.b16 %v3927
        %v4005 = vunpack.c.h.b16 %v3927
        %v4006 = vunpack.c.l.b16 %v3928
        %v4007 = vunpack.c.h.b16 %v3928
        %v4008 = vunpack.c.l.b16 %v3929
        %v4009 = vunpack.c.h.b16 %v3929
        %v4010 = vunpack.c.l.b16 %v3930
        %v4011 = vunpack.c.h.b16 %v3930
        %v4012 = vunpack.c.l.b16 %v3931
        %v4013 = vunpack.c.h.b16 %v3931
        %v4014 = vunpack.c.l.b16 %v3932
        %v4015 = vunpack.c.h.b16 %v3932
        %v4016 = vunpack.c.l.b16 %v3933
        %v4017 = vunpack.c.h.b16 %v3933
        %v4018 = vunpack.c.l.b16 %v3934
        %v4019 = vunpack.c.h.b16 %v3934
        %v4020 = vunpack.c.l.b16 %v3935
        %v4021 = vunpack.c.h.b16 %v3935
        %v4022 = vunpack.c.l.b16 %v3936
        %v4023 = vunpack.c.h.b16 %v3936
        %v4024 = vunpack.c.l.b16 %v3937
        %v4025 = vunpack.c.h.b16 %v3937
        %v4026 = vunpack.c.l.b16 %v3938
        %v4027 = vunpack.c.h.b16 %v3938
        %v4028 = vunpack.c.l.b16 %v3939
        %v4029 = vunpack.c.h.b16 %v3939
        %v4030 = vunpack.c.l.b16 %v3940
        %v4031 = vunpack.c.h.b16 %v3940
        %v4032 = vunpack.c.l.b16 %v3941
        %v4033 = vunpack.c.h.b16 %v3941
        %v4034 = vunpack.c.l.b16 %v3942
        %v4035 = vunpack.c.h.b16 %v3942
        %v4036 = vunpack.c.l.b16 %v3943
        %v4037 = vunpack.c.h.b16 %v3943
        %v4038 = vunpack.c.l.b16 %v3944
        %v4039 = vunpack.c.h.b16 %v3944
        %v4040 = vunpack.c.l.b16 %v3945
        %v4041 = vunpack.c.h.b16 %v3945
        %v4042 = vpack.c.b16 %v3982, %v3978
        %v4043 = vpack.c.b16 %v3983, %v3979
        %v4044 = vpack.c.b16 %v3984, %v3980
        %v4045 = vpack.c.b16 %v3985, %v3981
        %v4046 = vpack.c.b16 %v3990, %v3986
        %v4047 = vpack.c.b16 %v3991, %v3987
        %v4048 = vpack.c.b16 %v3992, %v3988
        %v4049 = vpack.c.b16 %v3993, %v3989
        %v4050 = vpack.c.b16 %v3998, %v3994
        %v4051 = vpack.c.b16 %v3999, %v3995
        %v4052 = vpack.c.b16 %v4000, %v3996
        %v4053 = vpack.c.b16 %v4001, %v3997
        %v4054 = vpack.c.b16 %v4006, %v4002
        %v4055 = vpack.c.b16 %v4007, %v4003
        %v4056 = vpack.c.b16 %v4008, %v4004
        %v4057 = vpack.c.b16 %v4009, %v4005
        %v4058 = vpack.c.b16 %v4014, %v4010
        %v4059 = vpack.c.b16 %v4015, %v4011
        %v4060 = vpack.c.b16 %v4016, %v4012
        %v4061 = vpack.c.b16 %v4017, %v4013
        %v4062 = vpack.c.b16 %v4022, %v4018
        %v4063 = vpack.c.b16 %v4023, %v4019
        %v4064 = vpack.c.b16 %v4024, %v4020
        %v4065 = vpack.c.b16 %v4025, %v4021
        %v4066 = vpack.c.b16 %v4030, %v4026
        %v4067 = vpack.c.b16 %v4031, %v4027
        %v4068 = vpack.c.b16 %v4032, %v4028
        %v4069 = vpack.c.b16 %v4033, %v4029
        %v4070 = vpack.c.b16 %v4038, %v4034
        %v4071 = vpack.c.b16 %v4039, %v4035
        %v4072 = vpack.c.b16 %v4040, %v4036
        %v4073 = vpack.c.b16 %v4041, %v4037
        %4106 = vmatprep.subr.bf16.mxu0 %v4071
        %4107 = vmatpush1.bf16.msra.mxu0 %v4070
        %4108 = vmatprep.subr.bf16.mxu0 %v4067
        %4109 = vmatpush1.bf16.msra.mxu0 %v4066
        %4110 = vmatprep.subr.bf16.mxu0 %v4063
        %4111 = vmatpush1.bf16.msra.mxu0 %v4062
        %4112 = vmatprep.subr.bf16.mxu0 %v4059
        %4113 = vmatpush1.bf16.msra.mxu0 %v4058
        %4114 = vmatprep.subr.bf16.mxu0 %v4055
        %4115 = vmatpush1.bf16.msra.mxu0 %v4054
        %4116 = vmatprep.subr.bf16.mxu0 %v4051
        %4117 = vmatpush1.bf16.msra.mxu0 %v4050
        %4118 = vmatprep.subr.bf16.mxu0 %v4047
        %4119 = vmatpush1.bf16.msra.mxu0 %v4046
        %4120 = vmatprep.subr.bf16.mxu0 %v4043
        %4121 = vmatpush1.bf16.msra.mxu0 %v4042
        %4122 = vmatprep.subr.bf16.mxu0 0
        %4123 = vmatpush2.bf16.msra.mxu0 0
        %4124 = vmatprep.subr.bf16.mxu0 0
        %4125 = vmatpush2.bf16.msra.mxu0 0
        %4126 = vmatprep.subr.bf16.mxu0 0
        %4127 = vmatpush2.bf16.msra.mxu0 0
        %4128 = vmatprep.subr.bf16.mxu0 0
        %4129 = vmatpush2.bf16.msra.mxu0 0
        %4130 = vmatprep.subr.bf16.mxu0 0
        %4131 = vmatpush2.bf16.msra.mxu0 0
        %4132 = vmatprep.subr.bf16.mxu0 0
        %4133 = vmatpush2.bf16.msra.mxu0 0
        %4134 = vmatprep.subr.bf16.mxu0 0
        %4135 = vmatpush2.bf16.msra.mxu0 0
        %4136 = vmatprep.subr.bf16.mxu0 0
        %4137 = vmatpush2.bf16.msra.mxu0 0
        %4138 = vmatprep.mubr.bf16.mxu0 0
        %4139 = vmatmul.mubr.bf16.gmra.mxu0 %v3910
        %v4140 = vpop.f32.mrf.mxu0
        %v4141 = vadd.f32 0.0, %v4140
        %v4142 = vpop.f32.mrf.mxu0
        %v4143 = vadd.f32 0.0, %v4142
        %v4144 = vpop.f32.mrf.mxu0
        %v4145 = vadd.f32 0.0, %v4144
        %v4146 = vpop.f32.mrf.mxu0
        %v4147 = vadd.f32 0.0, %v4146
        %4148 = vmatprep.mubr.bf16.mxu0 0
        %4149 = vmatmul.mubr.bf16.gmra.mxu0 %v3911
        %v4150 = vpop.f32.mrf.mxu0
        %v4151 = vpop.f32.mrf.mxu0
        %v4152 = vpop.f32.mrf.mxu0
        %v4153 = vpop.f32.mrf.mxu0
        %4154 = vmatprep.mubr.bf16.mxu0 0
        %4155 = vmatmul.mubr.bf16.gmra.mxu0 %v3912
        %v4156 = vpop.f32.mrf.mxu0
        %v4157 = vadd.f32 0.0, %v4156
        %v4158 = vpop.f32.mrf.mxu0
        %v4159 = vadd.f32 0.0, %v4158
        %v4160 = vpop.f32.mrf.mxu0
        %v4161 = vadd.f32 0.0, %v4160
        %v4162 = vpop.f32.mrf.mxu0
        %v4163 = vadd.f32 0.0, %v4162
        %4164 = vdwg.mxu0
        %4165 = vmatprep.subr.bf16.mxu0 %v4073
        %4166 = vmatpush1.bf16.msra.mxu0 %v4072
        %4167 = vmatprep.subr.bf16.mxu0 %v4069
        %4168 = vmatpush1.bf16.msra.mxu0 %v4068
        %4169 = vmatprep.subr.bf16.mxu0 %v4065
        %4170 = vmatpush1.bf16.msra.mxu0 %v4064
        %4171 = vmatprep.subr.bf16.mxu0 %v4061
        %4172 = vmatpush1.bf16.msra.mxu0 %v4060
        %4173 = vmatprep.subr.bf16.mxu0 %v4057
        %4174 = vmatpush1.bf16.msra.mxu0 %v4056
        %4175 = vmatprep.subr.bf16.mxu0 %v4053
        %4176 = vmatpush1.bf16.msra.mxu0 %v4052
        %4177 = vmatprep.subr.bf16.mxu0 %v4049
        %4178 = vmatpush1.bf16.msra.mxu0 %v4048
        %4179 = vmatprep.subr.bf16.mxu0 %v4045
        %4180 = vmatpush1.bf16.msra.mxu0 %v4044
        %4181 = vmatprep.subr.bf16.mxu0 0
        %4182 = vmatpush2.bf16.msra.mxu0 0
        %4183 = vmatprep.subr.bf16.mxu0 0
        %4184 = vmatpush2.bf16.msra.mxu0 0
        %4185 = vmatprep.subr.bf16.mxu0 0
        %4186 = vmatpush2.bf16.msra.mxu0 0
        %4187 = vmatprep.subr.bf16.mxu0 0
        %4188 = vmatpush2.bf16.msra.mxu0 0
        %4189 = vmatprep.subr.bf16.mxu0 0
        %4190 = vmatpush2.bf16.msra.mxu0 0
        %4191 = vmatprep.subr.bf16.mxu0 0
        %4192 = vmatpush2.bf16.msra.mxu0 0
        %4193 = vmatprep.subr.bf16.mxu0 0
        %4194 = vmatpush2.bf16.msra.mxu0 0
        %4195 = vmatprep.subr.bf16.mxu0 0
        %4196 = vmatpush2.bf16.msra.mxu0 0
        %4197 = vmatprep.mubr.bf16.mxu0 0
        %4198 = vmatmul.mubr.bf16.gmra.mxu0 %v3910
        %v4199 = vpop.f32.mrf.mxu0
        %v4200 = vadd.f32 0.0, %v4199
        %v4201 = vpop.f32.mrf.mxu0
        %v4202 = vadd.f32 0.0, %v4201
        %v4203 = vpop.f32.mrf.mxu0
        %v4204 = vadd.f32 0.0, %v4203
        %v4205 = vpop.f32.mrf.mxu0
        %v4206 = vadd.f32 0.0, %v4205
        %4207 = vmatprep.mubr.bf16.mxu0 0
        %4208 = vmatmul.mubr.bf16.gmra.mxu0 %v3911
        %v4209 = vpop.f32.mrf.mxu0
        %v4210 = vpop.f32.mrf.mxu0
        %v4211 = vpop.f32.mrf.mxu0
        %v4212 = vpop.f32.mrf.mxu0
        %4213 = vmatprep.mubr.bf16.mxu0 0
        %4214 = vmatmul.mubr.bf16.gmra.mxu0 %v3912
        %v4215 = vpop.f32.mrf.mxu0
        %v4216 = vadd.f32 0.0, %v4215
        %v4217 = vpop.f32.mrf.mxu0
        %v4218 = vadd.f32 0.0, %v4217
        %v4219 = vpop.f32.mrf.mxu0
        %v4220 = vadd.f32 0.0, %v4219
        %v4221 = vpop.f32.mrf.mxu0
        %v4222 = vadd.f32 0.0, %v4221
        %4223 = vdwg.mxu0
        %v4256 = vunpack.c.l.b16 %v3872
        %v4257 = vunpack.c.h.b16 %v3872
        %v4258 = vunpack.c.l.b16 %v3873
        %v4259 = vunpack.c.h.b16 %v3873
        %v4260 = vunpack.c.l.b16 %v3874
        %v4261 = vunpack.c.h.b16 %v3874
        %v4262 = vunpack.c.l.b16 %v3875
        %v4263 = vunpack.c.h.b16 %v3875
        %v4264 = vunpack.c.l.b16 %v3876
        %v4265 = vunpack.c.h.b16 %v3876
        %v4266 = vunpack.c.l.b16 %v3877
        %v4267 = vunpack.c.h.b16 %v3877
        %v4268 = vunpack.c.l.b16 %v3878
        %v4269 = vunpack.c.h.b16 %v3878
        %v4270 = vunpack.c.l.b16 %v3879
        %v4271 = vunpack.c.h.b16 %v3879
        %v4272 = vunpack.c.l.b16 %v3880
        %v4273 = vunpack.c.h.b16 %v3880
        %v4274 = vunpack.c.l.b16 %v3881
        %v4275 = vunpack.c.h.b16 %v3881
        %v4276 = vunpack.c.l.b16 %v3882
        %v4277 = vunpack.c.h.b16 %v3882
        %v4278 = vunpack.c.l.b16 %v3883
        %v4279 = vunpack.c.h.b16 %v3883
        %v4280 = vunpack.c.l.b16 %v3884
        %v4281 = vunpack.c.h.b16 %v3884
        %v4282 = vunpack.c.l.b16 %v3885
        %v4283 = vunpack.c.h.b16 %v3885
        %v4284 = vunpack.c.l.b16 %v3886
        %v4285 = vunpack.c.h.b16 %v3886
        %v4286 = vunpack.c.l.b16 %v3887
        %v4287 = vunpack.c.h.b16 %v3887
        %v4288 = vunpack.c.l.b16 %v3888
        %v4289 = vunpack.c.h.b16 %v3888
        %v4290 = vunpack.c.l.b16 %v3889
        %v4291 = vunpack.c.h.b16 %v3889
        %v4292 = vunpack.c.l.b16 %v3890
        %v4293 = vunpack.c.h.b16 %v3890
        %v4294 = vunpack.c.l.b16 %v3891
        %v4295 = vunpack.c.h.b16 %v3891
        %v4296 = vunpack.c.l.b16 %v3892
        %v4297 = vunpack.c.h.b16 %v3892
        %v4298 = vunpack.c.l.b16 %v3893
        %v4299 = vunpack.c.h.b16 %v3893
        %v4300 = vunpack.c.l.b16 %v3894
        %v4301 = vunpack.c.h.b16 %v3894
        %v4302 = vunpack.c.l.b16 %v3895
        %v4303 = vunpack.c.h.b16 %v3895
        %v4304 = vunpack.c.l.b16 %v3896
        %v4305 = vunpack.c.h.b16 %v3896
        %v4306 = vunpack.c.l.b16 %v3897
        %v4307 = vunpack.c.h.b16 %v3897
        %v4308 = vunpack.c.l.b16 %v3898
        %v4309 = vunpack.c.h.b16 %v3898
        %v4310 = vunpack.c.l.b16 %v3899
        %v4311 = vunpack.c.h.b16 %v3899
        %v4312 = vunpack.c.l.b16 %v3900
        %v4313 = vunpack.c.h.b16 %v3900
        %v4314 = vunpack.c.l.b16 %v3901
        %v4315 = vunpack.c.h.b16 %v3901
        %v4316 = vunpack.c.l.b16 %v3902
        %v4317 = vunpack.c.h.b16 %v3902
        %v4318 = vunpack.c.l.b16 %v3903
        %v4319 = vunpack.c.h.b16 %v3903
        %v4320 = vpack.c.b16 %v4260, %v4256
        %v4321 = vpack.c.b16 %v4261, %v4257
        %v4322 = vpack.c.b16 %v4262, %v4258
        %v4323 = vpack.c.b16 %v4263, %v4259
        %v4324 = vpack.c.b16 %v4268, %v4264
        %v4325 = vpack.c.b16 %v4269, %v4265
        %v4326 = vpack.c.b16 %v4270, %v4266
        %v4327 = vpack.c.b16 %v4271, %v4267
        %v4328 = vpack.c.b16 %v4276, %v4272
        %v4329 = vpack.c.b16 %v4277, %v4273
        %v4330 = vpack.c.b16 %v4278, %v4274
        %v4331 = vpack.c.b16 %v4279, %v4275
        %v4332 = vpack.c.b16 %v4284, %v4280
        %v4333 = vpack.c.b16 %v4285, %v4281
        %v4334 = vpack.c.b16 %v4286, %v4282
        %v4335 = vpack.c.b16 %v4287, %v4283
        %v4336 = vpack.c.b16 %v4292, %v4288
        %v4337 = vpack.c.b16 %v4293, %v4289
        %v4338 = vpack.c.b16 %v4294, %v4290
        %v4339 = vpack.c.b16 %v4295, %v4291
        %v4340 = vpack.c.b16 %v4300, %v4296
        %v4341 = vpack.c.b16 %v4301, %v4297
        %v4342 = vpack.c.b16 %v4302, %v4298
        %v4343 = vpack.c.b16 %v4303, %v4299
        %v4344 = vpack.c.b16 %v4308, %v4304
        %v4345 = vpack.c.b16 %v4309, %v4305
        %v4346 = vpack.c.b16 %v4310, %v4306
        %v4347 = vpack.c.b16 %v4311, %v4307
        %v4348 = vpack.c.b16 %v4316, %v4312
        %v4349 = vpack.c.b16 %v4317, %v4313
        %v4350 = vpack.c.b16 %v4318, %v4314
        %v4351 = vpack.c.b16 %v4319, %v4315
        %4384 = vmatprep.subr.bf16.mxu0 %v4349
        %4385 = vmatpush1.bf16.msra.mxu0 %v4348
        %4386 = vmatprep.subr.bf16.mxu0 %v4345
        %4387 = vmatpush1.bf16.msra.mxu0 %v4344
        %4388 = vmatprep.subr.bf16.mxu0 %v4341
        %4389 = vmatpush1.bf16.msra.mxu0 %v4340
        %4390 = vmatprep.subr.bf16.mxu0 %v4337
        %4391 = vmatpush1.bf16.msra.mxu0 %v4336
        %4392 = vmatprep.subr.bf16.mxu0 %v4333
        %4393 = vmatpush1.bf16.msra.mxu0 %v4332
        %4394 = vmatprep.subr.bf16.mxu0 %v4329
        %4395 = vmatpush1.bf16.msra.mxu0 %v4328
        %4396 = vmatprep.subr.bf16.mxu0 %v4325
        %4397 = vmatpush1.bf16.msra.mxu0 %v4324
        %4398 = vmatprep.subr.bf16.mxu0 %v4321
        %4399 = vmatpush1.bf16.msra.mxu0 %v4320
        %4400 = vmatprep.subr.bf16.mxu0 0
        %4401 = vmatpush2.bf16.msra.mxu0 0
        %4402 = vmatprep.subr.bf16.mxu0 0
        %4403 = vmatpush2.bf16.msra.mxu0 0
        %4404 = vmatprep.subr.bf16.mxu0 0
        %4405 = vmatpush2.bf16.msra.mxu0 0
        %4406 = vmatprep.subr.bf16.mxu0 0
        %4407 = vmatpush2.bf16.msra.mxu0 0
        %4408 = vmatprep.subr.bf16.mxu0 0
        %4409 = vmatpush2.bf16.msra.mxu0 0
        %4410 = vmatprep.subr.bf16.mxu0 0
        %4411 = vmatpush2.bf16.msra.mxu0 0
        %4412 = vmatprep.subr.bf16.mxu0 0
        %4413 = vmatpush2.bf16.msra.mxu0 0
        %4414 = vmatprep.subr.bf16.mxu0 0
        %4415 = vmatpush2.bf16.msra.mxu0 0
        %4416 = vmatprep.mubr.bf16.mxu0 0
        %4417 = vmatmul.mubr.bf16.gmra.mxu0 %v3869
        %v4418 = vpop.f32.mrf.mxu0
        %v4419 = vadd.f32 %v4141, %v4418
        %v4420 = vpop.f32.mrf.mxu0
        %v4421 = vadd.f32 %v4143, %v4420
        %v4422 = vpop.f32.mrf.mxu0
        %v4423 = vadd.f32 %v4145, %v4422
        %v4424 = vpop.f32.mrf.mxu0
        %v4425 = vadd.f32 %v4147, %v4424
        %4426 = vmatprep.mubr.bf16.mxu0 0
        %4427 = vmatmul.mubr.bf16.gmra.mxu0 %v3870
        %v4428 = vpop.f32.mrf.mxu0
        %v4429 = vpop.f32.mrf.mxu0
        %v4430 = vpop.f32.mrf.mxu0
        %v4431 = vpop.f32.mrf.mxu0
        %4432 = vmatprep.mubr.bf16.mxu0 0
        %4433 = vmatmul.mubr.bf16.gmra.mxu0 %v3871
        %v4434 = vpop.f32.mrf.mxu0
        %v4435 = vadd.f32 %v4157, %v4434
        %v4436 = vpop.f32.mrf.mxu0
        %v4437 = vadd.f32 %v4159, %v4436
        %v4438 = vpop.f32.mrf.mxu0
        %v4439 = vadd.f32 %v4161, %v4438
        %v4440 = vpop.f32.mrf.mxu0
        %v4441 = vadd.f32 %v4163, %v4440
        %4442 = vdwg.mxu0
        %4443 = vmatprep.subr.bf16.mxu0 %v4351
        %4444 = vmatpush1.bf16.msra.mxu0 %v4350
        %4445 = vmatprep.subr.bf16.mxu0 %v4347
        %4446 = vmatpush1.bf16.msra.mxu0 %v4346
        %4447 = vmatprep.subr.bf16.mxu0 %v4343
        %4448 = vmatpush1.bf16.msra.mxu0 %v4342
        %4449 = vmatprep.subr.bf16.mxu0 %v4339
        %4450 = vmatpush1.bf16.msra.mxu0 %v4338
        %4451 = vmatprep.subr.bf16.mxu0 %v4335
        %4452 = vmatpush1.bf16.msra.mxu0 %v4334
        %4453 = vmatprep.subr.bf16.mxu0 %v4331
        %4454 = vmatpush1.bf16.msra.mxu0 %v4330
        %4455 = vmatprep.subr.bf16.mxu0 %v4327
        %4456 = vmatpush1.bf16.msra.mxu0 %v4326
        %4457 = vmatprep.subr.bf16.mxu0 %v4323
        %4458 = vmatpush1.bf16.msra.mxu0 %v4322
        %4459 = vmatprep.subr.bf16.mxu0 0
        %4460 = vmatpush2.bf16.msra.mxu0 0
        %4461 = vmatprep.subr.bf16.mxu0 0
        %4462 = vmatpush2.bf16.msra.mxu0 0
        %4463 = vmatprep.subr.bf16.mxu0 0
        %4464 = vmatpush2.bf16.msra.mxu0 0
        %4465 = vmatprep.subr.bf16.mxu0 0
        %4466 = vmatpush2.bf16.msra.mxu0 0
        %4467 = vmatprep.subr.bf16.mxu0 0
        %4468 = vmatpush2.bf16.msra.mxu0 0
        %4469 = vmatprep.subr.bf16.mxu0 0
        %4470 = vmatpush2.bf16.msra.mxu0 0
        %4471 = vmatprep.subr.bf16.mxu0 0
        %4472 = vmatpush2.bf16.msra.mxu0 0
        %4473 = vmatprep.subr.bf16.mxu0 0
        %4474 = vmatpush2.bf16.msra.mxu0 0
        %4475 = vmatprep.mubr.bf16.mxu0 0
        %4476 = vmatmul.mubr.bf16.gmra.mxu0 %v3869
        %v4477 = vpop.f32.mrf.mxu0
        %v4478 = vadd.f32 %v4200, %v4477
        %v4479 = vpop.f32.mrf.mxu0
        %v4480 = vadd.f32 %v4202, %v4479
        %v4481 = vpop.f32.mrf.mxu0
        %v4482 = vadd.f32 %v4204, %v4481
        %v4483 = vpop.f32.mrf.mxu0
        %v4484 = vadd.f32 %v4206, %v4483
        %4485 = vmatprep.mubr.bf16.mxu0 0
        %4486 = vmatmul.mubr.bf16.gmra.mxu0 %v3870
        %v4487 = vpop.f32.mrf.mxu0
        %v4488 = vpop.f32.mrf.mxu0
        %v4489 = vpop.f32.mrf.mxu0
        %v4490 = vpop.f32.mrf.mxu0
        %4491 = vmatprep.mubr.bf16.mxu0 0
        %4492 = vmatmul.mubr.bf16.gmra.mxu0 %v3871
        %v4493 = vpop.f32.mrf.mxu0
        %v4494 = vadd.f32 %v4216, %v4493
        %v4495 = vpop.f32.mrf.mxu0
        %v4496 = vadd.f32 %v4218, %v4495
        %v4497 = vpop.f32.mrf.mxu0
        %v4498 = vadd.f32 %v4220, %v4497
        %v4499 = vpop.f32.mrf.mxu0
        %v4500 = vadd.f32 %v4222, %v4499
        %4501 = vdwg.mxu0
        %v4502 = vld [vmem:[#allocation2 + $0xa] sm:$0xff]
        %v4503 = vld [vmem:[#allocation2 + $0x12] sm:$0xff]
        %v4504 = vld [vmem:[#allocation2 + $0x1a] sm:$0xff]
        %v4505 = vld [vmem:[#allocation2 + $0x22] sm:$0xff]
        %v4506 = vld [vmem:[#allocation2 + $0x2a] sm:$0xff]
        %v4507 = vld [vmem:[#allocation2 + $0x32] sm:$0xff]
        %v4508 = vpack.c.bf16 %v4503, %v4502
        %v4509 = vpack.c.bf16 %v4505, %v4504
        %v4510 = vpack.c.bf16 %v4507, %v4506
        %s4511 = scalar_lea.vmem %s523, 512 [#allocation4]
        %v4512 = vld [vmem:[%s4511] sm:$0xff]
        %v4513 = vld [vmem:[%s4511 + $0x8] sm:$0xff]
        %v4514 = vld [vmem:[%s4511 + $0x10] sm:$0xff]
        %v4515 = vld [vmem:[%s4511 + $0x18] sm:$0xff]
        %v4516 = vld [vmem:[%s4511 + $0x20] sm:$0xff]
        %v4517 = vld [vmem:[%s4511 + $0x28] sm:$0xff]
        %v4518 = vld [vmem:[%s4511 + $0x30] sm:$0xff]
        %v4519 = vld [vmem:[%s4511 + $0x38] sm:$0xff]
        %v4520 = vld [vmem:[%s4511 + $0x40] sm:$0xff]
        %v4521 = vld [vmem:[%s4511 + $0x48] sm:$0xff]
        %v4522 = vld [vmem:[%s4511 + $0x50] sm:$0xff]
        %v4523 = vld [vmem:[%s4511 + $0x58] sm:$0xff]
        %v4524 = vld [vmem:[%s4511 + $0x60] sm:$0xff]
        %v4525 = vld [vmem:[%s4511 + $0x68] sm:$0xff]
        %v4526 = vld [vmem:[%s4511 + $0x70] sm:$0xff]
        %v4527 = vld [vmem:[%s4511 + $0x78] sm:$0xff]
        %v4528 = vld [vmem:[%s4511 + $0x80] sm:$0xff]
        %v4529 = vld [vmem:[%s4511 + $0x88] sm:$0xff]
        %v4530 = vld [vmem:[%s4511 + $0x90] sm:$0xff]
        %v4531 = vld [vmem:[%s4511 + $0x98] sm:$0xff]
        %v4532 = vld [vmem:[%s4511 + $0xa0] sm:$0xff]
        %v4533 = vld [vmem:[%s4511 + $0xa8] sm:$0xff]
        %v4534 = vld [vmem:[%s4511 + $0xb0] sm:$0xff]
        %v4535 = vld [vmem:[%s4511 + $0xb8] sm:$0xff]
        %v4536 = vld [vmem:[%s4511 + $0xc0] sm:$0xff]
        %v4537 = vld [vmem:[%s4511 + $0xc8] sm:$0xff]
        %v4538 = vld [vmem:[%s4511 + $0xd0] sm:$0xff]
        %v4539 = vld [vmem:[%s4511 + $0xd8] sm:$0xff]
        %v4540 = vld [vmem:[%s4511 + $0xe0] sm:$0xff]
        %v4541 = vld [vmem:[%s4511 + $0xe8] sm:$0xff]
        %v4542 = vld [vmem:[%s4511 + $0xf0] sm:$0xff]
        %v4543 = vld [vmem:[%s4511 + $0xf8] sm:$0xff]
        %v4576 = vunpack.c.l.b16 %v4512
        %v4577 = vunpack.c.h.b16 %v4512
        %v4578 = vunpack.c.l.b16 %v4513
        %v4579 = vunpack.c.h.b16 %v4513
        %v4580 = vunpack.c.l.b16 %v4514
        %v4581 = vunpack.c.h.b16 %v4514
        %v4582 = vunpack.c.l.b16 %v4515
        %v4583 = vunpack.c.h.b16 %v4515
        %v4584 = vunpack.c.l.b16 %v4516
        %v4585 = vunpack.c.h.b16 %v4516
        %v4586 = vunpack.c.l.b16 %v4517
        %v4587 = vunpack.c.h.b16 %v4517
        %v4588 = vunpack.c.l.b16 %v4518
        %v4589 = vunpack.c.h.b16 %v4518
        %v4590 = vunpack.c.l.b16 %v4519
        %v4591 = vunpack.c.h.b16 %v4519
        %v4592 = vunpack.c.l.b16 %v4520
        %v4593 = vunpack.c.h.b16 %v4520
        %v4594 = vunpack.c.l.b16 %v4521
        %v4595 = vunpack.c.h.b16 %v4521
        %v4596 = vunpack.c.l.b16 %v4522
        %v4597 = vunpack.c.h.b16 %v4522
        %v4598 = vunpack.c.l.b16 %v4523
        %v4599 = vunpack.c.h.b16 %v4523
        %v4600 = vunpack.c.l.b16 %v4524
        %v4601 = vunpack.c.h.b16 %v4524
        %v4602 = vunpack.c.l.b16 %v4525
        %v4603 = vunpack.c.h.b16 %v4525
        %v4604 = vunpack.c.l.b16 %v4526
        %v4605 = vunpack.c.h.b16 %v4526
        %v4606 = vunpack.c.l.b16 %v4527
        %v4607 = vunpack.c.h.b16 %v4527
        %v4608 = vunpack.c.l.b16 %v4528
        %v4609 = vunpack.c.h.b16 %v4528
        %v4610 = vunpack.c.l.b16 %v4529
        %v4611 = vunpack.c.h.b16 %v4529
        %v4612 = vunpack.c.l.b16 %v4530
        %v4613 = vunpack.c.h.b16 %v4530
        %v4614 = vunpack.c.l.b16 %v4531
        %v4615 = vunpack.c.h.b16 %v4531
        %v4616 = vunpack.c.l.b16 %v4532
        %v4617 = vunpack.c.h.b16 %v4532
        %v4618 = vunpack.c.l.b16 %v4533
        %v4619 = vunpack.c.h.b16 %v4533
        %v4620 = vunpack.c.l.b16 %v4534
        %v4621 = vunpack.c.h.b16 %v4534
        %v4622 = vunpack.c.l.b16 %v4535
        %v4623 = vunpack.c.h.b16 %v4535
        %v4624 = vunpack.c.l.b16 %v4536
        %v4625 = vunpack.c.h.b16 %v4536
        %v4626 = vunpack.c.l.b16 %v4537
        %v4627 = vunpack.c.h.b16 %v4537
        %v4628 = vunpack.c.l.b16 %v4538
        %v4629 = vunpack.c.h.b16 %v4538
        %v4630 = vunpack.c.l.b16 %v4539
        %v4631 = vunpack.c.h.b16 %v4539
        %v4632 = vunpack.c.l.b16 %v4540
        %v4633 = vunpack.c.h.b16 %v4540
        %v4634 = vunpack.c.l.b16 %v4541
        %v4635 = vunpack.c.h.b16 %v4541
        %v4636 = vunpack.c.l.b16 %v4542
        %v4637 = vunpack.c.h.b16 %v4542
        %v4638 = vunpack.c.l.b16 %v4543
        %v4639 = vunpack.c.h.b16 %v4543
        %v4640 = vpack.c.b16 %v4580, %v4576
        %v4641 = vpack.c.b16 %v4581, %v4577
        %v4642 = vpack.c.b16 %v4582, %v4578
        %v4643 = vpack.c.b16 %v4583, %v4579
        %v4644 = vpack.c.b16 %v4588, %v4584
        %v4645 = vpack.c.b16 %v4589, %v4585
        %v4646 = vpack.c.b16 %v4590, %v4586
        %v4647 = vpack.c.b16 %v4591, %v4587
        %v4648 = vpack.c.b16 %v4596, %v4592
        %v4649 = vpack.c.b16 %v4597, %v4593
        %v4650 = vpack.c.b16 %v4598, %v4594
        %v4651 = vpack.c.b16 %v4599, %v4595
        %v4652 = vpack.c.b16 %v4604, %v4600
        %v4653 = vpack.c.b16 %v4605, %v4601
        %v4654 = vpack.c.b16 %v4606, %v4602
        %v4655 = vpack.c.b16 %v4607, %v4603
        %v4656 = vpack.c.b16 %v4612, %v4608
        %v4657 = vpack.c.b16 %v4613, %v4609
        %v4658 = vpack.c.b16 %v4614, %v4610
        %v4659 = vpack.c.b16 %v4615, %v4611
        %v4660 = vpack.c.b16 %v4620, %v4616
        %v4661 = vpack.c.b16 %v4621, %v4617
        %v4662 = vpack.c.b16 %v4622, %v4618
        %v4663 = vpack.c.b16 %v4623, %v4619
        %v4664 = vpack.c.b16 %v4628, %v4624
        %v4665 = vpack.c.b16 %v4629, %v4625
        %v4666 = vpack.c.b16 %v4630, %v4626
        %v4667 = vpack.c.b16 %v4631, %v4627
        %v4668 = vpack.c.b16 %v4636, %v4632
        %v4669 = vpack.c.b16 %v4637, %v4633
        %v4670 = vpack.c.b16 %v4638, %v4634
        %v4671 = vpack.c.b16 %v4639, %v4635
        %4704 = vmatprep.subr.bf16.mxu0 %v4669
        %4705 = vmatpush1.bf16.msra.mxu0 %v4668
        %4706 = vmatprep.subr.bf16.mxu0 %v4665
        %4707 = vmatpush1.bf16.msra.mxu0 %v4664
        %4708 = vmatprep.subr.bf16.mxu0 %v4661
        %4709 = vmatpush1.bf16.msra.mxu0 %v4660
        %4710 = vmatprep.subr.bf16.mxu0 %v4657
        %4711 = vmatpush1.bf16.msra.mxu0 %v4656
        %4712 = vmatprep.subr.bf16.mxu0 %v4653
        %4713 = vmatpush1.bf16.msra.mxu0 %v4652
        %4714 = vmatprep.subr.bf16.mxu0 %v4649
        %4715 = vmatpush1.bf16.msra.mxu0 %v4648
        %4716 = vmatprep.subr.bf16.mxu0 %v4645
        %4717 = vmatpush1.bf16.msra.mxu0 %v4644
        %4718 = vmatprep.subr.bf16.mxu0 %v4641
        %4719 = vmatpush1.bf16.msra.mxu0 %v4640
        %4720 = vmatprep.subr.bf16.mxu0 0
        %4721 = vmatpush2.bf16.msra.mxu0 0
        %4722 = vmatprep.subr.bf16.mxu0 0
        %4723 = vmatpush2.bf16.msra.mxu0 0
        %4724 = vmatprep.subr.bf16.mxu0 0
        %4725 = vmatpush2.bf16.msra.mxu0 0
        %4726 = vmatprep.subr.bf16.mxu0 0
        %4727 = vmatpush2.bf16.msra.mxu0 0
        %4728 = vmatprep.subr.bf16.mxu0 0
        %4729 = vmatpush2.bf16.msra.mxu0 0
        %4730 = vmatprep.subr.bf16.mxu0 0
        %4731 = vmatpush2.bf16.msra.mxu0 0
        %4732 = vmatprep.subr.bf16.mxu0 0
        %4733 = vmatpush2.bf16.msra.mxu0 0
        %4734 = vmatprep.subr.bf16.mxu0 0
        %4735 = vmatpush2.bf16.msra.mxu0 0
        %4736 = vmatprep.mubr.bf16.mxu0 0
        %4737 = vmatmul.mubr.bf16.gmra.mxu0 %v4508
        %v4738 = vpop.f32.mrf.mxu0
        %v4739 = vadd.f32 0.0, %v4738
        %v4740 = vpop.f32.mrf.mxu0
        %v4741 = vadd.f32 0.0, %v4740
        %v4742 = vpop.f32.mrf.mxu0
        %v4743 = vadd.f32 0.0, %v4742
        %v4744 = vpop.f32.mrf.mxu0
        %v4745 = vadd.f32 0.0, %v4744
        %4746 = vmatprep.mubr.bf16.mxu0 0
        %4747 = vmatmul.mubr.bf16.gmra.mxu0 %v4509
        %v4748 = vpop.f32.mrf.mxu0
        %v4749 = vpop.f32.mrf.mxu0
        %v4750 = vpop.f32.mrf.mxu0
        %v4751 = vpop.f32.mrf.mxu0
        %4752 = vmatprep.mubr.bf16.mxu0 0
        %4753 = vmatmul.mubr.bf16.gmra.mxu0 %v4510
        %v4754 = vpop.f32.mrf.mxu0
        %v4755 = vadd.f32 0.0, %v4754
        %v4756 = vpop.f32.mrf.mxu0
        %v4757 = vadd.f32 0.0, %v4756
        %v4758 = vpop.f32.mrf.mxu0
        %v4759 = vadd.f32 0.0, %v4758
        %v4760 = vpop.f32.mrf.mxu0
        %v4761 = vadd.f32 0.0, %v4760
        %4762 = vdwg.mxu0
        %4763 = vmatprep.subr.bf16.mxu0 %v4671
        %4764 = vmatpush1.bf16.msra.mxu0 %v4670
        %4765 = vmatprep.subr.bf16.mxu0 %v4667
        %4766 = vmatpush1.bf16.msra.mxu0 %v4666
        %4767 = vmatprep.subr.bf16.mxu0 %v4663
        %4768 = vmatpush1.bf16.msra.mxu0 %v4662
        %4769 = vmatprep.subr.bf16.mxu0 %v4659
        %4770 = vmatpush1.bf16.msra.mxu0 %v4658
        %4771 = vmatprep.subr.bf16.mxu0 %v4655
        %4772 = vmatpush1.bf16.msra.mxu0 %v4654
        %4773 = vmatprep.subr.bf16.mxu0 %v4651
        %4774 = vmatpush1.bf16.msra.mxu0 %v4650
        %4775 = vmatprep.subr.bf16.mxu0 %v4647
        %4776 = vmatpush1.bf16.msra.mxu0 %v4646
        %4777 = vmatprep.subr.bf16.mxu0 %v4643
        %4778 = vmatpush1.bf16.msra.mxu0 %v4642
        %4779 = vmatprep.subr.bf16.mxu0 0
        %4780 = vmatpush2.bf16.msra.mxu0 0
        %4781 = vmatprep.subr.bf16.mxu0 0
        %4782 = vmatpush2.bf16.msra.mxu0 0
        %4783 = vmatprep.subr.bf16.mxu0 0
        %4784 = vmatpush2.bf16.msra.mxu0 0
        %4785 = vmatprep.subr.bf16.mxu0 0
        %4786 = vmatpush2.bf16.msra.mxu0 0
        %4787 = vmatprep.subr.bf16.mxu0 0
        %4788 = vmatpush2.bf16.msra.mxu0 0
        %4789 = vmatprep.subr.bf16.mxu0 0
        %4790 = vmatpush2.bf16.msra.mxu0 0
        %4791 = vmatprep.subr.bf16.mxu0 0
        %4792 = vmatpush2.bf16.msra.mxu0 0
        %4793 = vmatprep.subr.bf16.mxu0 0
        %4794 = vmatpush2.bf16.msra.mxu0 0
        %4795 = vmatprep.mubr.bf16.mxu0 0
        %4796 = vmatmul.mubr.bf16.gmra.mxu0 %v4508
        %v4797 = vpop.f32.mrf.mxu0
        %v4798 = vadd.f32 0.0, %v4797
        %v4799 = vpop.f32.mrf.mxu0
        %v4800 = vadd.f32 0.0, %v4799
        %v4801 = vpop.f32.mrf.mxu0
        %v4802 = vadd.f32 0.0, %v4801
        %v4803 = vpop.f32.mrf.mxu0
        %v4804 = vadd.f32 0.0, %v4803
        %4805 = vmatprep.mubr.bf16.mxu0 0
        %4806 = vmatmul.mubr.bf16.gmra.mxu0 %v4509
        %v4807 = vpop.f32.mrf.mxu0
        %v4808 = vpop.f32.mrf.mxu0
        %v4809 = vpop.f32.mrf.mxu0
        %v4810 = vpop.f32.mrf.mxu0
        %4811 = vmatprep.mubr.bf16.mxu0 0
        %4812 = vmatmul.mubr.bf16.gmra.mxu0 %v4510
        %v4813 = vpop.f32.mrf.mxu0
        %v4814 = vadd.f32 0.0, %v4813
        %v4815 = vpop.f32.mrf.mxu0
        %v4816 = vadd.f32 0.0, %v4815
        %v4817 = vpop.f32.mrf.mxu0
        %v4818 = vadd.f32 0.0, %v4817
        %v4819 = vpop.f32.mrf.mxu0
        %v4820 = vadd.f32 0.0, %v4819
        %4821 = vdwg.mxu0
        %v4822 = vadd.f32 %v4419, %v4739
        %v4823 = vadd.f32 %v4421, %v4741
        %v4824 = vadd.f32 %v4478, %v4798
        %v4825 = vadd.f32 %v4480, %v4800
        %v4826 = vadd.f32 %v4423, %v4743
        %v4827 = vadd.f32 %v4425, %v4745
        %v4828 = vadd.f32 %v4482, %v4802
        %v4829 = vadd.f32 %v4484, %v4804
        %v4830 = vadd.f32 %v4435, %v4755
        %v4831 = vadd.f32 %v4437, %v4757
        %v4832 = vadd.f32 %v4494, %v4814
        %v4833 = vadd.f32 %v4496, %v4816
        %v4834 = vadd.f32 %v4439, %v4759
        %v4835 = vadd.f32 %v4441, %v4761
        %v4836 = vadd.f32 %v4498, %v4818
        %v4837 = vadd.f32 %v4500, %v4820
        %v4838 = vld [vmem:[#allocation2 + $0xc] sm:$0xff]
        %v4839 = vld [vmem:[#allocation2 + $0x14] sm:$0xff]
        %v4840 = vld [vmem:[#allocation2 + $0x1c] sm:$0xff]
        %v4841 = vld [vmem:[#allocation2 + $0x24] sm:$0xff]
        %v4842 = vld [vmem:[#allocation2 + $0x2c] sm:$0xff]
        %v4843 = vld [vmem:[#allocation2 + $0x34] sm:$0xff]
        %v4844 = vpack.c.bf16 %v4839, %v4838
        %v4845 = vpack.c.bf16 %v4841, %v4840
        %v4846 = vpack.c.bf16 %v4843, %v4842
        %s4847 = scalar_lea.vmem %s523, 768 [#allocation4]
        %v4848 = vld [vmem:[%s4847] sm:$0xff]
        %v4849 = vld [vmem:[%s4847 + $0x8] sm:$0xff]
        %v4850 = vld [vmem:[%s4847 + $0x10] sm:$0xff]
        %v4851 = vld [vmem:[%s4847 + $0x18] sm:$0xff]
        %v4852 = vld [vmem:[%s4847 + $0x20] sm:$0xff]
        %v4853 = vld [vmem:[%s4847 + $0x28] sm:$0xff]
        %v4854 = vld [vmem:[%s4847 + $0x30] sm:$0xff]
        %v4855 = vld [vmem:[%s4847 + $0x38] sm:$0xff]
        %v4856 = vld [vmem:[%s4847 + $0x40] sm:$0xff]
        %v4857 = vld [vmem:[%s4847 + $0x48] sm:$0xff]
        %v4858 = vld [vmem:[%s4847 + $0x50] sm:$0xff]
        %v4859 = vld [vmem:[%s4847 + $0x58] sm:$0xff]
        %v4860 = vld [vmem:[%s4847 + $0x60] sm:$0xff]
        %v4861 = vld [vmem:[%s4847 + $0x68] sm:$0xff]
        %v4862 = vld [vmem:[%s4847 + $0x70] sm:$0xff]
        %v4863 = vld [vmem:[%s4847 + $0x78] sm:$0xff]
        %v4864 = vld [vmem:[%s4847 + $0x80] sm:$0xff]
        %v4865 = vld [vmem:[%s4847 + $0x88] sm:$0xff]
        %v4866 = vld [vmem:[%s4847 + $0x90] sm:$0xff]
        %v4867 = vld [vmem:[%s4847 + $0x98] sm:$0xff]
        %v4868 = vld [vmem:[%s4847 + $0xa0] sm:$0xff]
        %v4869 = vld [vmem:[%s4847 + $0xa8] sm:$0xff]
        %v4870 = vld [vmem:[%s4847 + $0xb0] sm:$0xff]
        %v4871 = vld [vmem:[%s4847 + $0xb8] sm:$0xff]
        %v4872 = vld [vmem:[%s4847 + $0xc0] sm:$0xff]
        %v4873 = vld [vmem:[%s4847 + $0xc8] sm:$0xff]
        %v4874 = vld [vmem:[%s4847 + $0xd0] sm:$0xff]
        %v4875 = vld [vmem:[%s4847 + $0xd8] sm:$0xff]
        %v4876 = vld [vmem:[%s4847 + $0xe0] sm:$0xff]
        %v4877 = vld [vmem:[%s4847 + $0xe8] sm:$0xff]
        %v4878 = vld [vmem:[%s4847 + $0xf0] sm:$0xff]
        %v4879 = vld [vmem:[%s4847 + $0xf8] sm:$0xff]
        %v4912 = vunpack.c.l.b16 %v4848
        %v4913 = vunpack.c.h.b16 %v4848
        %v4914 = vunpack.c.l.b16 %v4849
        %v4915 = vunpack.c.h.b16 %v4849
        %v4916 = vunpack.c.l.b16 %v4850
        %v4917 = vunpack.c.h.b16 %v4850
        %v4918 = vunpack.c.l.b16 %v4851
        %v4919 = vunpack.c.h.b16 %v4851
        %v4920 = vunpack.c.l.b16 %v4852
        %v4921 = vunpack.c.h.b16 %v4852
        %v4922 = vunpack.c.l.b16 %v4853
        %v4923 = vunpack.c.h.b16 %v4853
        %v4924 = vunpack.c.l.b16 %v4854
        %v4925 = vunpack.c.h.b16 %v4854
        %v4926 = vunpack.c.l.b16 %v4855
        %v4927 = vunpack.c.h.b16 %v4855
        %v4928 = vunpack.c.l.b16 %v4856
        %v4929 = vunpack.c.h.b16 %v4856
        %v4930 = vunpack.c.l.b16 %v4857
        %v4931 = vunpack.c.h.b16 %v4857
        %v4932 = vunpack.c.l.b16 %v4858
        %v4933 = vunpack.c.h.b16 %v4858
        %v4934 = vunpack.c.l.b16 %v4859
        %v4935 = vunpack.c.h.b16 %v4859
        %v4936 = vunpack.c.l.b16 %v4860
        %v4937 = vunpack.c.h.b16 %v4860
        %v4938 = vunpack.c.l.b16 %v4861
        %v4939 = vunpack.c.h.b16 %v4861
        %v4940 = vunpack.c.l.b16 %v4862
        %v4941 = vunpack.c.h.b16 %v4862
        %v4942 = vunpack.c.l.b16 %v4863
        %v4943 = vunpack.c.h.b16 %v4863
        %v4944 = vunpack.c.l.b16 %v4864
        %v4945 = vunpack.c.h.b16 %v4864
        %v4946 = vunpack.c.l.b16 %v4865
        %v4947 = vunpack.c.h.b16 %v4865
        %v4948 = vunpack.c.l.b16 %v4866
        %v4949 = vunpack.c.h.b16 %v4866
        %v4950 = vunpack.c.l.b16 %v4867
        %v4951 = vunpack.c.h.b16 %v4867
        %v4952 = vunpack.c.l.b16 %v4868
        %v4953 = vunpack.c.h.b16 %v4868
        %v4954 = vunpack.c.l.b16 %v4869
        %v4955 = vunpack.c.h.b16 %v4869
        %v4956 = vunpack.c.l.b16 %v4870
        %v4957 = vunpack.c.h.b16 %v4870
        %v4958 = vunpack.c.l.b16 %v4871
        %v4959 = vunpack.c.h.b16 %v4871
        %v4960 = vunpack.c.l.b16 %v4872
        %v4961 = vunpack.c.h.b16 %v4872
        %v4962 = vunpack.c.l.b16 %v4873
        %v4963 = vunpack.c.h.b16 %v4873
        %v4964 = vunpack.c.l.b16 %v4874
        %v4965 = vunpack.c.h.b16 %v4874
        %v4966 = vunpack.c.l.b16 %v4875
        %v4967 = vunpack.c.h.b16 %v4875
        %v4968 = vunpack.c.l.b16 %v4876
        %v4969 = vunpack.c.h.b16 %v4876
        %v4970 = vunpack.c.l.b16 %v4877
        %v4971 = vunpack.c.h.b16 %v4877
        %v4972 = vunpack.c.l.b16 %v4878
        %v4973 = vunpack.c.h.b16 %v4878
        %v4974 = vunpack.c.l.b16 %v4879
        %v4975 = vunpack.c.h.b16 %v4879
        %v4976 = vpack.c.b16 %v4916, %v4912
        %v4977 = vpack.c.b16 %v4917, %v4913
        %v4978 = vpack.c.b16 %v4918, %v4914
        %v4979 = vpack.c.b16 %v4919, %v4915
        %v4980 = vpack.c.b16 %v4924, %v4920
        %v4981 = vpack.c.b16 %v4925, %v4921
        %v4982 = vpack.c.b16 %v4926, %v4922
        %v4983 = vpack.c.b16 %v4927, %v4923
        %v4984 = vpack.c.b16 %v4932, %v4928
        %v4985 = vpack.c.b16 %v4933, %v4929
        %v4986 = vpack.c.b16 %v4934, %v4930
        %v4987 = vpack.c.b16 %v4935, %v4931
        %v4988 = vpack.c.b16 %v4940, %v4936
        %v4989 = vpack.c.b16 %v4941, %v4937
        %v4990 = vpack.c.b16 %v4942, %v4938
        %v4991 = vpack.c.b16 %v4943, %v4939
        %v4992 = vpack.c.b16 %v4948, %v4944
        %v4993 = vpack.c.b16 %v4949, %v4945
        %v4994 = vpack.c.b16 %v4950, %v4946
        %v4995 = vpack.c.b16 %v4951, %v4947
        %v4996 = vpack.c.b16 %v4956, %v4952
        %v4997 = vpack.c.b16 %v4957, %v4953
        %v4998 = vpack.c.b16 %v4958, %v4954
        %v4999 = vpack.c.b16 %v4959, %v4955
        %v5000 = vpack.c.b16 %v4964, %v4960
        %v5001 = vpack.c.b16 %v4965, %v4961
        %v5002 = vpack.c.b16 %v4966, %v4962
        %v5003 = vpack.c.b16 %v4967, %v4963
        %v5004 = vpack.c.b16 %v4972, %v4968
        %v5005 = vpack.c.b16 %v4973, %v4969
        %v5006 = vpack.c.b16 %v4974, %v4970
        %v5007 = vpack.c.b16 %v4975, %v4971
        %5040 = vmatprep.subr.bf16.mxu0 %v5005
        %5041 = vmatpush1.bf16.msra.mxu0 %v5004
        %5042 = vmatprep.subr.bf16.mxu0 %v5001
        %5043 = vmatpush1.bf16.msra.mxu0 %v5000
        %5044 = vmatprep.subr.bf16.mxu0 %v4997
        %5045 = vmatpush1.bf16.msra.mxu0 %v4996
        %5046 = vmatprep.subr.bf16.mxu0 %v4993
        %5047 = vmatpush1.bf16.msra.mxu0 %v4992
        %5048 = vmatprep.subr.bf16.mxu0 %v4989
        %5049 = vmatpush1.bf16.msra.mxu0 %v4988
        %5050 = vmatprep.subr.bf16.mxu0 %v4985
        %5051 = vmatpush1.bf16.msra.mxu0 %v4984
        %5052 = vmatprep.subr.bf16.mxu0 %v4981
        %5053 = vmatpush1.bf16.msra.mxu0 %v4980
        %5054 = vmatprep.subr.bf16.mxu0 %v4977
        %5055 = vmatpush1.bf16.msra.mxu0 %v4976
        %5056 = vmatprep.subr.bf16.mxu0 0
        %5057 = vmatpush2.bf16.msra.mxu0 0
        %5058 = vmatprep.subr.bf16.mxu0 0
        %5059 = vmatpush2.bf16.msra.mxu0 0
        %5060 = vmatprep.subr.bf16.mxu0 0
        %5061 = vmatpush2.bf16.msra.mxu0 0
        %5062 = vmatprep.subr.bf16.mxu0 0
        %5063 = vmatpush2.bf16.msra.mxu0 0
        %5064 = vmatprep.subr.bf16.mxu0 0
        %5065 = vmatpush2.bf16.msra.mxu0 0
        %5066 = vmatprep.subr.bf16.mxu0 0
        %5067 = vmatpush2.bf16.msra.mxu0 0
        %5068 = vmatprep.subr.bf16.mxu0 0
        %5069 = vmatpush2.bf16.msra.mxu0 0
        %5070 = vmatprep.subr.bf16.mxu0 0
        %5071 = vmatpush2.bf16.msra.mxu0 0
        %5072 = vmatprep.mubr.bf16.mxu0 0
        %5073 = vmatmul.mubr.bf16.gmra.mxu0 %v4844
        %v5074 = vpop.f32.mrf.mxu0
        %v5075 = vadd.f32 0.0, %v5074
        %v5076 = vpop.f32.mrf.mxu0
        %v5077 = vadd.f32 0.0, %v5076
        %v5078 = vpop.f32.mrf.mxu0
        %v5079 = vadd.f32 0.0, %v5078
        %v5080 = vpop.f32.mrf.mxu0
        %v5081 = vadd.f32 0.0, %v5080
        %5082 = vmatprep.mubr.bf16.mxu0 0
        %5083 = vmatmul.mubr.bf16.gmra.mxu0 %v4845
        %v5084 = vpop.f32.mrf.mxu0
        %v5085 = vpop.f32.mrf.mxu0
        %v5086 = vpop.f32.mrf.mxu0
        %v5087 = vpop.f32.mrf.mxu0
        %5088 = vmatprep.mubr.bf16.mxu0 0
        %5089 = vmatmul.mubr.bf16.gmra.mxu0 %v4846
        %v5090 = vpop.f32.mrf.mxu0
        %v5091 = vadd.f32 0.0, %v5090
        %v5092 = vpop.f32.mrf.mxu0
        %v5093 = vadd.f32 0.0, %v5092
        %v5094 = vpop.f32.mrf.mxu0
        %v5095 = vadd.f32 0.0, %v5094
        %v5096 = vpop.f32.mrf.mxu0
        %v5097 = vadd.f32 0.0, %v5096
        %5098 = vdwg.mxu0
        %5099 = vmatprep.subr.bf16.mxu0 %v5007
        %5100 = vmatpush1.bf16.msra.mxu0 %v5006
        %5101 = vmatprep.subr.bf16.mxu0 %v5003
        %5102 = vmatpush1.bf16.msra.mxu0 %v5002
        %5103 = vmatprep.subr.bf16.mxu0 %v4999
        %5104 = vmatpush1.bf16.msra.mxu0 %v4998
        %5105 = vmatprep.subr.bf16.mxu0 %v4995
        %5106 = vmatpush1.bf16.msra.mxu0 %v4994
        %5107 = vmatprep.subr.bf16.mxu0 %v4991
        %5108 = vmatpush1.bf16.msra.mxu0 %v4990
        %5109 = vmatprep.subr.bf16.mxu0 %v4987
        %5110 = vmatpush1.bf16.msra.mxu0 %v4986
        %5111 = vmatprep.subr.bf16.mxu0 %v4983
        %5112 = vmatpush1.bf16.msra.mxu0 %v4982
        %5113 = vmatprep.subr.bf16.mxu0 %v4979
        %5114 = vmatpush1.bf16.msra.mxu0 %v4978
        %5115 = vmatprep.subr.bf16.mxu0 0
        %5116 = vmatpush2.bf16.msra.mxu0 0
        %5117 = vmatprep.subr.bf16.mxu0 0
        %5118 = vmatpush2.bf16.msra.mxu0 0
        %5119 = vmatprep.subr.bf16.mxu0 0
        %5120 = vmatpush2.bf16.msra.mxu0 0
        %5121 = vmatprep.subr.bf16.mxu0 0
        %5122 = vmatpush2.bf16.msra.mxu0 0
        %5123 = vmatprep.subr.bf16.mxu0 0
        %5124 = vmatpush2.bf16.msra.mxu0 0
        %5125 = vmatprep.subr.bf16.mxu0 0
        %5126 = vmatpush2.bf16.msra.mxu0 0
        %5127 = vmatprep.subr.bf16.mxu0 0
        %5128 = vmatpush2.bf16.msra.mxu0 0
        %5129 = vmatprep.subr.bf16.mxu0 0
        %5130 = vmatpush2.bf16.msra.mxu0 0
        %5131 = vmatprep.mubr.bf16.mxu0 0
        %5132 = vmatmul.mubr.bf16.gmra.mxu0 %v4844
        %v5133 = vpop.f32.mrf.mxu0
        %v5134 = vadd.f32 0.0, %v5133
        %v5135 = vpop.f32.mrf.mxu0
        %v5136 = vadd.f32 0.0, %v5135
        %v5137 = vpop.f32.mrf.mxu0
        %v5138 = vadd.f32 0.0, %v5137
        %v5139 = vpop.f32.mrf.mxu0
        %v5140 = vadd.f32 0.0, %v5139
        %5141 = vmatprep.mubr.bf16.mxu0 0
        %5142 = vmatmul.mubr.bf16.gmra.mxu0 %v4845
        %v5143 = vpop.f32.mrf.mxu0
        %v5144 = vpop.f32.mrf.mxu0
        %v5145 = vpop.f32.mrf.mxu0
        %v5146 = vpop.f32.mrf.mxu0
        %5147 = vmatprep.mubr.bf16.mxu0 0
        %5148 = vmatmul.mubr.bf16.gmra.mxu0 %v4846
        %v5149 = vpop.f32.mrf.mxu0
        %v5150 = vadd.f32 0.0, %v5149
        %v5151 = vpop.f32.mrf.mxu0
        %v5152 = vadd.f32 0.0, %v5151
        %v5153 = vpop.f32.mrf.mxu0
        %v5154 = vadd.f32 0.0, %v5153
        %v5155 = vpop.f32.mrf.mxu0
        %v5156 = vadd.f32 0.0, %v5155
        %5157 = vdwg.mxu0
        %v5158 = vadd.f32 %v4822, %v5075
        %v5159 = vadd.f32 %v4823, %v5077
        %v5160 = vadd.f32 %v4824, %v5134
        %v5161 = vadd.f32 %v4825, %v5136
        %v5162 = vadd.f32 %v4826, %v5079
        %v5163 = vadd.f32 %v4827, %v5081
        %v5164 = vadd.f32 %v4828, %v5138
        %v5165 = vadd.f32 %v4829, %v5140
        %v5166 = vadd.f32 %v4830, %v5091
        %v5167 = vadd.f32 %v4831, %v5093
        %v5168 = vadd.f32 %v4832, %v5150
        %v5169 = vadd.f32 %v4833, %v5152
        %v5170 = vadd.f32 %v4834, %v5095
        %v5171 = vadd.f32 %v4835, %v5097
        %v5172 = vadd.f32 %v4836, %v5154
        %v5173 = vadd.f32 %v4837, %v5156
        %v5174 = vld [vmem:[%s636] sm:$0xf]
        %v5176 = vlaneseq
        %v5177 = vshrl.u32 %v5176, 7
        %v5178 = vsub.s32 0, %v5177
        %v5179 = vrot.slane %v5174, %v5178
        %v5180 = vlaneseq
        %v5181 = vshrl.u32 %v5180, 7
        %v5182 = vsub.s32 1, %v5181
        %v5183 = vrot.slane %v5174, %v5182
        %v5184 = vlaneseq
        %v5185 = vshrl.u32 %v5184, 7
        %v5186 = vsub.s32 2, %v5185
        %v5187 = vrot.slane %v5174, %v5186
        %v5188 = vlaneseq
        %v5189 = vshrl.u32 %v5188, 7
        %v5190 = vsub.s32 3, %v5189
        %v5191 = vrot.slane %v5174, %v5190
        %v5196 = vmul.f32 %v5158, %v5179
        %v5197 = vmul.f32 %v5159, %v5183
        %v5198 = vmul.f32 %v5160, %v5187
        %v5199 = vmul.f32 %v5161, %v5191
        %v5200 = vmul.f32 %v5162, %v5179
        %v5201 = vmul.f32 %v5163, %v5183
        %v5202 = vmul.f32 %v5164, %v5187
        %v5203 = vmul.f32 %v5165, %v5191
        %v5204 = vmul.f32 %v5166, %v5179
        %v5205 = vmul.f32 %v5167, %v5183
        %v5206 = vmul.f32 %v5168, %v5187
        %v5207 = vmul.f32 %v5169, %v5191
        %v5208 = vmul.f32 %v5170, %v5179
        %v5209 = vmul.f32 %v5171, %v5183
        %v5210 = vmul.f32 %v5172, %v5187
        %v5211 = vmul.f32 %v5173, %v5191
        %v5212 = vld [vmem:[%s640] sm:$0xf]
        %v5214 = vlaneseq
        %v5215 = vshrl.u32 %v5214, 7
        %v5216 = vsub.s32 0, %v5215
        %v5217 = vrot.slane %v5212, %v5216
        %v5218 = vlaneseq
        %v5219 = vshrl.u32 %v5218, 7
        %v5220 = vsub.s32 1, %v5219
        %v5221 = vrot.slane %v5212, %v5220
        %v5222 = vlaneseq
        %v5223 = vshrl.u32 %v5222, 7
        %v5224 = vsub.s32 2, %v5223
        %v5225 = vrot.slane %v5212, %v5224
        %v5226 = vlaneseq
        %v5227 = vshrl.u32 %v5226, 7
        %v5228 = vsub.s32 3, %v5227
        %v5229 = vrot.slane %v5212, %v5228
        %v5234 = vadd.f32 %v5196, %v5217
        %v5235 = vadd.f32 %v5197, %v5221
        %v5236 = vadd.f32 %v5198, %v5225
        %v5237 = vadd.f32 %v5199, %v5229
        %v5238 = vadd.f32 %v5200, %v5217
        %v5239 = vadd.f32 %v5201, %v5221
        %v5240 = vadd.f32 %v5202, %v5225
        %v5241 = vadd.f32 %v5203, %v5229
        %v5242 = vadd.f32 %v5204, %v5217
        %v5243 = vadd.f32 %v5205, %v5221
        %v5244 = vadd.f32 %v5206, %v5225
        %v5245 = vadd.f32 %v5207, %v5229
        %v5246 = vadd.f32 %v5208, %v5217
        %v5247 = vadd.f32 %v5209, %v5221
        %v5248 = vadd.f32 %v5210, %v5225
        %v5249 = vadd.f32 %v5211, %v5229
        %v5250 = vmax.f32 %v5234, 0.0
        %v5251 = vmax.f32 %v5235, 0.0
        %v5252 = vmax.f32 %v5236, 0.0
        %v5253 = vmax.f32 %v5237, 0.0
        %v5254 = vmax.f32 %v5238, 0.0
        %v5255 = vmax.f32 %v5239, 0.0
        %v5256 = vmax.f32 %v5240, 0.0
        %v5257 = vmax.f32 %v5241, 0.0
        %v5258 = vmax.f32 %v5242, 0.0
        %v5259 = vmax.f32 %v5243, 0.0
        %v5260 = vmax.f32 %v5244, 0.0
        %v5261 = vmax.f32 %v5245, 0.0
        %v5262 = vmax.f32 %v5246, 0.0
        %v5263 = vmax.f32 %v5247, 0.0
        %v5264 = vmax.f32 %v5248, 0.0
        %v5265 = vmax.f32 %v5249, 0.0
        %v5266 = vmax.f32 %v5250, %v5251
        %v5267 = vmax.f32 %v5254, %v5255
        %v5268 = vmax.f32 %v5258, %v5259
        %v5269 = vmax.f32 %v5262, %v5263
        %v5270 = vmax.f32 %v5252, %v5253
        %v5271 = vmax.f32 %v5256, %v5257
        %v5272 = vmax.f32 %v5260, %v5261
        %v5273 = vmax.f32 %v5264, %v5265
        %v5274 = vmax.f32 %v5266, %v5270
        %v5275 = vmax.f32 %v5267, %v5271
        %v5276 = vmax.f32 %v5268, %v5272
        %v5277 = vmax.f32 %v5269, %v5273
        %5278 = vst [vmem:[#allocation2 + $0x8] sm:$0xff] %v5274
        %5279 = vst [vmem:[#allocation2 + $0x10] sm:$0xff] %v5275
        %5280 = vst [vmem:[#allocation2 + $0x28] sm:$0xff] %v5276
        %5281 = vst [vmem:[#allocation2 + $0x30] sm:$0xff] %v5277
        %v5282 = vld [vmem:[#allocation2 + $0x8] sm:$0x1]
        %5283 = vst [vmem:[#allocation3] sm:$0x1] %v5282
        %v5284 = vld [vmem:[#allocation2 + $0xc] sm:$0x1]
        %5285 = vst [vmem:[#allocation3 + $0x2] sm:$0x1] %v5284
        %v5286 = vld [vmem:[#allocation2 + $0x10] sm:$0x1]
        %5287 = vst [vmem:[#allocation3 + $0x4] sm:$0x1] %v5286
        %v5288 = vld [vmem:[#allocation2 + $0x14] sm:$0x1]
        %5289 = vst [vmem:[#allocation3 + $0x6] sm:$0x1] %v5288
        %v5290 = vld [vmem:[#allocation2 + $0x28] sm:$0x1]
        %5291 = vst [vmem:[#allocation3 + $0x1] sm:$0x1] %v5290
        %v5292 = vld [vmem:[#allocation2 + $0x2c] sm:$0x1]
        %5293 = vst [vmem:[#allocation3 + $0x3] sm:$0x1] %v5292
        %v5294 = vld [vmem:[#allocation2 + $0x30] sm:$0x1]
        %5295 = vst [vmem:[#allocation3 + $0x5] sm:$0x1] %v5294
        %v5296 = vld [vmem:[#allocation2 + $0x34] sm:$0x1]
        %5297 = vst [vmem:[#allocation3 + $0x7] sm:$0x1] %v5296
        %v5298 = vld [vmem:[#allocation3] sm:$0xff]
        %v5300 = vcombine.high %v5298, %v5298
        %v5302 = vunpack.c.l.s4 1983009808
        %v5303 = vunpack.c.0.s8 %v5302
        %v5304 = vlaneseq
        %v5305 = vshrl.u32 %v5304, 7
        %v5306 = vsub.s32 %v5303, %v5305
        %v5307 = vrot.slane %v5298, %v5306
        %v5309 = vunpack.c.l.s4 1983009808
        %v5310 = vunpack.c.0.s8 %v5309
        %v5311 = vlaneseq
        %v5312 = vshrl.u32 %v5311, 7
        %v5313 = vsub.s32 %v5310, %v5312
        %v5314 = vrot.slane %v5300, %v5313
        %v5315 = vcombine.high %v5307, %v5307
        %v5316 = vcombine.high %v5314, %v5314
        %v5321 = vpack.c.bf16 %v5307, %v5307
        %v5322 = vpack.c.bf16 %v5315, %v5315
        %v5323 = vpack.c.bf16 %v5314, %v5314
        %v5324 = vpack.c.bf16 %v5316, %v5316
        %v5325 = vld [vmem:[%s645] sm:$0xf]
        %v5326 = vld [vmem:[%s645 + $0x4] sm:$0xf]
        %v5327 = vld [vmem:[%s645 + $0x8] sm:$0xf]
        %v5328 = vld [vmem:[%s645 + $0xc] sm:$0xf]
        %v5329 = vld [vmem:[%s645 + $0x10] sm:$0xf]
        %v5330 = vld [vmem:[%s645 + $0x14] sm:$0xf]
        %v5331 = vld [vmem:[%s645 + $0x18] sm:$0xf]
        %v5332 = vld [vmem:[%s645 + $0x1c] sm:$0xf]
        %v5333 = vld [vmem:[%s645 + $0x20] sm:$0xf]
        %v5334 = vld [vmem:[%s645 + $0x24] sm:$0xf]
        %v5335 = vld [vmem:[%s645 + $0x28] sm:$0xf]
        %v5336 = vld [vmem:[%s645 + $0x2c] sm:$0xf]
        %v5337 = vld [vmem:[%s645 + $0x30] sm:$0xf]
        %v5338 = vld [vmem:[%s645 + $0x34] sm:$0xf]
        %v5339 = vld [vmem:[%s645 + $0x38] sm:$0xf]
        %v5340 = vld [vmem:[%s645 + $0x3c] sm:$0xf]
        %v5341 = vld [vmem:[%s645 + $0x40] sm:$0xf]
        %v5342 = vld [vmem:[%s645 + $0x44] sm:$0xf]
        %v5343 = vld [vmem:[%s645 + $0x48] sm:$0xf]
        %v5344 = vld [vmem:[%s645 + $0x4c] sm:$0xf]
        %v5345 = vld [vmem:[%s645 + $0x50] sm:$0xf]
        %v5346 = vld [vmem:[%s645 + $0x54] sm:$0xf]
        %v5347 = vld [vmem:[%s645 + $0x58] sm:$0xf]
        %v5348 = vld [vmem:[%s645 + $0x5c] sm:$0xf]
        %v5349 = vld [vmem:[%s645 + $0x60] sm:$0xf]
        %v5350 = vld [vmem:[%s645 + $0x64] sm:$0xf]
        %v5351 = vld [vmem:[%s645 + $0x68] sm:$0xf]
        %v5352 = vld [vmem:[%s645 + $0x6c] sm:$0xf]
        %v5353 = vld [vmem:[%s645 + $0x70] sm:$0xf]
        %v5354 = vld [vmem:[%s645 + $0x74] sm:$0xf]
        %v5355 = vld [vmem:[%s645 + $0x78] sm:$0xf]
        %v5356 = vld [vmem:[%s645 + $0x7c] sm:$0xf]
        %v5357 = vld [vmem:[%s645 + $0x80] sm:$0xf]
        %v5358 = vld [vmem:[%s645 + $0x84] sm:$0xf]
        %v5359 = vld [vmem:[%s645 + $0x88] sm:$0xf]
        %v5360 = vld [vmem:[%s645 + $0x8c] sm:$0xf]
        %v5361 = vld [vmem:[%s645 + $0x90] sm:$0xf]
        %v5362 = vld [vmem:[%s645 + $0x94] sm:$0xf]
        %v5363 = vld [vmem:[%s645 + $0x98] sm:$0xf]
        %v5364 = vld [vmem:[%s645 + $0x9c] sm:$0xf]
        %v5365 = vld [vmem:[%s645 + $0xa0] sm:$0xf]
        %v5366 = vld [vmem:[%s645 + $0xa4] sm:$0xf]
        %v5367 = vld [vmem:[%s645 + $0xa8] sm:$0xf]
        %v5368 = vld [vmem:[%s645 + $0xac] sm:$0xf]
        %v5369 = vld [vmem:[%s645 + $0xb0] sm:$0xf]
        %v5370 = vld [vmem:[%s645 + $0xb4] sm:$0xf]
        %v5371 = vld [vmem:[%s645 + $0xb8] sm:$0xf]
        %v5372 = vld [vmem:[%s645 + $0xbc] sm:$0xf]
        %v5373 = vld [vmem:[%s645 + $0xc0] sm:$0xf]
        %v5374 = vld [vmem:[%s645 + $0xc4] sm:$0xf]
        %v5375 = vld [vmem:[%s645 + $0xc8] sm:$0xf]
        %v5376 = vld [vmem:[%s645 + $0xcc] sm:$0xf]
        %v5377 = vld [vmem:[%s645 + $0xd0] sm:$0xf]
        %v5378 = vld [vmem:[%s645 + $0xd4] sm:$0xf]
        %v5379 = vld [vmem:[%s645 + $0xd8] sm:$0xf]
        %v5380 = vld [vmem:[%s645 + $0xdc] sm:$0xf]
        %v5381 = vld [vmem:[%s645 + $0xe0] sm:$0xf]
        %v5382 = vld [vmem:[%s645 + $0xe4] sm:$0xf]
        %v5383 = vld [vmem:[%s645 + $0xe8] sm:$0xf]
        %v5384 = vld [vmem:[%s645 + $0xec] sm:$0xf]
        %v5385 = vld [vmem:[%s645 + $0xf0] sm:$0xf]
        %v5386 = vld [vmem:[%s645 + $0xf4] sm:$0xf]
        %v5387 = vld [vmem:[%s645 + $0xf8] sm:$0xf]
        %v5388 = vld [vmem:[%s645 + $0xfc] sm:$0xf]
        %v5389 = vld [vmem:[%s648] sm:$0x1]
        %v5391 = vlaneseq
        %v5392 = vshrl.u32 %v5391, 7
        %v5393 = vsub.s32 0, %v5392
        %v5394 = vrot.slane %v5389, %v5393
        %v5460 = vunpack.c.l.b16 %v5325
        %v5461 = vunpack.c.l.b16 %v5326
        %v5462 = vunpack.c.l.b16 %v5327
        %v5463 = vunpack.c.l.b16 %v5328
        %v5464 = vunpack.c.l.b16 %v5329
        %v5465 = vunpack.c.l.b16 %v5330
        %v5466 = vunpack.c.l.b16 %v5331
        %v5467 = vunpack.c.l.b16 %v5332
        %v5468 = vunpack.c.l.b16 %v5333
        %v5469 = vunpack.c.l.b16 %v5334
        %v5470 = vunpack.c.l.b16 %v5335
        %v5471 = vunpack.c.l.b16 %v5336
        %v5472 = vunpack.c.l.b16 %v5337
        %v5473 = vunpack.c.l.b16 %v5338
        %v5474 = vunpack.c.l.b16 %v5339
        %v5475 = vunpack.c.l.b16 %v5340
        %v5476 = vunpack.c.l.b16 %v5341
        %v5477 = vunpack.c.l.b16 %v5342
        %v5478 = vunpack.c.l.b16 %v5343
        %v5479 = vunpack.c.l.b16 %v5344
        %v5480 = vunpack.c.l.b16 %v5345
        %v5481 = vunpack.c.l.b16 %v5346
        %v5482 = vunpack.c.l.b16 %v5347
        %v5483 = vunpack.c.l.b16 %v5348
        %v5484 = vunpack.c.l.b16 %v5349
        %v5485 = vunpack.c.l.b16 %v5350
        %v5486 = vunpack.c.l.b16 %v5351
        %v5487 = vunpack.c.l.b16 %v5352
        %v5488 = vunpack.c.l.b16 %v5353
        %v5489 = vunpack.c.l.b16 %v5354
        %v5490 = vunpack.c.l.b16 %v5355
        %v5491 = vunpack.c.l.b16 %v5356
        %v5492 = vunpack.c.l.b16 %v5357
        %v5493 = vunpack.c.l.b16 %v5358
        %v5494 = vunpack.c.l.b16 %v5359
        %v5495 = vunpack.c.l.b16 %v5360
        %v5496 = vunpack.c.l.b16 %v5361
        %v5497 = vunpack.c.l.b16 %v5362
        %v5498 = vunpack.c.l.b16 %v5363
        %v5499 = vunpack.c.l.b16 %v5364
        %v5500 = vunpack.c.l.b16 %v5365
        %v5501 = vunpack.c.l.b16 %v5366
        %v5502 = vunpack.c.l.b16 %v5367
        %v5503 = vunpack.c.l.b16 %v5368
        %v5504 = vunpack.c.l.b16 %v5369
        %v5505 = vunpack.c.l.b16 %v5370
        %v5506 = vunpack.c.l.b16 %v5371
        %v5507 = vunpack.c.l.b16 %v5372
        %v5508 = vunpack.c.l.b16 %v5373
        %v5509 = vunpack.c.l.b16 %v5374
        %v5510 = vunpack.c.l.b16 %v5375
        %v5511 = vunpack.c.l.b16 %v5376
        %v5512 = vunpack.c.l.b16 %v5377
        %v5513 = vunpack.c.l.b16 %v5378
        %v5514 = vunpack.c.l.b16 %v5379
        %v5515 = vunpack.c.l.b16 %v5380
        %v5516 = vunpack.c.l.b16 %v5381
        %v5517 = vunpack.c.l.b16 %v5382
        %v5518 = vunpack.c.l.b16 %v5383
        %v5519 = vunpack.c.l.b16 %v5384
        %v5520 = vunpack.c.l.b16 %v5385
        %v5521 = vunpack.c.l.b16 %v5386
        %v5522 = vunpack.c.l.b16 %v5387
        %v5523 = vunpack.c.l.b16 %v5388
        %v5524 = vpack.c.b16 %v5461, %v5460
        %v5525 = vpack.c.b16 %v5463, %v5462
        %v5526 = vpack.c.b16 %v5465, %v5464
        %v5527 = vpack.c.b16 %v5467, %v5466
        %v5528 = vpack.c.b16 %v5469, %v5468
        %v5529 = vpack.c.b16 %v5471, %v5470
        %v5530 = vpack.c.b16 %v5473, %v5472
        %v5531 = vpack.c.b16 %v5475, %v5474
        %v5532 = vpack.c.b16 %v5477, %v5476
        %v5533 = vpack.c.b16 %v5479, %v5478
        %v5534 = vpack.c.b16 %v5481, %v5480
        %v5535 = vpack.c.b16 %v5483, %v5482
        %v5536 = vpack.c.b16 %v5485, %v5484
        %v5537 = vpack.c.b16 %v5487, %v5486
        %v5538 = vpack.c.b16 %v5489, %v5488
        %v5539 = vpack.c.b16 %v5491, %v5490
        %v5540 = vpack.c.b16 %v5493, %v5492
        %v5541 = vpack.c.b16 %v5495, %v5494
        %v5542 = vpack.c.b16 %v5497, %v5496
        %v5543 = vpack.c.b16 %v5499, %v5498
        %v5544 = vpack.c.b16 %v5501, %v5500
        %v5545 = vpack.c.b16 %v5503, %v5502
        %v5546 = vpack.c.b16 %v5505, %v5504
        %v5547 = vpack.c.b16 %v5507, %v5506
        %v5548 = vpack.c.b16 %v5509, %v5508
        %v5549 = vpack.c.b16 %v5511, %v5510
        %v5550 = vpack.c.b16 %v5513, %v5512
        %v5551 = vpack.c.b16 %v5515, %v5514
        %v5552 = vpack.c.b16 %v5517, %v5516
        %v5553 = vpack.c.b16 %v5519, %v5518
        %v5554 = vpack.c.b16 %v5521, %v5520
        %v5555 = vpack.c.b16 %v5523, %v5522
        %5588 = vmatprep.subr.bf16.mxu0 0
        %5589 = vmatpush1.bf16.msra.mxu0 %v5531
        %5590 = vmatprep.subr.bf16.mxu0 0
        %5591 = vmatpush1.bf16.msra.mxu0 %v5530
        %5592 = vmatprep.subr.bf16.mxu0 0
        %5593 = vmatpush1.bf16.msra.mxu0 %v5529
        %5594 = vmatprep.subr.bf16.mxu0 0
        %5595 = vmatpush1.bf16.msra.mxu0 %v5528
        %5596 = vmatprep.subr.bf16.mxu0 0
        %5597 = vmatpush1.bf16.msra.mxu0 %v5527
        %5598 = vmatprep.subr.bf16.mxu0 0
        %5599 = vmatpush1.bf16.msra.mxu0 %v5526
        %5600 = vmatprep.subr.bf16.mxu0 0
        %5601 = vmatpush1.bf16.msra.mxu0 %v5525
        %5602 = vmatprep.subr.bf16.mxu0 0
        %5603 = vmatpush1.bf16.msra.mxu0 %v5524
        %5604 = vmatprep.subr.bf16.mxu0 0
        %5605 = vmatpush2.bf16.msra.mxu0 %v5539
        %5606 = vmatprep.subr.bf16.mxu0 0
        %5607 = vmatpush2.bf16.msra.mxu0 %v5538
        %5608 = vmatprep.subr.bf16.mxu0 0
        %5609 = vmatpush2.bf16.msra.mxu0 %v5537
        %5610 = vmatprep.subr.bf16.mxu0 0
        %5611 = vmatpush2.bf16.msra.mxu0 %v5536
        %5612 = vmatprep.subr.bf16.mxu0 0
        %5613 = vmatpush2.bf16.msra.mxu0 %v5535
        %5614 = vmatprep.subr.bf16.mxu0 0
        %5615 = vmatpush2.bf16.msra.mxu0 %v5534
        %5616 = vmatprep.subr.bf16.mxu0 0
        %5617 = vmatpush2.bf16.msra.mxu0 %v5533
        %5618 = vmatprep.subr.bf16.mxu0 0
        %5619 = vmatpush2.bf16.msra.mxu0 %v5532
        %5620 = vmatprep.mubr.bf16.mxu0 %v5322
        %5621 = vmatmul.mubr.bf16.gmra.mxu0 %v5321
        %v5622 = vpop.f32.mrf.mxu0
        %v5623 = vadd.f32 %v5394, %v5622
        %v5624 = vpop.f32.mrf.mxu0
        %v5625 = vpop.f32.mrf.mxu0
        %v5626 = vpop.f32.mrf.mxu0
        %5627 = vdwg.mxu0
        %5628 = vmatprep.subr.bf16.mxu0 0
        %5629 = vmatpush1.bf16.msra.mxu0 %v5547
        %5630 = vmatprep.subr.bf16.mxu0 0
        %5631 = vmatpush1.bf16.msra.mxu0 %v5546
        %5632 = vmatprep.subr.bf16.mxu0 0
        %5633 = vmatpush1.bf16.msra.mxu0 %v5545
        %5634 = vmatprep.subr.bf16.mxu0 0
        %5635 = vmatpush1.bf16.msra.mxu0 %v5544
        %5636 = vmatprep.subr.bf16.mxu0 0
        %5637 = vmatpush1.bf16.msra.mxu0 %v5543
        %5638 = vmatprep.subr.bf16.mxu0 0
        %5639 = vmatpush1.bf16.msra.mxu0 %v5542
        %5640 = vmatprep.subr.bf16.mxu0 0
        %5641 = vmatpush1.bf16.msra.mxu0 %v5541
        %5642 = vmatprep.subr.bf16.mxu0 0
        %5643 = vmatpush1.bf16.msra.mxu0 %v5540
        %5644 = vmatprep.subr.bf16.mxu0 0
        %5645 = vmatpush2.bf16.msra.mxu0 %v5555
        %5646 = vmatprep.subr.bf16.mxu0 0
        %5647 = vmatpush2.bf16.msra.mxu0 %v5554
        %5648 = vmatprep.subr.bf16.mxu0 0
        %5649 = vmatpush2.bf16.msra.mxu0 %v5553
        %5650 = vmatprep.subr.bf16.mxu0 0
        %5651 = vmatpush2.bf16.msra.mxu0 %v5552
        %5652 = vmatprep.subr.bf16.mxu0 0
        %5653 = vmatpush2.bf16.msra.mxu0 %v5551
        %5654 = vmatprep.subr.bf16.mxu0 0
        %5655 = vmatpush2.bf16.msra.mxu0 %v5550
        %5656 = vmatprep.subr.bf16.mxu0 0
        %5657 = vmatpush2.bf16.msra.mxu0 %v5549
        %5658 = vmatprep.subr.bf16.mxu0 0
        %5659 = vmatpush2.bf16.msra.mxu0 %v5548
        %5660 = vmatprep.mubr.bf16.mxu0 %v5324
        %5661 = vmatmul.mubr.bf16.gmra.mxu0 %v5323
        %v5662 = vpop.f32.mrf.mxu0
        %v5663 = vadd.f32 %v5623, %v5662
        %v5664 = vpop.f32.mrf.mxu0
        %v5665 = vpop.f32.mrf.mxu0
        %v5666 = vpop.f32.mrf.mxu0
        %5667 = vdwg.mxu0
        %v5668 = vmax.f32 %v5663, 0.0
        %v5669 = vpack.c.bf16 %v5668, %v5668
        %v5670 = vld [vmem:[%s653] sm:$0xf]
        %v5671 = vld [vmem:[%s653 + $0x4] sm:$0xf]
        %v5672 = vld [vmem:[%s653 + $0x8] sm:$0xf]
        %v5673 = vld [vmem:[%s653 + $0xc] sm:$0xf]
        %v5674 = vld [vmem:[%s653 + $0x10] sm:$0xf]
        %v5675 = vld [vmem:[%s653 + $0x14] sm:$0xf]
        %v5676 = vld [vmem:[%s653 + $0x18] sm:$0xf]
        %v5677 = vld [vmem:[%s653 + $0x1c] sm:$0xf]
        %v5678 = vld [vmem:[%s656] sm:$0x1]
        %v5680 = vlaneseq
        %v5681 = vshrl.u32 %v5680, 7
        %v5682 = vsub.s32 0, %v5681
        %v5683 = vrot.slane %v5678, %v5682
        %v5693 = vunpack.c.l.b16 %v5670
        %v5694 = vunpack.c.l.b16 %v5671
        %v5695 = vunpack.c.l.b16 %v5672
        %v5696 = vunpack.c.l.b16 %v5673
        %v5697 = vunpack.c.l.b16 %v5674
        %v5698 = vunpack.c.l.b16 %v5675
        %v5699 = vunpack.c.l.b16 %v5676
        %v5700 = vunpack.c.l.b16 %v5677
        %v5701 = vpack.c.b16 %v5694, %v5693
        %v5702 = vpack.c.b16 %v5696, %v5695
        %v5703 = vpack.c.b16 %v5698, %v5697
        %v5704 = vpack.c.b16 %v5700, %v5699
        %vm5709 = vcmask 523264
        %v5711 = vsel %vm5709, %v5669, 0
        %5713 = vmatprep.subr.bf16.mxu0 0
        %5714 = vmatpush1.bf16.msra.mxu0 0
        %5715 = vmatprep.subr.bf16.mxu0 0
        %5716 = vmatpush1.bf16.msra.mxu0 0
        %5717 = vmatprep.subr.bf16.mxu0 0
        %5718 = vmatpush1.bf16.msra.mxu0 0
        %5719 = vmatprep.subr.bf16.mxu0 0
        %5720 = vmatpush1.bf16.msra.mxu0 0
        %5721 = vmatprep.subr.bf16.mxu0 0
        %5722 = vmatpush1.bf16.msra.mxu0 %v5704
        %5723 = vmatprep.subr.bf16.mxu0 0
        %5724 = vmatpush1.bf16.msra.mxu0 %v5703
        %5725 = vmatprep.subr.bf16.mxu0 0
        %5726 = vmatpush1.bf16.msra.mxu0 %v5702
        %5727 = vmatprep.subr.bf16.mxu0 0
        %5728 = vmatpush1.bf16.msra.mxu0 %v5701
        %5729 = vmatprep.subr.bf16.mxu0 0
        %5730 = vmatpush2.bf16.msra.mxu0 0
        %5731 = vmatprep.subr.bf16.mxu0 0
        %5732 = vmatpush2.bf16.msra.mxu0 0
        %5733 = vmatprep.subr.bf16.mxu0 0
        %5734 = vmatpush2.bf16.msra.mxu0 0
        %5735 = vmatprep.subr.bf16.mxu0 0
        %5736 = vmatpush2.bf16.msra.mxu0 0
        %5737 = vmatprep.subr.bf16.mxu0 0
        %5738 = vmatpush2.bf16.msra.mxu0 0
        %5739 = vmatprep.subr.bf16.mxu0 0
        %5740 = vmatpush2.bf16.msra.mxu0 0
        %5741 = vmatprep.subr.bf16.mxu0 0
        %5742 = vmatpush2.bf16.msra.mxu0 0
        %5743 = vmatprep.subr.bf16.mxu0 0
        %5744 = vmatpush2.bf16.msra.mxu0 0
        %5745 = vmatprep.mubr.bf16.mxu0 0
        %5746 = vmatmul.mubr.bf16.gmra.mxu0 %v5711
        %v5747 = vpop.f32.mrf.mxu0
        %v5748 = vadd.f32 %v5683, %v5747
        %v5749 = vpop.f32.mrf.mxu0
        %v5750 = vpop.f32.mrf.mxu0
        %v5751 = vpop.f32.mrf.mxu0
        %5752 = vdwg.mxu0
        %v5753 = vmax.f32 %v5748, 0.0
        %v5754 = vpack.c.bf16 %v5753, %v5753
        %v5755 = vld [vmem:[%s661] sm:$0xf]
        %v5756 = vld [vmem:[%s661 + $0x4] sm:$0xf]
        %v5757 = vld [vmem:[%s661 + $0x8] sm:$0xf]
        %v5758 = vld [vmem:[%s661 + $0xc] sm:$0xf]
        %v5759 = vld [vmem:[%s664] sm:$0x1]
        %v5761 = vlaneseq
        %v5762 = vshrl.u32 %v5761, 7
        %v5763 = vsub.s32 0, %v5762
        %v5764 = vrot.slane %v5759, %v5763
        %v5770 = vunpack.c.l.b16 %v5755
        %v5771 = vunpack.c.l.b16 %v5756
        %v5772 = vunpack.c.l.b16 %v5757
        %v5773 = vunpack.c.l.b16 %v5758
        %v5774 = vpack.c.b16 %v5771, %v5770
        %v5775 = vpack.c.b16 %v5773, %v5772
        %v5779 = vsel %vm1228, %v5754, 0
        %5781 = vmatprep.subr.bf16.mxu0 0
        %5782 = vmatpush1.bf16.msra.mxu0 0
        %5783 = vmatprep.subr.bf16.mxu0 0
        %5784 = vmatpush1.bf16.msra.mxu0 0
        %5785 = vmatprep.subr.bf16.mxu0 0
        %5786 = vmatpush1.bf16.msra.mxu0 0
        %5787 = vmatprep.subr.bf16.mxu0 0
        %5788 = vmatpush1.bf16.msra.mxu0 0
        %5789 = vmatprep.subr.bf16.mxu0 0
        %5790 = vmatpush1.bf16.msra.mxu0 0
        %5791 = vmatprep.subr.bf16.mxu0 0
        %5792 = vmatpush1.bf16.msra.mxu0 0
        %5793 = vmatprep.subr.bf16.mxu0 0
        %5794 = vmatpush1.bf16.msra.mxu0 %v5775
        %5795 = vmatprep.subr.bf16.mxu0 0
        %5796 = vmatpush1.bf16.msra.mxu0 %v5774
        %5797 = vmatprep.subr.bf16.mxu0 0
        %5798 = vmatpush2.bf16.msra.mxu0 0
        %5799 = vmatprep.subr.bf16.mxu0 0
        %5800 = vmatpush2.bf16.msra.mxu0 0
        %5801 = vmatprep.subr.bf16.mxu0 0
        %5802 = vmatpush2.bf16.msra.mxu0 0
        %5803 = vmatprep.subr.bf16.mxu0 0
        %5804 = vmatpush2.bf16.msra.mxu0 0
        %5805 = vmatprep.subr.bf16.mxu0 0
        %5806 = vmatpush2.bf16.msra.mxu0 0
        %5807 = vmatprep.subr.bf16.mxu0 0
        %5808 = vmatpush2.bf16.msra.mxu0 0
        %5809 = vmatprep.subr.bf16.mxu0 0
        %5810 = vmatpush2.bf16.msra.mxu0 0
        %5811 = vmatprep.subr.bf16.mxu0 0
        %5812 = vmatpush2.bf16.msra.mxu0 0
        %5813 = vmatprep.mubr.bf16.mxu0 0
        %5814 = vmatmul.mubr.bf16.gmra.mxu0 %v5779
        %v5815 = vpop.f32.mrf.mxu0
        %v5816 = vadd.f32 %v5764, %v5815
        %v5817 = vpop.f32.mrf.mxu0
        %v5818 = vpop.f32.mrf.mxu0
        %v5819 = vpop.f32.mrf.mxu0
        %5820 = vdwg.mxu0
        %5821 = vst [vmem:[%s668] sm:$0x3] %v5816
        %p5822 = scmp.lt.s32.totalorder %s27, 1
        %s5823 = scalar_select %p5822, %s27, 1
        %s5824 = smul.addr %s5823, 2
        %s5825 = scalar_lea.vmem %s13, %s5824
        // Predicated region
        $region77: #{forward.1} parent=71 // pred_check
          %p5826 = pneg %p383
        $region78: #{forward.1} parent=71 // pred_check_branch
          %5828 = sbr.rel (%p5826) target = $region80
        $region79: #{forward.1} parent=71 // pred_region
          _
        $region80: #{forward.1} parent=71 // pred_fallthru
          _
      $region72: #{forward.1} parent=5 // pred_fallthru
        _
      %p5829 = scmp.le.s32.totalorder 2, %s22
      // Predicated region
      $region81: #{forward.1} parent=5 // pred_check
        %p5830 = pneg %p5829
      $region82: #{forward.1} parent=5 // pred_check_branch
        %5832 = sbr.rel (%p5830) target = $region84
      $region83: #{forward.1} parent=5 // pred_region
        %s5833 = ssub.s32 %s22, 2
        // Predicated region
        $region85: #{forward.1} parent=83 // pred_check
          %p5834 = pneg %p389
        $region86: #{forward.1} parent=83 // pred_check_branch
          %5836 = sbr.rel (%p5834) target = $region88
        $region87: #{forward.1} parent=83 // pred_region
          %p5837 = scmp.lt.s32.totalorder %s28, 1
          %s5838 = scalar_select %p5837, %s28, 1
          %s5839 = smul.addr %s5838, 2
          %s5840 = scalar_lea.vmem %s13, %s5839
        $region88: #{forward.1} parent=83 // pred_fallthru
          _
      $region84: #{forward.1} parent=5 // pred_fallthru
        _
    $region6: #{forward.1} parent=1 // loop_footer
      %s26 = sadd.s32 1, %s22
    $region7: #{forward.1} parent=1 // loop_footer_branch
      %21 = sbr.rel target = $region3
    $region8: #{forward.1} parent=1 // loop_exit
      _
    %5841 = vsyncpa [#allocation5], 1
    %s5842 = scalar_lea.sflag [#allocation5], 1
    %5843 = vsyncpa %s5842, 1

</llo_original>
